<compile_context>
chip_gen: v7x
topology: tpu7x:2x2x1
jax: 0.10.0
libtpu: 0.0.40
codegen_flags: <defaults>
</compile_context>

<pallas_src>
import jax
import jax.numpy as jnp
from jax import lax
from jax.experimental import pallas as pl
from jax.experimental.pallas import tpu as pltpu

# Problem sizes (small, consistent with the module's semantics).
N = 8            # number of user src/dst pairs -> batch B == N
M = 6            # number of UAV candidate nodes
D = 2            # coordinate dimension
H = 32           # logical pointer-net hidden size
HP = 128         # lane-padded hidden size (zero padding is numerically exact)
G4 = 4 * HP      # padded gate width
G5 = 5 * HP      # fused gate + query width
SIZE = M + 2     # nodes per graph: [src, uav..., dst]
B = N
NEG_INF = float("-inf")

# Small-slab row offsets (slab shape (8, 4*HP)).
ROW_WX = 0            # rows [0, D)        : w_x @ w_ih   (D, 4HP)
ROW_B = D             # row  D             : lstm bias    (1, 4HP)
ROW_WCTX = D + 1      # rows [D+1, 2D+1)   : w_ctx        (D, HP)  in cols [0, HP)
ROW_V = 2 * D + 1     # row  2D+1          : v            (1, HP)  in cols [0, HP)
SMALL_ROWS = 8


def _sigmoid(x):
    # tanh-based sigmoid: one EUP transcendental instead of exp + divide.
    return 0.5 * (1.0 + jnp.tanh(0.5 * x))


def _rgnn_loss_kernel(graph_ref, small_ref, whhq_ref, out_ref):
    # graph_ref : (D, SIZE, B)   node-major coordinate planes
    # small_ref : (8, 4*HP)      packed [w_x @ w_ih ; b_lstm ; w_ctx ; v]
    # whhq_ref  : (HP, 5*HP)     fused [w_hh | w_q]
    # out_ref   : (1, 1)
    planes = [graph_ref[d] for d in range(D)]                     # each (SIZE, B)

    w_hhq = whhq_ref[...]                                         # (HP, 5HP)
    w_q_only = whhq_ref[:, G4:]                                   # (HP, HP) for the last step

    # Loop-invariant broadcasts (hoisted: JAX does not CSE broadcast_in_dim).
    wx_b = [jnp.broadcast_to(small_ref[ROW_WX + d:ROW_WX + d + 1, :], (B, G4))
            for d in range(D)]                                    # (B, 4HP) each
    b_gates = jnp.broadcast_to(small_ref[ROW_B:ROW_B + 1, :], (B, G4))
    # v kept as a (1,1,HP) replicated view -- NOT materialized to (B, SIZE, HP).
    v_row3 = small_ref[ROW_V:ROW_V + 1, 0:HP][None]               # (1, 1, HP)

    # Step-invariant context embedding, node-major (SIZE, B, HP) so the per-step query
    # q (B, HP) broadcasts along the leading dim with no relayout on the serial chain.
    ctx3 = jnp.zeros((SIZE, B, HP), jnp.float32)
    for d in range(D):
        wc = small_ref[ROW_WCTX + d:ROW_WCTX + d + 1, 0:HP]       # (1, HP)
        ctx3 = ctx3 + planes[d][:, :, None] * wc[None]

    row_i = lax.broadcasted_iota(jnp.int32, (SIZE, B), 0)         # node index per row
    last_row = row_i == (SIZE - 1)
    # Identity mask used to bridge (1, B) row-layout values into (B, 1) column layout
    # (multiply + lane reduce; avoids a per-step transpose relayout).
    eye_bb = (lax.broadcasted_iota(jnp.int32, (B, B), 0) ==
              lax.broadcasted_iota(jnp.int32, (B, B), 1)).astype(jnp.float32)

    def to_col(r1b):                                              # (1, B) -> (B, 1)
        return jnp.sum(eye_bb * r1b, axis=1, keepdims=True)

    # Initial decode state.  mask[:,0] = -inf and (k==0) mask[:,-1] = -inf folded into init.
    mask = jnp.where((row_i == 0) | last_row, NEG_INF, 0.0).astype(jnp.float32)
    h = jnp.zeros((B, HP), jnp.float32)
    c = jnp.zeros((B, HP), jnp.float32)
    max_sq = jnp.zeros((1, B), jnp.float32)                       # running max of ||.||^2
    y0_row = [p[0:1, :] for p in planes]                          # Y0 = graph[:, 0]  (1, B)
    sel_col = [to_col(r) for r in y0_row]                         # x coords, (B, 1) each
    gates_h = None                                                # h @ w_hh carried across steps

    # SIZE is static -> fully unrolled serial decode (whole schedule visible to LLO).
    for k in range(SIZE):
        # k > 0: mask[:, -1] = 0 (exact reference behavior, including the per-step reset
        # that can un-mask a previously selected dst node).
        if k > 0:
            mask = jnp.where(last_row, 0.0, mask)

        # --- pointer-net step ---
        # x-side gate pre-activation rebuilt from the selected coords (VPU only); the h-side
        # pre-activation (h @ w_hh) was produced by the PREVIOUS step's fused matmul.
        xg = b_gates
        for d in range(D):
            xg = xg + sel_col[d] * wx_b[d]
        gates = xg if gates_h is None else xg + gates_h           # step 0: h == 0, no matmul

        # Gate slices fall on full 128-lane vreg boundaries thanks to HP padding.
        i_g = _sigmoid(gates[:, 0 * HP:1 * HP])
        f_g = _sigmoid(gates[:, 1 * HP:2 * HP])
        g_g = jnp.tanh(gates[:, 2 * HP:3 * HP])
        o_g = _sigmoid(gates[:, 3 * HP:4 * HP])
        c = f_g * c + i_g * g_g
        h = o_g * jnp.tanh(c)

        # ONE fused MXU matmul per step: this step's attention query + next step's gates.
        if k < SIZE - 1:
            fused = jnp.dot(h, w_hhq, preferred_element_type=jnp.float32)   # (B, 5HP)
            gates_h = fused[:, :G4]
            q = fused[:, G4:]
        else:
            q = jnp.dot(h, w_q_only, preferred_element_type=jnp.float32)    # (B, HP)

        # Additive attention over all graph nodes (node-major; q broadcast is free).
        t = jnp.tanh(ctx3 + q[None])                              # (SIZE, B, HP)
        u = jnp.sum(t * v_row3, axis=-1)                          # (SIZE, B)
        # 10*tanh(u) clip dropped: strictly monotone transform + {0,-inf} mask does not
        # change the (first-occurrence) argmax while |u| stays well below saturation.
        logits = u + mask

        # torch.argmax(output, dim=1) (first occurrence of the max)
        maxv = jnp.max(logits, axis=0, keepdims=True)             # (1, B)
        idx = jnp.min(jnp.where(logits >= maxv, row_i, SIZE),
                      axis=0, keepdims=True)                      # (1, B) int32
        onehot = row_i == idx                                     # (SIZE, B) bool
        onehot_f = onehot.astype(jnp.float32)

        # Y1 = uav_graph[arange(B), idx] ; dist^2 = ||Y1 - Y0||^2 ; running elementwise max.
        y1_row = [jnp.sum(onehot_f * planes[d], axis=0, keepdims=True) for d in range(D)]
        sq = jnp.zeros((1, B), jnp.float32)
        for d in range(D):
            sq = sq + (y1_row[d] - y0_row[d]) ** 2
        max_sq = jnp.maximum(max_sq, sq)

        if k < SIZE - 1:
            # mask[arange(B), idx] = -inf (values are only {0, -inf}, so assignment == add).
            # The reference's `mask[idx == size] = -inf` branch is dead (idx < size always).
            mask = jnp.where(onehot, NEG_INF, mask)
            y0_row = y1_row                                       # Y0 = Y1
            sel_col = [to_col(r) for r in y1_row]                 # x = Y1, (B, 1) layout

    # Single sqrt at the end (exact: sqrt is monotone, so sqrt(max) == max(sqrt)).
    out_ref[...] = jnp.mean(jnp.sqrt(max_sq), axis=(0, 1), keepdims=True)     # (1, 1)


# ----------------------------- host-side packing glue -----------------------------

def _pad_last(w, width):
    return jnp.concatenate(
        [w, jnp.zeros(w.shape[:-1] + (width - w.shape[-1],), w.dtype)], axis=-1)


def _pad_rows(w, rows):
    return jnp.concatenate(
        [w, jnp.zeros((rows - w.shape[0],) + w.shape[1:], w.dtype)], axis=0)


def _pad_gate_cols(w):
    # (..., 4H) -> (..., 4HP): zero-pad each of the four gate blocks from H to HP lanes.
    return jnp.concatenate(
        [_pad_last(w[..., g * H:(g + 1) * H], HP) for g in range(4)], axis=-1)


def _pack_params(params):
    w_x, w_ctx, w_ih, w_hh, b_lstm, w_q, v = params
    # Weight-only reassociation: (x @ w_x) @ w_ih == x @ (w_x @ w_ih); lets the kernel drop
    # the x-side MXU matmul from the serial decode chain.
    w_xih_p = _pad_gate_cols(jnp.dot(w_x, w_ih))                  # (D, 4HP)
    b_p = _pad_gate_cols(b_lstm)                                  # (1, 4HP)
    w_ctx_p = _pad_last(_pad_last(w_ctx, HP), G4)                 # (D, 4HP), data in [0, HP)
    v_p = _pad_last(_pad_last(v, HP), G4)                         # (1, 4HP), data in [0, HP)
    small = _pad_rows(jnp.concatenate([w_xih_p, b_p, w_ctx_p, v_p], axis=0), SMALL_ROWS)

    # Fused per-step weight [w_hh | w_q]: one matmul yields next-step gate pre-activation
    # (cols [0,4HP)) and this step's attention query (cols [4HP,5HP)).
    w_hh_p = _pad_gate_cols(_pad_rows(w_hh, HP))                  # (HP, 4HP)
    w_q_p = _pad_last(_pad_rows(w_q, HP), HP)                     # (HP, HP)
    w_hhq = jnp.concatenate([w_hh_p, w_q_p], axis=-1)             # (HP, 5HP)
    return small.astype(jnp.float32), w_hhq.astype(jnp.float32)


def init_params(key):
    ks = jax.random.split(key, 6)
    s = 0.1
    w_x = s * jax.random.normal(ks[0], (D, H), jnp.float32)
    w_ctx = s * jax.random.normal(ks[1], (D, H), jnp.float32)
    w_ih = s * jax.random.normal(ks[2], (H, 4 * H), jnp.float32)
    w_hh = s * jax.random.normal(ks[3], (H, 4 * H), jnp.float32)
    b_lstm = jnp.zeros((1, 4 * H), jnp.float32)
    w_q = s * jax.random.normal(ks[4], (H, H), jnp.float32)
    v = s * jax.random.normal(ks[5], (1, H), jnp.float32)
    return (w_x, w_ctx, w_ih, w_hh, b_lstm, w_q, v)


@jax.jit
def rgnn_loss(outputs, params):
    # Glue (matches the reference graph construction): uav_graph = [src, uav..., dst].
    users_src = outputs[:N][:, None, :]
    users_dst = outputs[N:2 * N][:, None, :]
    uav_nodes = jnp.broadcast_to(outputs[2 * N:][None, :, :], (N, M, D))
    uav_graph = jnp.concatenate([users_src, uav_nodes, users_dst], axis=1)   # (B, SIZE, D)
    graph_planes = jnp.transpose(uav_graph, (2, 1, 0)).astype(jnp.float32)   # (D, SIZE, B)

    small, w_hhq = _pack_params(params)

    vmem = pl.BlockSpec(memory_space=pltpu.MemorySpace.VMEM)
    out = pl.pallas_call(
        _rgnn_loss_kernel,
        out_shape=jax.ShapeDtypeStruct((1, 1), jnp.float32),
        in_specs=[vmem, vmem, vmem],
        out_specs=vmem,
    )(graph_planes, small, w_hhq)
    return out[0, 0]


if __name__ == "__main__":
    key = jax.random.PRNGKey(0)
    k_out, k_par = jax.random.split(key)
    # `outputs` is what the RGNN produced: 2N user nodes + M UAV nodes, each a D-dim coordinate.
    outputs = jax.random.uniform(k_out, (2 * N + M, D), jnp.float32)
    params = init_params(k_par)

    loss = rgnn_loss(outputs, params)
    jax.block_until_ready(loss)
    assert loss.shape == () and jnp.isfinite(loss)
    print("KERNEL_OK")
</pallas_src>

<mosaic_0001>
module attributes {stable_mosaic.version = 11 : i64} {
  func.func @_rgnn_loss_kernel(%arg0: memref<2x8x8xf32, #tpu.memory_space<vmem>>, %arg1: memref<8x512xf32, #tpu.memory_space<vmem>>, %arg2: memref<128x640xf32, #tpu.memory_space<vmem>>, %arg3: memref<1x1xf32, #tpu.memory_space<vmem>>) attributes {dimension_semantics = [], scalar_prefetch = 0 : i64, scratch_operands = 0 : i64, tpu.core_type = #tpu.core_type<tc>} {
    %c0 = arith.constant 0 : index
    %c0_0 = arith.constant 0 : index
    %c0_1 = arith.constant 0 : index
    %0 = vector.load %arg0[%c0, %c0_0, %c0_1] : memref<2x8x8xf32, #tpu.memory_space<vmem>>, vector<1x8x8xf32>
    %1 = vector.shape_cast %0 : vector<1x8x8xf32> to vector<8x8xf32>
    %c1 = arith.constant 1 : index
    %c0_2 = arith.constant 0 : index
    %c0_3 = arith.constant 0 : index
    %2 = vector.load %arg0[%c1, %c0_2, %c0_3] : memref<2x8x8xf32, #tpu.memory_space<vmem>>, vector<1x8x8xf32>
    %3 = vector.shape_cast %2 : vector<1x8x8xf32> to vector<8x8xf32>
    %c0_4 = arith.constant 0 : index
    %c0_5 = arith.constant 0 : index
    %4 = vector.load %arg2[%c0_4, %c0_5] : memref<128x640xf32, #tpu.memory_space<vmem>>, vector<128x640xf32>
    %c0_6 = arith.constant 0 : index
    %c512 = arith.constant 512 : index
    %5 = vector.load %arg2[%c0_6, %c512] : memref<128x640xf32, #tpu.memory_space<vmem>>, vector<128x128xf32>
    %c0_7 = arith.constant 0 : index
    %c0_8 = arith.constant 0 : index
    %6 = vector.load %arg1[%c0_7, %c0_8] : memref<8x512xf32, #tpu.memory_space<vmem>>, vector<1x512xf32>
    %7 = vector.shape_cast %6 : vector<1x512xf32> to vector<1x512xf32>
    %8 = vector.broadcast %7 : vector<1x512xf32> to vector<8x512xf32>
    %c1_9 = arith.constant 1 : index
    %c0_10 = arith.constant 0 : index
    %9 = vector.load %arg1[%c1_9, %c0_10] : memref<8x512xf32, #tpu.memory_space<vmem>>, vector<1x512xf32>
    %10 = vector.shape_cast %9 : vector<1x512xf32> to vector<1x512xf32>
    %11 = vector.broadcast %10 : vector<1x512xf32> to vector<8x512xf32>
    %c2 = arith.constant 2 : index
    %c0_11 = arith.constant 0 : index
    %12 = vector.load %arg1[%c2, %c0_11] : memref<8x512xf32, #tpu.memory_space<vmem>>, vector<1x512xf32>
    %13 = vector.shape_cast %12 : vector<1x512xf32> to vector<1x512xf32>
    %14 = vector.broadcast %13 : vector<1x512xf32> to vector<8x512xf32>
    %c5 = arith.constant 5 : index
    %c0_12 = arith.constant 0 : index
    %15 = vector.load %arg1[%c5, %c0_12] : memref<8x512xf32, #tpu.memory_space<vmem>>, vector<1x128xf32>
    %16 = vector.shape_cast %15 : vector<1x128xf32> to vector<1x1x128xf32>
    %cst = arith.constant 0.000000e+00 : f32
    %17 = vector.broadcast %cst : f32 to vector<8x8x128xf32>
    %c3 = arith.constant 3 : index
    %c0_13 = arith.constant 0 : index
    %18 = vector.load %arg1[%c3, %c0_13] : memref<8x512xf32, #tpu.memory_space<vmem>>, vector<1x128xf32>
    %19 = vector.shape_cast %1 : vector<8x8xf32> to vector<8x8x1xf32>
    %20 = vector.shape_cast %18 : vector<1x128xf32> to vector<1x1x128xf32>
    %21 = vector.broadcast %19 : vector<8x8x1xf32> to vector<8x8x128xf32>
    %22 = vector.broadcast %20 : vector<1x1x128xf32> to vector<8x8x128xf32>
    %23 = arith.mulf %21, %22 : vector<8x8x128xf32>
    %24 = arith.addf %17, %23 : vector<8x8x128xf32>
    %c4 = arith.constant 4 : index
    %c0_14 = arith.constant 0 : index
    %25 = vector.load %arg1[%c4, %c0_14] : memref<8x512xf32, #tpu.memory_space<vmem>>, vector<1x128xf32>
    %26 = vector.shape_cast %3 : vector<8x8xf32> to vector<8x8x1xf32>
    %27 = vector.shape_cast %25 : vector<1x128xf32> to vector<1x1x128xf32>
    %28 = vector.broadcast %26 : vector<8x8x1xf32> to vector<8x8x128xf32>
    %29 = vector.broadcast %27 : vector<1x1x128xf32> to vector<8x8x128xf32>
    %30 = arith.mulf %28, %29 : vector<8x8x128xf32>
    %31 = arith.addf %24, %30 : vector<8x8x128xf32>
    %32 = tpu.iota {dimensions = array<i32: 0>} : vector<8x8xi32>
    %c7_i32 = arith.constant 7 : i32
    %33 = vector.broadcast %c7_i32 : i32 to vector<8x8xi32>
    %34 = arith.cmpi eq, %32, %33 : vector<8x8xi32>
    %35 = tpu.iota {dimensions = array<i32: 0>} : vector<8x8xi32>
    %36 = tpu.iota {dimensions = array<i32: 1>} : vector<8x8xi32>
    %37 = arith.cmpi eq, %35, %36 : vector<8x8xi32>
    %38 = arith.extui %37 : vector<8x8xi1> to vector<8x8xi32>
    %39 = arith.sitofp %38 : vector<8x8xi32> to vector<8x8xf32>
    %c0_i32 = arith.constant 0 : i32
    %40 = vector.broadcast %c0_i32 : i32 to vector<8x8xi32>
    %41 = arith.cmpi eq, %32, %40 : vector<8x8xi32>
    %42 = arith.ori %41, %34 : vector<8x8xi1>
    %cst_15 = arith.constant 0xFF800000 : f32
    %cst_16 = arith.constant 0.000000e+00 : f32
    %43 = vector.broadcast %cst_15 : f32 to vector<8x8xf32>
    %44 = vector.broadcast %cst_16 : f32 to vector<8x8xf32>
    %45 = arith.select %42, %43, %44 : vector<8x8xi1>, vector<8x8xf32>
    %cst_17 = arith.constant 0.000000e+00 : f32
    %46 = vector.broadcast %cst_17 : f32 to vector<8x128xf32>
    %cst_18 = arith.constant 0.000000e+00 : f32
    %47 = vector.broadcast %cst_18 : f32 to vector<1x8xf32>
    %48 = vector.extract_strided_slice %1 {offsets = [0, 0], sizes = [1, 8], strides = [1, 1]} : vector<8x8xf32> to vector<1x8xf32>
    %49 = vector.extract_strided_slice %3 {offsets = [0, 0], sizes = [1, 8], strides = [1, 1]} : vector<8x8xf32> to vector<1x8xf32>
    %50 = vector.broadcast %48 : vector<1x8xf32> to vector<8x8xf32>
    %51 = arith.mulf %39, %50 : vector<8x8xf32>
    %cst_19 = arith.constant dense<0.000000e+00> : vector<8xf32>
    %52 = vector.multi_reduction <add>, %51, %cst_19 [1] : vector<8x8xf32> to vector<8xf32>
    %53 = vector.shape_cast %52 : vector<8xf32> to vector<8x1xf32>
    %54 = vector.broadcast %49 : vector<1x8xf32> to vector<8x8xf32>
    %55 = arith.mulf %39, %54 : vector<8x8xf32>
    %cst_20 = arith.constant dense<0.000000e+00> : vector<8xf32>
    %56 = vector.multi_reduction <add>, %55, %cst_20 [1] : vector<8x8xf32> to vector<8xf32>
    %57 = vector.shape_cast %56 : vector<8xf32> to vector<8x1xf32>
    %58 = vector.broadcast %53 : vector<8x1xf32> to vector<8x512xf32>
    %59 = arith.mulf %58, %8 : vector<8x512xf32>
    %60 = arith.addf %14, %59 : vector<8x512xf32>
    %61 = vector.broadcast %57 : vector<8x1xf32> to vector<8x512xf32>
    %62 = arith.mulf %61, %11 : vector<8x512xf32>
    %63 = arith.addf %60, %62 : vector<8x512xf32>
    %64 = vector.extract_strided_slice %63 {offsets = [0, 0], sizes = [8, 128], strides = [1, 1]} : vector<8x512xf32> to vector<8x128xf32>
    %cst_21 = arith.constant 5.000000e-01 : f32
    %65 = vector.broadcast %cst_21 : f32 to vector<8x128xf32>
    %66 = arith.mulf %65, %64 : vector<8x128xf32>
    %67 = math.tanh %66 : vector<8x128xf32>
    %cst_22 = arith.constant 1.000000e+00 : f32
    %68 = vector.broadcast %cst_22 : f32 to vector<8x128xf32>
    %69 = arith.addf %68, %67 : vector<8x128xf32>
    %cst_23 = arith.constant 5.000000e-01 : f32
    %70 = vector.broadcast %cst_23 : f32 to vector<8x128xf32>
    %71 = arith.mulf %70, %69 : vector<8x128xf32>
    %72 = vector.extract_strided_slice %63 {offsets = [0, 128], sizes = [8, 128], strides = [1, 1]} : vector<8x512xf32> to vector<8x128xf32>
    %cst_24 = arith.constant 5.000000e-01 : f32
    %73 = vector.broadcast %cst_24 : f32 to vector<8x128xf32>
    %74 = arith.mulf %73, %72 : vector<8x128xf32>
    %75 = math.tanh %74 : vector<8x128xf32>
    %cst_25 = arith.constant 1.000000e+00 : f32
    %76 = vector.broadcast %cst_25 : f32 to vector<8x128xf32>
    %77 = arith.addf %76, %75 : vector<8x128xf32>
    %cst_26 = arith.constant 5.000000e-01 : f32
    %78 = vector.broadcast %cst_26 : f32 to vector<8x128xf32>
    %79 = arith.mulf %78, %77 : vector<8x128xf32>
    %80 = vector.extract_strided_slice %63 {offsets = [0, 256], sizes = [8, 128], strides = [1, 1]} : vector<8x512xf32> to vector<8x128xf32>
    %81 = math.tanh %80 : vector<8x128xf32>
    %82 = vector.extract_strided_slice %63 {offsets = [0, 384], sizes = [8, 128], strides = [1, 1]} : vector<8x512xf32> to vector<8x128xf32>
    %cst_27 = arith.constant 5.000000e-01 : f32
    %83 = vector.broadcast %cst_27 : f32 to vector<8x128xf32>
    %84 = arith.mulf %83, %82 : vector<8x128xf32>
    %85 = math.tanh %84 : vector<8x128xf32>
    %cst_28 = arith.constant 1.000000e+00 : f32
    %86 = vector.broadcast %cst_28 : f32 to vector<8x128xf32>
    %87 = arith.addf %86, %85 : vector<8x128xf32>
    %cst_29 = arith.constant 5.000000e-01 : f32
    %88 = vector.broadcast %cst_29 : f32 to vector<8x128xf32>
    %89 = arith.mulf %88, %87 : vector<8x128xf32>
    %90 = arith.mulf %79, %46 : vector<8x128xf32>
    %91 = arith.mulf %71, %81 : vector<8x128xf32>
    %92 = arith.addf %90, %91 : vector<8x128xf32>
    %93 = math.tanh %92 : vector<8x128xf32>
    %94 = arith.mulf %89, %93 : vector<8x128xf32>
    %cst_30 = arith.constant dense<0.000000e+00> : vector<8x640xf32>
    %95 = tpu.matmul %94, %4, %cst_30 {dimension_numbers = #tpu.dot_dimension_numbers<[1], [0], [0], [1], [0, 0, 1, 1], [], []>} : vector<8x128xf32>, vector<128x640xf32>, vector<8x640xf32> -> vector<8x640xf32>
    %96 = vector.extract_strided_slice %95 {offsets = [0, 0], sizes = [8, 512], strides = [1, 1]} : vector<8x640xf32> to vector<8x512xf32>
    %97 = vector.extract_strided_slice %95 {offsets = [0, 512], sizes = [8, 128], strides = [1, 1]} : vector<8x640xf32> to vector<8x128xf32>
    %98 = vector.shape_cast %97 : vector<8x128xf32> to vector<1x8x128xf32>
    %99 = vector.broadcast %98 : vector<1x8x128xf32> to vector<8x8x128xf32>
    %100 = arith.addf %31, %99 : vector<8x8x128xf32>
    %101 = math.tanh %100 : vector<8x8x128xf32>
    %102 = vector.broadcast %16 : vector<1x1x128xf32> to vector<8x8x128xf32>
    %103 = arith.mulf %101, %102 : vector<8x8x128xf32>
    %cst_31 = arith.constant dense<0.000000e+00> : vector<8x8xf32>
    %104 = vector.multi_reduction <add>, %103, %cst_31 [2] : vector<8x8x128xf32> to vector<8x8xf32>
    %105 = arith.addf %104, %45 : vector<8x8xf32>
    %cst_32 = arith.constant dense<0xFF800000> : vector<8xf32>
    %106 = vector.multi_reduction <maximumf>, %105, %cst_32 [0] : vector<8x8xf32> to vector<8xf32>
    %107 = vector.shape_cast %106 : vector<8xf32> to vector<1x8xf32>
    %108 = vector.broadcast %107 : vector<1x8xf32> to vector<8x8xf32>
    %109 = arith.cmpf oge, %105, %108 : vector<8x8xf32>
    %c8_i32 = arith.constant 8 : i32
    %110 = vector.broadcast %c8_i32 : i32 to vector<8x8xi32>
    %111 = arith.select %109, %32, %110 : vector<8x8xi1>, vector<8x8xi32>
    %cst_33 = arith.constant dense<2147483647> : vector<8xi32>
    %112 = vector.multi_reduction <minsi>, %111, %cst_33 [0] : vector<8x8xi32> to vector<8xi32>
    %113 = vector.shape_cast %112 : vector<8xi32> to vector<1x8xi32>
    %114 = vector.broadcast %113 : vector<1x8xi32> to vector<8x8xi32>
    %115 = arith.cmpi eq, %32, %114 : vector<8x8xi32>
    %116 = arith.extui %115 : vector<8x8xi1> to vector<8x8xi32>
    %117 = arith.sitofp %116 : vector<8x8xi32> to vector<8x8xf32>
    %118 = arith.mulf %117, %1 : vector<8x8xf32>
    %cst_34 = arith.constant dense<0.000000e+00> : vector<8xf32>
    %119 = vector.multi_reduction <add>, %118, %cst_34 [0] : vector<8x8xf32> to vector<8xf32>
    %120 = vector.shape_cast %119 : vector<8xf32> to vector<1x8xf32>
    %121 = arith.mulf %117, %3 : vector<8x8xf32>
    %cst_35 = arith.constant dense<0.000000e+00> : vector<8xf32>
    %122 = vector.multi_reduction <add>, %121, %cst_35 [0] : vector<8x8xf32> to vector<8xf32>
    %123 = vector.shape_cast %122 : vector<8xf32> to vector<1x8xf32>
    %cst_36 = arith.constant 0.000000e+00 : f32
    %124 = vector.broadcast %cst_36 : f32 to vector<1x8xf32>
    %125 = arith.subf %120, %48 : vector<1x8xf32>
    %126 = arith.mulf %125, %125 : vector<1x8xf32>
    %127 = arith.addf %124, %126 : vector<1x8xf32>
    %128 = arith.subf %123, %49 : vector<1x8xf32>
    %129 = arith.mulf %128, %128 : vector<1x8xf32>
    %130 = arith.addf %127, %129 : vector<1x8xf32>
    %131 = arith.maximumf %47, %130 : vector<1x8xf32>
    %cst_37 = arith.constant 0xFF800000 : f32
    %132 = vector.broadcast %cst_37 : f32 to vector<8x8xf32>
    %133 = arith.select %115, %132, %45 : vector<8x8xi1>, vector<8x8xf32>
    %134 = vector.broadcast %120 : vector<1x8xf32> to vector<8x8xf32>
    %135 = arith.mulf %39, %134 : vector<8x8xf32>
    %cst_38 = arith.constant dense<0.000000e+00> : vector<8xf32>
    %136 = vector.multi_reduction <add>, %135, %cst_38 [1] : vector<8x8xf32> to vector<8xf32>
    %137 = vector.shape_cast %136 : vector<8xf32> to vector<8x1xf32>
    %138 = vector.broadcast %123 : vector<1x8xf32> to vector<8x8xf32>
    %139 = arith.mulf %39, %138 : vector<8x8xf32>
    %cst_39 = arith.constant dense<0.000000e+00> : vector<8xf32>
    %140 = vector.multi_reduction <add>, %139, %cst_39 [1] : vector<8x8xf32> to vector<8xf32>
    %141 = vector.shape_cast %140 : vector<8xf32> to vector<8x1xf32>
    %cst_40 = arith.constant 0.000000e+00 : f32
    %142 = vector.broadcast %cst_40 : f32 to vector<8x8xf32>
    %143 = arith.select %34, %142, %133 : vector<8x8xi1>, vector<8x8xf32>
    %144 = vector.broadcast %137 : vector<8x1xf32> to vector<8x512xf32>
    %145 = arith.mulf %144, %8 : vector<8x512xf32>
    %146 = arith.addf %14, %145 : vector<8x512xf32>
    %147 = vector.broadcast %141 : vector<8x1xf32> to vector<8x512xf32>
    %148 = arith.mulf %147, %11 : vector<8x512xf32>
    %149 = arith.addf %146, %148 : vector<8x512xf32>
    %150 = arith.addf %149, %96 : vector<8x512xf32>
    %151 = vector.extract_strided_slice %150 {offsets = [0, 0], sizes = [8, 128], strides = [1, 1]} : vector<8x512xf32> to vector<8x128xf32>
    %cst_41 = arith.constant 5.000000e-01 : f32
    %152 = vector.broadcast %cst_41 : f32 to vector<8x128xf32>
    %153 = arith.mulf %152, %151 : vector<8x128xf32>
    %154 = math.tanh %153 : vector<8x128xf32>
    %cst_42 = arith.constant 1.000000e+00 : f32
    %155 = vector.broadcast %cst_42 : f32 to vector<8x128xf32>
    %156 = arith.addf %155, %154 : vector<8x128xf32>
    %cst_43 = arith.constant 5.000000e-01 : f32
    %157 = vector.broadcast %cst_43 : f32 to vector<8x128xf32>
    %158 = arith.mulf %157, %156 : vector<8x128xf32>
    %159 = vector.extract_strided_slice %150 {offsets = [0, 128], sizes = [8, 128], strides = [1, 1]} : vector<8x512xf32> to vector<8x128xf32>
    %cst_44 = arith.constant 5.000000e-01 : f32
    %160 = vector.broadcast %cst_44 : f32 to vector<8x128xf32>
    %161 = arith.mulf %160, %159 : vector<8x128xf32>
    %162 = math.tanh %161 : vector<8x128xf32>
    %cst_45 = arith.constant 1.000000e+00 : f32
    %163 = vector.broadcast %cst_45 : f32 to vector<8x128xf32>
    %164 = arith.addf %163, %162 : vector<8x128xf32>
    %cst_46 = arith.constant 5.000000e-01 : f32
    %165 = vector.broadcast %cst_46 : f32 to vector<8x128xf32>
    %166 = arith.mulf %165, %164 : vector<8x128xf32>
    %167 = vector.extract_strided_slice %150 {offsets = [0, 256], sizes = [8, 128], strides = [1, 1]} : vector<8x512xf32> to vector<8x128xf32>
    %168 = math.tanh %167 : vector<8x128xf32>
    %169 = vector.extract_strided_slice %150 {offsets = [0, 384], sizes = [8, 128], strides = [1, 1]} : vector<8x512xf32> to vector<8x128xf32>
    %cst_47 = arith.constant 5.000000e-01 : f32
    %170 = vector.broadcast %cst_47 : f32 to vector<8x128xf32>
    %171 = arith.mulf %170, %169 : vector<8x128xf32>
    %172 = math.tanh %171 : vector<8x128xf32>
    %cst_48 = arith.constant 1.000000e+00 : f32
    %173 = vector.broadcast %cst_48 : f32 to vector<8x128xf32>
    %174 = arith.addf %173, %172 : vector<8x128xf32>
    %cst_49 = arith.constant 5.000000e-01 : f32
    %175 = vector.broadcast %cst_49 : f32 to vector<8x128xf32>
    %176 = arith.mulf %175, %174 : vector<8x128xf32>
    %177 = arith.mulf %166, %92 : vector<8x128xf32>
    %178 = arith.mulf %158, %168 : vector<8x128xf32>
    %179 = arith.addf %177, %178 : vector<8x128xf32>
    %180 = math.tanh %179 : vector<8x128xf32>
    %181 = arith.mulf %176, %180 : vector<8x128xf32>
    %cst_50 = arith.constant dense<0.000000e+00> : vector<8x640xf32>
    %182 = tpu.matmul %181, %4, %cst_50 {dimension_numbers = #tpu.dot_dimension_numbers<[1], [0], [0], [1], [0, 0, 1, 1], [], []>} : vector<8x128xf32>, vector<128x640xf32>, vector<8x640xf32> -> vector<8x640xf32>
    %183 = vector.extract_strided_slice %182 {offsets = [0, 0], sizes = [8, 512], strides = [1, 1]} : vector<8x640xf32> to vector<8x512xf32>
    %184 = vector.extract_strided_slice %182 {offsets = [0, 512], sizes = [8, 128], strides = [1, 1]} : vector<8x640xf32> to vector<8x128xf32>
    %185 = vector.shape_cast %184 : vector<8x128xf32> to vector<1x8x128xf32>
    %186 = vector.broadcast %185 : vector<1x8x128xf32> to vector<8x8x128xf32>
    %187 = arith.addf %31, %186 : vector<8x8x128xf32>
    %188 = math.tanh %187 : vector<8x8x128xf32>
    %189 = vector.broadcast %16 : vector<1x1x128xf32> to vector<8x8x128xf32>
    %190 = arith.mulf %188, %189 : vector<8x8x128xf32>
    %cst_51 = arith.constant dense<0.000000e+00> : vector<8x8xf32>
    %191 = vector.multi_reduction <add>, %190, %cst_51 [2] : vector<8x8x128xf32> to vector<8x8xf32>
    %192 = arith.addf %191, %143 : vector<8x8xf32>
    %cst_52 = arith.constant dense<0xFF800000> : vector<8xf32>
    %193 = vector.multi_reduction <maximumf>, %192, %cst_52 [0] : vector<8x8xf32> to vector<8xf32>
    %194 = vector.shape_cast %193 : vector<8xf32> to vector<1x8xf32>
    %195 = vector.broadcast %194 : vector<1x8xf32> to vector<8x8xf32>
    %196 = arith.cmpf oge, %192, %195 : vector<8x8xf32>
    %c8_i32_53 = arith.constant 8 : i32
    %197 = vector.broadcast %c8_i32_53 : i32 to vector<8x8xi32>
    %198 = arith.select %196, %32, %197 : vector<8x8xi1>, vector<8x8xi32>
    %cst_54 = arith.constant dense<2147483647> : vector<8xi32>
    %199 = vector.multi_reduction <minsi>, %198, %cst_54 [0] : vector<8x8xi32> to vector<8xi32>
    %200 = vector.shape_cast %199 : vector<8xi32> to vector<1x8xi32>
    %201 = vector.broadcast %200 : vector<1x8xi32> to vector<8x8xi32>
    %202 = arith.cmpi eq, %32, %201 : vector<8x8xi32>
    %203 = arith.extui %202 : vector<8x8xi1> to vector<8x8xi32>
    %204 = arith.sitofp %203 : vector<8x8xi32> to vector<8x8xf32>
    %205 = arith.mulf %204, %1 : vector<8x8xf32>
    %cst_55 = arith.constant dense<0.000000e+00> : vector<8xf32>
    %206 = vector.multi_reduction <add>, %205, %cst_55 [0] : vector<8x8xf32> to vector<8xf32>
    %207 = vector.shape_cast %206 : vector<8xf32> to vector<1x8xf32>
    %208 = arith.mulf %204, %3 : vector<8x8xf32>
    %cst_56 = arith.constant dense<0.000000e+00> : vector<8xf32>
    %209 = vector.multi_reduction <add>, %208, %cst_56 [0] : vector<8x8xf32> to vector<8xf32>
    %210 = vector.shape_cast %209 : vector<8xf32> to vector<1x8xf32>
    %cst_57 = arith.constant 0.000000e+00 : f32
    %211 = vector.broadcast %cst_57 : f32 to vector<1x8xf32>
    %212 = arith.subf %207, %120 : vector<1x8xf32>
    %213 = arith.mulf %212, %212 : vector<1x8xf32>
    %214 = arith.addf %211, %213 : vector<1x8xf32>
    %215 = arith.subf %210, %123 : vector<1x8xf32>
    %216 = arith.mulf %215, %215 : vector<1x8xf32>
    %217 = arith.addf %214, %216 : vector<1x8xf32>
    %218 = arith.maximumf %131, %217 : vector<1x8xf32>
    %cst_58 = arith.constant 0xFF800000 : f32
    %219 = vector.broadcast %cst_58 : f32 to vector<8x8xf32>
    %220 = arith.select %202, %219, %143 : vector<8x8xi1>, vector<8x8xf32>
    %221 = vector.broadcast %207 : vector<1x8xf32> to vector<8x8xf32>
    %222 = arith.mulf %39, %221 : vector<8x8xf32>
    %cst_59 = arith.constant dense<0.000000e+00> : vector<8xf32>
    %223 = vector.multi_reduction <add>, %222, %cst_59 [1] : vector<8x8xf32> to vector<8xf32>
    %224 = vector.shape_cast %223 : vector<8xf32> to vector<8x1xf32>
    %225 = vector.broadcast %210 : vector<1x8xf32> to vector<8x8xf32>
    %226 = arith.mulf %39, %225 : vector<8x8xf32>
    %cst_60 = arith.constant dense<0.000000e+00> : vector<8xf32>
    %227 = vector.multi_reduction <add>, %226, %cst_60 [1] : vector<8x8xf32> to vector<8xf32>
    %228 = vector.shape_cast %227 : vector<8xf32> to vector<8x1xf32>
    %cst_61 = arith.constant 0.000000e+00 : f32
    %229 = vector.broadcast %cst_61 : f32 to vector<8x8xf32>
    %230 = arith.select %34, %229, %220 : vector<8x8xi1>, vector<8x8xf32>
    %231 = vector.broadcast %224 : vector<8x1xf32> to vector<8x512xf32>
    %232 = arith.mulf %231, %8 : vector<8x512xf32>
    %233 = arith.addf %14, %232 : vector<8x512xf32>
    %234 = vector.broadcast %228 : vector<8x1xf32> to vector<8x512xf32>
    %235 = arith.mulf %234, %11 : vector<8x512xf32>
    %236 = arith.addf %233, %235 : vector<8x512xf32>
    %237 = arith.addf %236, %183 : vector<8x512xf32>
    %238 = vector.extract_strided_slice %237 {offsets = [0, 0], sizes = [8, 128], strides = [1, 1]} : vector<8x512xf32> to vector<8x128xf32>
    %cst_62 = arith.constant 5.000000e-01 : f32
    %239 = vector.broadcast %cst_62 : f32 to vector<8x128xf32>
    %240 = arith.mulf %239, %238 : vector<8x128xf32>
    %241 = math.tanh %240 : vector<8x128xf32>
    %cst_63 = arith.constant 1.000000e+00 : f32
    %242 = vector.broadcast %cst_63 : f32 to vector<8x128xf32>
    %243 = arith.addf %242, %241 : vector<8x128xf32>
    %cst_64 = arith.constant 5.000000e-01 : f32
    %244 = vector.broadcast %cst_64 : f32 to vector<8x128xf32>
    %245 = arith.mulf %244, %243 : vector<8x128xf32>
    %246 = vector.extract_strided_slice %237 {offsets = [0, 128], sizes = [8, 128], strides = [1, 1]} : vector<8x512xf32> to vector<8x128xf32>
    %cst_65 = arith.constant 5.000000e-01 : f32
    %247 = vector.broadcast %cst_65 : f32 to vector<8x128xf32>
    %248 = arith.mulf %247, %246 : vector<8x128xf32>
    %249 = math.tanh %248 : vector<8x128xf32>
    %cst_66 = arith.constant 1.000000e+00 : f32
    %250 = vector.broadcast %cst_66 : f32 to vector<8x128xf32>
    %251 = arith.addf %250, %249 : vector<8x128xf32>
    %cst_67 = arith.constant 5.000000e-01 : f32
    %252 = vector.broadcast %cst_67 : f32 to vector<8x128xf32>
    %253 = arith.mulf %252, %251 : vector<8x128xf32>
    %254 = vector.extract_strided_slice %237 {offsets = [0, 256], sizes = [8, 128], strides = [1, 1]} : vector<8x512xf32> to vector<8x128xf32>
    %255 = math.tanh %254 : vector<8x128xf32>
    %256 = vector.extract_strided_slice %237 {offsets = [0, 384], sizes = [8, 128], strides = [1, 1]} : vector<8x512xf32> to vector<8x128xf32>
    %cst_68 = arith.constant 5.000000e-01 : f32
    %257 = vector.broadcast %cst_68 : f32 to vector<8x128xf32>
    %258 = arith.mulf %257, %256 : vector<8x128xf32>
    %259 = math.tanh %258 : vector<8x128xf32>
    %cst_69 = arith.constant 1.000000e+00 : f32
    %260 = vector.broadcast %cst_69 : f32 to vector<8x128xf32>
    %261 = arith.addf %260, %259 : vector<8x128xf32>
    %cst_70 = arith.constant 5.000000e-01 : f32
    %262 = vector.broadcast %cst_70 : f32 to vector<8x128xf32>
    %263 = arith.mulf %262, %261 : vector<8x128xf32>
    %264 = arith.mulf %253, %179 : vector<8x128xf32>
    %265 = arith.mulf %245, %255 : vector<8x128xf32>
    %266 = arith.addf %264, %265 : vector<8x128xf32>
    %267 = math.tanh %266 : vector<8x128xf32>
    %268 = arith.mulf %263, %267 : vector<8x128xf32>
    %cst_71 = arith.constant dense<0.000000e+00> : vector<8x640xf32>
    %269 = tpu.matmul %268, %4, %cst_71 {dimension_numbers = #tpu.dot_dimension_numbers<[1], [0], [0], [1], [0, 0, 1, 1], [], []>} : vector<8x128xf32>, vector<128x640xf32>, vector<8x640xf32> -> vector<8x640xf32>
    %270 = vector.extract_strided_slice %269 {offsets = [0, 0], sizes = [8, 512], strides = [1, 1]} : vector<8x640xf32> to vector<8x512xf32>
    %271 = vector.extract_strided_slice %269 {offsets = [0, 512], sizes = [8, 128], strides = [1, 1]} : vector<8x640xf32> to vector<8x128xf32>
    %272 = vector.shape_cast %271 : vector<8x128xf32> to vector<1x8x128xf32>
    %273 = vector.broadcast %272 : vector<1x8x128xf32> to vector<8x8x128xf32>
    %274 = arith.addf %31, %273 : vector<8x8x128xf32>
    %275 = math.tanh %274 : vector<8x8x128xf32>
    %276 = vector.broadcast %16 : vector<1x1x128xf32> to vector<8x8x128xf32>
    %277 = arith.mulf %275, %276 : vector<8x8x128xf32>
    %cst_72 = arith.constant dense<0.000000e+00> : vector<8x8xf32>
    %278 = vector.multi_reduction <add>, %277, %cst_72 [2] : vector<8x8x128xf32> to vector<8x8xf32>
    %279 = arith.addf %278, %230 : vector<8x8xf32>
    %cst_73 = arith.constant dense<0xFF800000> : vector<8xf32>
    %280 = vector.multi_reduction <maximumf>, %279, %cst_73 [0] : vector<8x8xf32> to vector<8xf32>
    %281 = vector.shape_cast %280 : vector<8xf32> to vector<1x8xf32>
    %282 = vector.broadcast %281 : vector<1x8xf32> to vector<8x8xf32>
    %283 = arith.cmpf oge, %279, %282 : vector<8x8xf32>
    %c8_i32_74 = arith.constant 8 : i32
    %284 = vector.broadcast %c8_i32_74 : i32 to vector<8x8xi32>
    %285 = arith.select %283, %32, %284 : vector<8x8xi1>, vector<8x8xi32>
    %cst_75 = arith.constant dense<2147483647> : vector<8xi32>
    %286 = vector.multi_reduction <minsi>, %285, %cst_75 [0] : vector<8x8xi32> to vector<8xi32>
    %287 = vector.shape_cast %286 : vector<8xi32> to vector<1x8xi32>
    %288 = vector.broadcast %287 : vector<1x8xi32> to vector<8x8xi32>
    %289 = arith.cmpi eq, %32, %288 : vector<8x8xi32>
    %290 = arith.extui %289 : vector<8x8xi1> to vector<8x8xi32>
    %291 = arith.sitofp %290 : vector<8x8xi32> to vector<8x8xf32>
    %292 = arith.mulf %291, %1 : vector<8x8xf32>
    %cst_76 = arith.constant dense<0.000000e+00> : vector<8xf32>
    %293 = vector.multi_reduction <add>, %292, %cst_76 [0] : vector<8x8xf32> to vector<8xf32>
    %294 = vector.shape_cast %293 : vector<8xf32> to vector<1x8xf32>
    %295 = arith.mulf %291, %3 : vector<8x8xf32>
    %cst_77 = arith.constant dense<0.000000e+00> : vector<8xf32>
    %296 = vector.multi_reduction <add>, %295, %cst_77 [0] : vector<8x8xf32> to vector<8xf32>
    %297 = vector.shape_cast %296 : vector<8xf32> to vector<1x8xf32>
    %cst_78 = arith.constant 0.000000e+00 : f32
    %298 = vector.broadcast %cst_78 : f32 to vector<1x8xf32>
    %299 = arith.subf %294, %207 : vector<1x8xf32>
    %300 = arith.mulf %299, %299 : vector<1x8xf32>
    %301 = arith.addf %298, %300 : vector<1x8xf32>
    %302 = arith.subf %297, %210 : vector<1x8xf32>
    %303 = arith.mulf %302, %302 : vector<1x8xf32>
    %304 = arith.addf %301, %303 : vector<1x8xf32>
    %305 = arith.maximumf %218, %304 : vector<1x8xf32>
    %cst_79 = arith.constant 0xFF800000 : f32
    %306 = vector.broadcast %cst_79 : f32 to vector<8x8xf32>
    %307 = arith.select %289, %306, %230 : vector<8x8xi1>, vector<8x8xf32>
    %308 = vector.broadcast %294 : vector<1x8xf32> to vector<8x8xf32>
    %309 = arith.mulf %39, %308 : vector<8x8xf32>
    %cst_80 = arith.constant dense<0.000000e+00> : vector<8xf32>
    %310 = vector.multi_reduction <add>, %309, %cst_80 [1] : vector<8x8xf32> to vector<8xf32>
    %311 = vector.shape_cast %310 : vector<8xf32> to vector<8x1xf32>
    %312 = vector.broadcast %297 : vector<1x8xf32> to vector<8x8xf32>
    %313 = arith.mulf %39, %312 : vector<8x8xf32>
    %cst_81 = arith.constant dense<0.000000e+00> : vector<8xf32>
    %314 = vector.multi_reduction <add>, %313, %cst_81 [1] : vector<8x8xf32> to vector<8xf32>
    %315 = vector.shape_cast %314 : vector<8xf32> to vector<8x1xf32>
    %cst_82 = arith.constant 0.000000e+00 : f32
    %316 = vector.broadcast %cst_82 : f32 to vector<8x8xf32>
    %317 = arith.select %34, %316, %307 : vector<8x8xi1>, vector<8x8xf32>
    %318 = vector.broadcast %311 : vector<8x1xf32> to vector<8x512xf32>
    %319 = arith.mulf %318, %8 : vector<8x512xf32>
    %320 = arith.addf %14, %319 : vector<8x512xf32>
    %321 = vector.broadcast %315 : vector<8x1xf32> to vector<8x512xf32>
    %322 = arith.mulf %321, %11 : vector<8x512xf32>
    %323 = arith.addf %320, %322 : vector<8x512xf32>
    %324 = arith.addf %323, %270 : vector<8x512xf32>
    %325 = vector.extract_strided_slice %324 {offsets = [0, 0], sizes = [8, 128], strides = [1, 1]} : vector<8x512xf32> to vector<8x128xf32>
    %cst_83 = arith.constant 5.000000e-01 : f32
    %326 = vector.broadcast %cst_83 : f32 to vector<8x128xf32>
    %327 = arith.mulf %326, %325 : vector<8x128xf32>
    %328 = math.tanh %327 : vector<8x128xf32>
    %cst_84 = arith.constant 1.000000e+00 : f32
    %329 = vector.broadcast %cst_84 : f32 to vector<8x128xf32>
    %330 = arith.addf %329, %328 : vector<8x128xf32>
    %cst_85 = arith.constant 5.000000e-01 : f32
    %331 = vector.broadcast %cst_85 : f32 to vector<8x128xf32>
    %332 = arith.mulf %331, %330 : vector<8x128xf32>
    %333 = vector.extract_strided_slice %324 {offsets = [0, 128], sizes = [8, 128], strides = [1, 1]} : vector<8x512xf32> to vector<8x128xf32>
    %cst_86 = arith.constant 5.000000e-01 : f32
    %334 = vector.broadcast %cst_86 : f32 to vector<8x128xf32>
    %335 = arith.mulf %334, %333 : vector<8x128xf32>
    %336 = math.tanh %335 : vector<8x128xf32>
    %cst_87 = arith.constant 1.000000e+00 : f32
    %337 = vector.broadcast %cst_87 : f32 to vector<8x128xf32>
    %338 = arith.addf %337, %336 : vector<8x128xf32>
    %cst_88 = arith.constant 5.000000e-01 : f32
    %339 = vector.broadcast %cst_88 : f32 to vector<8x128xf32>
    %340 = arith.mulf %339, %338 : vector<8x128xf32>
    %341 = vector.extract_strided_slice %324 {offsets = [0, 256], sizes = [8, 128], strides = [1, 1]} : vector<8x512xf32> to vector<8x128xf32>
    %342 = math.tanh %341 : vector<8x128xf32>
    %343 = vector.extract_strided_slice %324 {offsets = [0, 384], sizes = [8, 128], strides = [1, 1]} : vector<8x512xf32> to vector<8x128xf32>
    %cst_89 = arith.constant 5.000000e-01 : f32
    %344 = vector.broadcast %cst_89 : f32 to vector<8x128xf32>
    %345 = arith.mulf %344, %343 : vector<8x128xf32>
    %346 = math.tanh %345 : vector<8x128xf32>
    %cst_90 = arith.constant 1.000000e+00 : f32
    %347 = vector.broadcast %cst_90 : f32 to vector<8x128xf32>
    %348 = arith.addf %347, %346 : vector<8x128xf32>
    %cst_91 = arith.constant 5.000000e-01 : f32
    %349 = vector.broadcast %cst_91 : f32 to vector<8x128xf32>
    %350 = arith.mulf %349, %348 : vector<8x128xf32>
    %351 = arith.mulf %340, %266 : vector<8x128xf32>
    %352 = arith.mulf %332, %342 : vector<8x128xf32>
    %353 = arith.addf %351, %352 : vector<8x128xf32>
    %354 = math.tanh %353 : vector<8x128xf32>
    %355 = arith.mulf %350, %354 : vector<8x128xf32>
    %cst_92 = arith.constant dense<0.000000e+00> : vector<8x640xf32>
    %356 = tpu.matmul %355, %4, %cst_92 {dimension_numbers = #tpu.dot_dimension_numbers<[1], [0], [0], [1], [0, 0, 1, 1], [], []>} : vector<8x128xf32>, vector<128x640xf32>, vector<8x640xf32> -> vector<8x640xf32>
    %357 = vector.extract_strided_slice %356 {offsets = [0, 0], sizes = [8, 512], strides = [1, 1]} : vector<8x640xf32> to vector<8x512xf32>
    %358 = vector.extract_strided_slice %356 {offsets = [0, 512], sizes = [8, 128], strides = [1, 1]} : vector<8x640xf32> to vector<8x128xf32>
    %359 = vector.shape_cast %358 : vector<8x128xf32> to vector<1x8x128xf32>
    %360 = vector.broadcast %359 : vector<1x8x128xf32> to vector<8x8x128xf32>
    %361 = arith.addf %31, %360 : vector<8x8x128xf32>
    %362 = math.tanh %361 : vector<8x8x128xf32>
    %363 = vector.broadcast %16 : vector<1x1x128xf32> to vector<8x8x128xf32>
    %364 = arith.mulf %362, %363 : vector<8x8x128xf32>
    %cst_93 = arith.constant dense<0.000000e+00> : vector<8x8xf32>
    %365 = vector.multi_reduction <add>, %364, %cst_93 [2] : vector<8x8x128xf32> to vector<8x8xf32>
    %366 = arith.addf %365, %317 : vector<8x8xf32>
    %cst_94 = arith.constant dense<0xFF800000> : vector<8xf32>
    %367 = vector.multi_reduction <maximumf>, %366, %cst_94 [0] : vector<8x8xf32> to vector<8xf32>
    %368 = vector.shape_cast %367 : vector<8xf32> to vector<1x8xf32>
    %369 = vector.broadcast %368 : vector<1x8xf32> to vector<8x8xf32>
    %370 = arith.cmpf oge, %366, %369 : vector<8x8xf32>
    %c8_i32_95 = arith.constant 8 : i32
    %371 = vector.broadcast %c8_i32_95 : i32 to vector<8x8xi32>
    %372 = arith.select %370, %32, %371 : vector<8x8xi1>, vector<8x8xi32>
    %cst_96 = arith.constant dense<2147483647> : vector<8xi32>
    %373 = vector.multi_reduction <minsi>, %372, %cst_96 [0] : vector<8x8xi32> to vector<8xi32>
    %374 = vector.shape_cast %373 : vector<8xi32> to vector<1x8xi32>
    %375 = vector.broadcast %374 : vector<1x8xi32> to vector<8x8xi32>
    %376 = arith.cmpi eq, %32, %375 : vector<8x8xi32>
    %377 = arith.extui %376 : vector<8x8xi1> to vector<8x8xi32>
    %378 = arith.sitofp %377 : vector<8x8xi32> to vector<8x8xf32>
    %379 = arith.mulf %378, %1 : vector<8x8xf32>
    %cst_97 = arith.constant dense<0.000000e+00> : vector<8xf32>
    %380 = vector.multi_reduction <add>, %379, %cst_97 [0] : vector<8x8xf32> to vector<8xf32>
    %381 = vector.shape_cast %380 : vector<8xf32> to vector<1x8xf32>
    %382 = arith.mulf %378, %3 : vector<8x8xf32>
    %cst_98 = arith.constant dense<0.000000e+00> : vector<8xf32>
    %383 = vector.multi_reduction <add>, %382, %cst_98 [0] : vector<8x8xf32> to vector<8xf32>
    %384 = vector.shape_cast %383 : vector<8xf32> to vector<1x8xf32>
    %cst_99 = arith.constant 0.000000e+00 : f32
    %385 = vector.broadcast %cst_99 : f32 to vector<1x8xf32>
    %386 = arith.subf %381, %294 : vector<1x8xf32>
    %387 = arith.mulf %386, %386 : vector<1x8xf32>
    %388 = arith.addf %385, %387 : vector<1x8xf32>
    %389 = arith.subf %384, %297 : vector<1x8xf32>
    %390 = arith.mulf %389, %389 : vector<1x8xf32>
    %391 = arith.addf %388, %390 : vector<1x8xf32>
    %392 = arith.maximumf %305, %391 : vector<1x8xf32>
    %cst_100 = arith.constant 0xFF800000 : f32
    %393 = vector.broadcast %cst_100 : f32 to vector<8x8xf32>
    %394 = arith.select %376, %393, %317 : vector<8x8xi1>, vector<8x8xf32>
    %395 = vector.broadcast %381 : vector<1x8xf32> to vector<8x8xf32>
    %396 = arith.mulf %39, %395 : vector<8x8xf32>
    %cst_101 = arith.constant dense<0.000000e+00> : vector<8xf32>
    %397 = vector.multi_reduction <add>, %396, %cst_101 [1] : vector<8x8xf32> to vector<8xf32>
    %398 = vector.shape_cast %397 : vector<8xf32> to vector<8x1xf32>
    %399 = vector.broadcast %384 : vector<1x8xf32> to vector<8x8xf32>
    %400 = arith.mulf %39, %399 : vector<8x8xf32>
    %cst_102 = arith.constant dense<0.000000e+00> : vector<8xf32>
    %401 = vector.multi_reduction <add>, %400, %cst_102 [1] : vector<8x8xf32> to vector<8xf32>
    %402 = vector.shape_cast %401 : vector<8xf32> to vector<8x1xf32>
    %cst_103 = arith.constant 0.000000e+00 : f32
    %403 = vector.broadcast %cst_103 : f32 to vector<8x8xf32>
    %404 = arith.select %34, %403, %394 : vector<8x8xi1>, vector<8x8xf32>
    %405 = vector.broadcast %398 : vector<8x1xf32> to vector<8x512xf32>
    %406 = arith.mulf %405, %8 : vector<8x512xf32>
    %407 = arith.addf %14, %406 : vector<8x512xf32>
    %408 = vector.broadcast %402 : vector<8x1xf32> to vector<8x512xf32>
    %409 = arith.mulf %408, %11 : vector<8x512xf32>
    %410 = arith.addf %407, %409 : vector<8x512xf32>
    %411 = arith.addf %410, %357 : vector<8x512xf32>
    %412 = vector.extract_strided_slice %411 {offsets = [0, 0], sizes = [8, 128], strides = [1, 1]} : vector<8x512xf32> to vector<8x128xf32>
    %cst_104 = arith.constant 5.000000e-01 : f32
    %413 = vector.broadcast %cst_104 : f32 to vector<8x128xf32>
    %414 = arith.mulf %413, %412 : vector<8x128xf32>
    %415 = math.tanh %414 : vector<8x128xf32>
    %cst_105 = arith.constant 1.000000e+00 : f32
    %416 = vector.broadcast %cst_105 : f32 to vector<8x128xf32>
    %417 = arith.addf %416, %415 : vector<8x128xf32>
    %cst_106 = arith.constant 5.000000e-01 : f32
    %418 = vector.broadcast %cst_106 : f32 to vector<8x128xf32>
    %419 = arith.mulf %418, %417 : vector<8x128xf32>
    %420 = vector.extract_strided_slice %411 {offsets = [0, 128], sizes = [8, 128], strides = [1, 1]} : vector<8x512xf32> to vector<8x128xf32>
    %cst_107 = arith.constant 5.000000e-01 : f32
    %421 = vector.broadcast %cst_107 : f32 to vector<8x128xf32>
    %422 = arith.mulf %421, %420 : vector<8x128xf32>
    %423 = math.tanh %422 : vector<8x128xf32>
    %cst_108 = arith.constant 1.000000e+00 : f32
    %424 = vector.broadcast %cst_108 : f32 to vector<8x128xf32>
    %425 = arith.addf %424, %423 : vector<8x128xf32>
    %cst_109 = arith.constant 5.000000e-01 : f32
    %426 = vector.broadcast %cst_109 : f32 to vector<8x128xf32>
    %427 = arith.mulf %426, %425 : vector<8x128xf32>
    %428 = vector.extract_strided_slice %411 {offsets = [0, 256], sizes = [8, 128], strides = [1, 1]} : vector<8x512xf32> to vector<8x128xf32>
    %429 = math.tanh %428 : vector<8x128xf32>
    %430 = vector.extract_strided_slice %411 {offsets = [0, 384], sizes = [8, 128], strides = [1, 1]} : vector<8x512xf32> to vector<8x128xf32>
    %cst_110 = arith.constant 5.000000e-01 : f32
    %431 = vector.broadcast %cst_110 : f32 to vector<8x128xf32>
    %432 = arith.mulf %431, %430 : vector<8x128xf32>
    %433 = math.tanh %432 : vector<8x128xf32>
    %cst_111 = arith.constant 1.000000e+00 : f32
    %434 = vector.broadcast %cst_111 : f32 to vector<8x128xf32>
    %435 = arith.addf %434, %433 : vector<8x128xf32>
    %cst_112 = arith.constant 5.000000e-01 : f32
    %436 = vector.broadcast %cst_112 : f32 to vector<8x128xf32>
    %437 = arith.mulf %436, %435 : vector<8x128xf32>
    %438 = arith.mulf %427, %353 : vector<8x128xf32>
    %439 = arith.mulf %419, %429 : vector<8x128xf32>
    %440 = arith.addf %438, %439 : vector<8x128xf32>
    %441 = math.tanh %440 : vector<8x128xf32>
    %442 = arith.mulf %437, %441 : vector<8x128xf32>
    %cst_113 = arith.constant dense<0.000000e+00> : vector<8x640xf32>
    %443 = tpu.matmul %442, %4, %cst_113 {dimension_numbers = #tpu.dot_dimension_numbers<[1], [0], [0], [1], [0, 0, 1, 1], [], []>} : vector<8x128xf32>, vector<128x640xf32>, vector<8x640xf32> -> vector<8x640xf32>
    %444 = vector.extract_strided_slice %443 {offsets = [0, 0], sizes = [8, 512], strides = [1, 1]} : vector<8x640xf32> to vector<8x512xf32>
    %445 = vector.extract_strided_slice %443 {offsets = [0, 512], sizes = [8, 128], strides = [1, 1]} : vector<8x640xf32> to vector<8x128xf32>
    %446 = vector.shape_cast %445 : vector<8x128xf32> to vector<1x8x128xf32>
    %447 = vector.broadcast %446 : vector<1x8x128xf32> to vector<8x8x128xf32>
    %448 = arith.addf %31, %447 : vector<8x8x128xf32>
    %449 = math.tanh %448 : vector<8x8x128xf32>
    %450 = vector.broadcast %16 : vector<1x1x128xf32> to vector<8x8x128xf32>
    %451 = arith.mulf %449, %450 : vector<8x8x128xf32>
    %cst_114 = arith.constant dense<0.000000e+00> : vector<8x8xf32>
    %452 = vector.multi_reduction <add>, %451, %cst_114 [2] : vector<8x8x128xf32> to vector<8x8xf32>
    %453 = arith.addf %452, %404 : vector<8x8xf32>
    %cst_115 = arith.constant dense<0xFF800000> : vector<8xf32>
    %454 = vector.multi_reduction <maximumf>, %453, %cst_115 [0] : vector<8x8xf32> to vector<8xf32>
    %455 = vector.shape_cast %454 : vector<8xf32> to vector<1x8xf32>
    %456 = vector.broadcast %455 : vector<1x8xf32> to vector<8x8xf32>
    %457 = arith.cmpf oge, %453, %456 : vector<8x8xf32>
    %c8_i32_116 = arith.constant 8 : i32
    %458 = vector.broadcast %c8_i32_116 : i32 to vector<8x8xi32>
    %459 = arith.select %457, %32, %458 : vector<8x8xi1>, vector<8x8xi32>
    %cst_117 = arith.constant dense<2147483647> : vector<8xi32>
    %460 = vector.multi_reduction <minsi>, %459, %cst_117 [0] : vector<8x8xi32> to vector<8xi32>
    %461 = vector.shape_cast %460 : vector<8xi32> to vector<1x8xi32>
    %462 = vector.broadcast %461 : vector<1x8xi32> to vector<8x8xi32>
    %463 = arith.cmpi eq, %32, %462 : vector<8x8xi32>
    %464 = arith.extui %463 : vector<8x8xi1> to vector<8x8xi32>
    %465 = arith.sitofp %464 : vector<8x8xi32> to vector<8x8xf32>
    %466 = arith.mulf %465, %1 : vector<8x8xf32>
    %cst_118 = arith.constant dense<0.000000e+00> : vector<8xf32>
    %467 = vector.multi_reduction <add>, %466, %cst_118 [0] : vector<8x8xf32> to vector<8xf32>
    %468 = vector.shape_cast %467 : vector<8xf32> to vector<1x8xf32>
    %469 = arith.mulf %465, %3 : vector<8x8xf32>
    %cst_119 = arith.constant dense<0.000000e+00> : vector<8xf32>
    %470 = vector.multi_reduction <add>, %469, %cst_119 [0] : vector<8x8xf32> to vector<8xf32>
    %471 = vector.shape_cast %470 : vector<8xf32> to vector<1x8xf32>
    %cst_120 = arith.constant 0.000000e+00 : f32
    %472 = vector.broadcast %cst_120 : f32 to vector<1x8xf32>
    %473 = arith.subf %468, %381 : vector<1x8xf32>
    %474 = arith.mulf %473, %473 : vector<1x8xf32>
    %475 = arith.addf %472, %474 : vector<1x8xf32>
    %476 = arith.subf %471, %384 : vector<1x8xf32>
    %477 = arith.mulf %476, %476 : vector<1x8xf32>
    %478 = arith.addf %475, %477 : vector<1x8xf32>
    %479 = arith.maximumf %392, %478 : vector<1x8xf32>
    %cst_121 = arith.constant 0xFF800000 : f32
    %480 = vector.broadcast %cst_121 : f32 to vector<8x8xf32>
    %481 = arith.select %463, %480, %404 : vector<8x8xi1>, vector<8x8xf32>
    %482 = vector.broadcast %468 : vector<1x8xf32> to vector<8x8xf32>
    %483 = arith.mulf %39, %482 : vector<8x8xf32>
    %cst_122 = arith.constant dense<0.000000e+00> : vector<8xf32>
    %484 = vector.multi_reduction <add>, %483, %cst_122 [1] : vector<8x8xf32> to vector<8xf32>
    %485 = vector.shape_cast %484 : vector<8xf32> to vector<8x1xf32>
    %486 = vector.broadcast %471 : vector<1x8xf32> to vector<8x8xf32>
    %487 = arith.mulf %39, %486 : vector<8x8xf32>
    %cst_123 = arith.constant dense<0.000000e+00> : vector<8xf32>
    %488 = vector.multi_reduction <add>, %487, %cst_123 [1] : vector<8x8xf32> to vector<8xf32>
    %489 = vector.shape_cast %488 : vector<8xf32> to vector<8x1xf32>
    %cst_124 = arith.constant 0.000000e+00 : f32
    %490 = vector.broadcast %cst_124 : f32 to vector<8x8xf32>
    %491 = arith.select %34, %490, %481 : vector<8x8xi1>, vector<8x8xf32>
    %492 = vector.broadcast %485 : vector<8x1xf32> to vector<8x512xf32>
    %493 = arith.mulf %492, %8 : vector<8x512xf32>
    %494 = arith.addf %14, %493 : vector<8x512xf32>
    %495 = vector.broadcast %489 : vector<8x1xf32> to vector<8x512xf32>
    %496 = arith.mulf %495, %11 : vector<8x512xf32>
    %497 = arith.addf %494, %496 : vector<8x512xf32>
    %498 = arith.addf %497, %444 : vector<8x512xf32>
    %499 = vector.extract_strided_slice %498 {offsets = [0, 0], sizes = [8, 128], strides = [1, 1]} : vector<8x512xf32> to vector<8x128xf32>
    %cst_125 = arith.constant 5.000000e-01 : f32
    %500 = vector.broadcast %cst_125 : f32 to vector<8x128xf32>
    %501 = arith.mulf %500, %499 : vector<8x128xf32>
    %502 = math.tanh %501 : vector<8x128xf32>
    %cst_126 = arith.constant 1.000000e+00 : f32
    %503 = vector.broadcast %cst_126 : f32 to vector<8x128xf32>
    %504 = arith.addf %503, %502 : vector<8x128xf32>
    %cst_127 = arith.constant 5.000000e-01 : f32
    %505 = vector.broadcast %cst_127 : f32 to vector<8x128xf32>
    %506 = arith.mulf %505, %504 : vector<8x128xf32>
    %507 = vector.extract_strided_slice %498 {offsets = [0, 128], sizes = [8, 128], strides = [1, 1]} : vector<8x512xf32> to vector<8x128xf32>
    %cst_128 = arith.constant 5.000000e-01 : f32
    %508 = vector.broadcast %cst_128 : f32 to vector<8x128xf32>
    %509 = arith.mulf %508, %507 : vector<8x128xf32>
    %510 = math.tanh %509 : vector<8x128xf32>
    %cst_129 = arith.constant 1.000000e+00 : f32
    %511 = vector.broadcast %cst_129 : f32 to vector<8x128xf32>
    %512 = arith.addf %511, %510 : vector<8x128xf32>
    %cst_130 = arith.constant 5.000000e-01 : f32
    %513 = vector.broadcast %cst_130 : f32 to vector<8x128xf32>
    %514 = arith.mulf %513, %512 : vector<8x128xf32>
    %515 = vector.extract_strided_slice %498 {offsets = [0, 256], sizes = [8, 128], strides = [1, 1]} : vector<8x512xf32> to vector<8x128xf32>
    %516 = math.tanh %515 : vector<8x128xf32>
    %517 = vector.extract_strided_slice %498 {offsets = [0, 384], sizes = [8, 128], strides = [1, 1]} : vector<8x512xf32> to vector<8x128xf32>
    %cst_131 = arith.constant 5.000000e-01 : f32
    %518 = vector.broadcast %cst_131 : f32 to vector<8x128xf32>
    %519 = arith.mulf %518, %517 : vector<8x128xf32>
    %520 = math.tanh %519 : vector<8x128xf32>
    %cst_132 = arith.constant 1.000000e+00 : f32
    %521 = vector.broadcast %cst_132 : f32 to vector<8x128xf32>
    %522 = arith.addf %521, %520 : vector<8x128xf32>
    %cst_133 = arith.constant 5.000000e-01 : f32
    %523 = vector.broadcast %cst_133 : f32 to vector<8x128xf32>
    %524 = arith.mulf %523, %522 : vector<8x128xf32>
    %525 = arith.mulf %514, %440 : vector<8x128xf32>
    %526 = arith.mulf %506, %516 : vector<8x128xf32>
    %527 = arith.addf %525, %526 : vector<8x128xf32>
    %528 = math.tanh %527 : vector<8x128xf32>
    %529 = arith.mulf %524, %528 : vector<8x128xf32>
    %cst_134 = arith.constant dense<0.000000e+00> : vector<8x640xf32>
    %530 = tpu.matmul %529, %4, %cst_134 {dimension_numbers = #tpu.dot_dimension_numbers<[1], [0], [0], [1], [0, 0, 1, 1], [], []>} : vector<8x128xf32>, vector<128x640xf32>, vector<8x640xf32> -> vector<8x640xf32>
    %531 = vector.extract_strided_slice %530 {offsets = [0, 0], sizes = [8, 512], strides = [1, 1]} : vector<8x640xf32> to vector<8x512xf32>
    %532 = vector.extract_strided_slice %530 {offsets = [0, 512], sizes = [8, 128], strides = [1, 1]} : vector<8x640xf32> to vector<8x128xf32>
    %533 = vector.shape_cast %532 : vector<8x128xf32> to vector<1x8x128xf32>
    %534 = vector.broadcast %533 : vector<1x8x128xf32> to vector<8x8x128xf32>
    %535 = arith.addf %31, %534 : vector<8x8x128xf32>
    %536 = math.tanh %535 : vector<8x8x128xf32>
    %537 = vector.broadcast %16 : vector<1x1x128xf32> to vector<8x8x128xf32>
    %538 = arith.mulf %536, %537 : vector<8x8x128xf32>
    %cst_135 = arith.constant dense<0.000000e+00> : vector<8x8xf32>
    %539 = vector.multi_reduction <add>, %538, %cst_135 [2] : vector<8x8x128xf32> to vector<8x8xf32>
    %540 = arith.addf %539, %491 : vector<8x8xf32>
    %cst_136 = arith.constant dense<0xFF800000> : vector<8xf32>
    %541 = vector.multi_reduction <maximumf>, %540, %cst_136 [0] : vector<8x8xf32> to vector<8xf32>
    %542 = vector.shape_cast %541 : vector<8xf32> to vector<1x8xf32>
    %543 = vector.broadcast %542 : vector<1x8xf32> to vector<8x8xf32>
    %544 = arith.cmpf oge, %540, %543 : vector<8x8xf32>
    %c8_i32_137 = arith.constant 8 : i32
    %545 = vector.broadcast %c8_i32_137 : i32 to vector<8x8xi32>
    %546 = arith.select %544, %32, %545 : vector<8x8xi1>, vector<8x8xi32>
    %cst_138 = arith.constant dense<2147483647> : vector<8xi32>
    %547 = vector.multi_reduction <minsi>, %546, %cst_138 [0] : vector<8x8xi32> to vector<8xi32>
    %548 = vector.shape_cast %547 : vector<8xi32> to vector<1x8xi32>
    %549 = vector.broadcast %548 : vector<1x8xi32> to vector<8x8xi32>
    %550 = arith.cmpi eq, %32, %549 : vector<8x8xi32>
    %551 = arith.extui %550 : vector<8x8xi1> to vector<8x8xi32>
    %552 = arith.sitofp %551 : vector<8x8xi32> to vector<8x8xf32>
    %553 = arith.mulf %552, %1 : vector<8x8xf32>
    %cst_139 = arith.constant dense<0.000000e+00> : vector<8xf32>
    %554 = vector.multi_reduction <add>, %553, %cst_139 [0] : vector<8x8xf32> to vector<8xf32>
    %555 = vector.shape_cast %554 : vector<8xf32> to vector<1x8xf32>
    %556 = arith.mulf %552, %3 : vector<8x8xf32>
    %cst_140 = arith.constant dense<0.000000e+00> : vector<8xf32>
    %557 = vector.multi_reduction <add>, %556, %cst_140 [0] : vector<8x8xf32> to vector<8xf32>
    %558 = vector.shape_cast %557 : vector<8xf32> to vector<1x8xf32>
    %cst_141 = arith.constant 0.000000e+00 : f32
    %559 = vector.broadcast %cst_141 : f32 to vector<1x8xf32>
    %560 = arith.subf %555, %468 : vector<1x8xf32>
    %561 = arith.mulf %560, %560 : vector<1x8xf32>
    %562 = arith.addf %559, %561 : vector<1x8xf32>
    %563 = arith.subf %558, %471 : vector<1x8xf32>
    %564 = arith.mulf %563, %563 : vector<1x8xf32>
    %565 = arith.addf %562, %564 : vector<1x8xf32>
    %566 = arith.maximumf %479, %565 : vector<1x8xf32>
    %cst_142 = arith.constant 0xFF800000 : f32
    %567 = vector.broadcast %cst_142 : f32 to vector<8x8xf32>
    %568 = arith.select %550, %567, %491 : vector<8x8xi1>, vector<8x8xf32>
    %569 = vector.broadcast %555 : vector<1x8xf32> to vector<8x8xf32>
    %570 = arith.mulf %39, %569 : vector<8x8xf32>
    %cst_143 = arith.constant dense<0.000000e+00> : vector<8xf32>
    %571 = vector.multi_reduction <add>, %570, %cst_143 [1] : vector<8x8xf32> to vector<8xf32>
    %572 = vector.shape_cast %571 : vector<8xf32> to vector<8x1xf32>
    %573 = vector.broadcast %558 : vector<1x8xf32> to vector<8x8xf32>
    %574 = arith.mulf %39, %573 : vector<8x8xf32>
    %cst_144 = arith.constant dense<0.000000e+00> : vector<8xf32>
    %575 = vector.multi_reduction <add>, %574, %cst_144 [1] : vector<8x8xf32> to vector<8xf32>
    %576 = vector.shape_cast %575 : vector<8xf32> to vector<8x1xf32>
    %cst_145 = arith.constant 0.000000e+00 : f32
    %577 = vector.broadcast %cst_145 : f32 to vector<8x8xf32>
    %578 = arith.select %34, %577, %568 : vector<8x8xi1>, vector<8x8xf32>
    %579 = vector.broadcast %572 : vector<8x1xf32> to vector<8x512xf32>
    %580 = arith.mulf %579, %8 : vector<8x512xf32>
    %581 = arith.addf %14, %580 : vector<8x512xf32>
    %582 = vector.broadcast %576 : vector<8x1xf32> to vector<8x512xf32>
    %583 = arith.mulf %582, %11 : vector<8x512xf32>
    %584 = arith.addf %581, %583 : vector<8x512xf32>
    %585 = arith.addf %584, %531 : vector<8x512xf32>
    %586 = vector.extract_strided_slice %585 {offsets = [0, 0], sizes = [8, 128], strides = [1, 1]} : vector<8x512xf32> to vector<8x128xf32>
    %cst_146 = arith.constant 5.000000e-01 : f32
    %587 = vector.broadcast %cst_146 : f32 to vector<8x128xf32>
    %588 = arith.mulf %587, %586 : vector<8x128xf32>
    %589 = math.tanh %588 : vector<8x128xf32>
    %cst_147 = arith.constant 1.000000e+00 : f32
    %590 = vector.broadcast %cst_147 : f32 to vector<8x128xf32>
    %591 = arith.addf %590, %589 : vector<8x128xf32>
    %cst_148 = arith.constant 5.000000e-01 : f32
    %592 = vector.broadcast %cst_148 : f32 to vector<8x128xf32>
    %593 = arith.mulf %592, %591 : vector<8x128xf32>
    %594 = vector.extract_strided_slice %585 {offsets = [0, 128], sizes = [8, 128], strides = [1, 1]} : vector<8x512xf32> to vector<8x128xf32>
    %cst_149 = arith.constant 5.000000e-01 : f32
    %595 = vector.broadcast %cst_149 : f32 to vector<8x128xf32>
    %596 = arith.mulf %595, %594 : vector<8x128xf32>
    %597 = math.tanh %596 : vector<8x128xf32>
    %cst_150 = arith.constant 1.000000e+00 : f32
    %598 = vector.broadcast %cst_150 : f32 to vector<8x128xf32>
    %599 = arith.addf %598, %597 : vector<8x128xf32>
    %cst_151 = arith.constant 5.000000e-01 : f32
    %600 = vector.broadcast %cst_151 : f32 to vector<8x128xf32>
    %601 = arith.mulf %600, %599 : vector<8x128xf32>
    %602 = vector.extract_strided_slice %585 {offsets = [0, 256], sizes = [8, 128], strides = [1, 1]} : vector<8x512xf32> to vector<8x128xf32>
    %603 = math.tanh %602 : vector<8x128xf32>
    %604 = vector.extract_strided_slice %585 {offsets = [0, 384], sizes = [8, 128], strides = [1, 1]} : vector<8x512xf32> to vector<8x128xf32>
    %cst_152 = arith.constant 5.000000e-01 : f32
    %605 = vector.broadcast %cst_152 : f32 to vector<8x128xf32>
    %606 = arith.mulf %605, %604 : vector<8x128xf32>
    %607 = math.tanh %606 : vector<8x128xf32>
    %cst_153 = arith.constant 1.000000e+00 : f32
    %608 = vector.broadcast %cst_153 : f32 to vector<8x128xf32>
    %609 = arith.addf %608, %607 : vector<8x128xf32>
    %cst_154 = arith.constant 5.000000e-01 : f32
    %610 = vector.broadcast %cst_154 : f32 to vector<8x128xf32>
    %611 = arith.mulf %610, %609 : vector<8x128xf32>
    %612 = arith.mulf %601, %527 : vector<8x128xf32>
    %613 = arith.mulf %593, %603 : vector<8x128xf32>
    %614 = arith.addf %612, %613 : vector<8x128xf32>
    %615 = math.tanh %614 : vector<8x128xf32>
    %616 = arith.mulf %611, %615 : vector<8x128xf32>
    %cst_155 = arith.constant dense<0.000000e+00> : vector<8x640xf32>
    %617 = tpu.matmul %616, %4, %cst_155 {dimension_numbers = #tpu.dot_dimension_numbers<[1], [0], [0], [1], [0, 0, 1, 1], [], []>} : vector<8x128xf32>, vector<128x640xf32>, vector<8x640xf32> -> vector<8x640xf32>
    %618 = vector.extract_strided_slice %617 {offsets = [0, 0], sizes = [8, 512], strides = [1, 1]} : vector<8x640xf32> to vector<8x512xf32>
    %619 = vector.extract_strided_slice %617 {offsets = [0, 512], sizes = [8, 128], strides = [1, 1]} : vector<8x640xf32> to vector<8x128xf32>
    %620 = vector.shape_cast %619 : vector<8x128xf32> to vector<1x8x128xf32>
    %621 = vector.broadcast %620 : vector<1x8x128xf32> to vector<8x8x128xf32>
    %622 = arith.addf %31, %621 : vector<8x8x128xf32>
    %623 = math.tanh %622 : vector<8x8x128xf32>
    %624 = vector.broadcast %16 : vector<1x1x128xf32> to vector<8x8x128xf32>
    %625 = arith.mulf %623, %624 : vector<8x8x128xf32>
    %cst_156 = arith.constant dense<0.000000e+00> : vector<8x8xf32>
    %626 = vector.multi_reduction <add>, %625, %cst_156 [2] : vector<8x8x128xf32> to vector<8x8xf32>
    %627 = arith.addf %626, %578 : vector<8x8xf32>
    %cst_157 = arith.constant dense<0xFF800000> : vector<8xf32>
    %628 = vector.multi_reduction <maximumf>, %627, %cst_157 [0] : vector<8x8xf32> to vector<8xf32>
    %629 = vector.shape_cast %628 : vector<8xf32> to vector<1x8xf32>
    %630 = vector.broadcast %629 : vector<1x8xf32> to vector<8x8xf32>
    %631 = arith.cmpf oge, %627, %630 : vector<8x8xf32>
    %c8_i32_158 = arith.constant 8 : i32
    %632 = vector.broadcast %c8_i32_158 : i32 to vector<8x8xi32>
    %633 = arith.select %631, %32, %632 : vector<8x8xi1>, vector<8x8xi32>
    %cst_159 = arith.constant dense<2147483647> : vector<8xi32>
    %634 = vector.multi_reduction <minsi>, %633, %cst_159 [0] : vector<8x8xi32> to vector<8xi32>
    %635 = vector.shape_cast %634 : vector<8xi32> to vector<1x8xi32>
    %636 = vector.broadcast %635 : vector<1x8xi32> to vector<8x8xi32>
    %637 = arith.cmpi eq, %32, %636 : vector<8x8xi32>
    %638 = arith.extui %637 : vector<8x8xi1> to vector<8x8xi32>
    %639 = arith.sitofp %638 : vector<8x8xi32> to vector<8x8xf32>
    %640 = arith.mulf %639, %1 : vector<8x8xf32>
    %cst_160 = arith.constant dense<0.000000e+00> : vector<8xf32>
    %641 = vector.multi_reduction <add>, %640, %cst_160 [0] : vector<8x8xf32> to vector<8xf32>
    %642 = vector.shape_cast %641 : vector<8xf32> to vector<1x8xf32>
    %643 = arith.mulf %639, %3 : vector<8x8xf32>
    %cst_161 = arith.constant dense<0.000000e+00> : vector<8xf32>
    %644 = vector.multi_reduction <add>, %643, %cst_161 [0] : vector<8x8xf32> to vector<8xf32>
    %645 = vector.shape_cast %644 : vector<8xf32> to vector<1x8xf32>
    %cst_162 = arith.constant 0.000000e+00 : f32
    %646 = vector.broadcast %cst_162 : f32 to vector<1x8xf32>
    %647 = arith.subf %642, %555 : vector<1x8xf32>
    %648 = arith.mulf %647, %647 : vector<1x8xf32>
    %649 = arith.addf %646, %648 : vector<1x8xf32>
    %650 = arith.subf %645, %558 : vector<1x8xf32>
    %651 = arith.mulf %650, %650 : vector<1x8xf32>
    %652 = arith.addf %649, %651 : vector<1x8xf32>
    %653 = arith.maximumf %566, %652 : vector<1x8xf32>
    %cst_163 = arith.constant 0xFF800000 : f32
    %654 = vector.broadcast %cst_163 : f32 to vector<8x8xf32>
    %655 = arith.select %637, %654, %578 : vector<8x8xi1>, vector<8x8xf32>
    %656 = vector.broadcast %642 : vector<1x8xf32> to vector<8x8xf32>
    %657 = arith.mulf %39, %656 : vector<8x8xf32>
    %cst_164 = arith.constant dense<0.000000e+00> : vector<8xf32>
    %658 = vector.multi_reduction <add>, %657, %cst_164 [1] : vector<8x8xf32> to vector<8xf32>
    %659 = vector.shape_cast %658 : vector<8xf32> to vector<8x1xf32>
    %660 = vector.broadcast %645 : vector<1x8xf32> to vector<8x8xf32>
    %661 = arith.mulf %39, %660 : vector<8x8xf32>
    %cst_165 = arith.constant dense<0.000000e+00> : vector<8xf32>
    %662 = vector.multi_reduction <add>, %661, %cst_165 [1] : vector<8x8xf32> to vector<8xf32>
    %663 = vector.shape_cast %662 : vector<8xf32> to vector<8x1xf32>
    %cst_166 = arith.constant 0.000000e+00 : f32
    %664 = vector.broadcast %cst_166 : f32 to vector<8x8xf32>
    %665 = arith.select %34, %664, %655 : vector<8x8xi1>, vector<8x8xf32>
    %666 = vector.broadcast %659 : vector<8x1xf32> to vector<8x512xf32>
    %667 = arith.mulf %666, %8 : vector<8x512xf32>
    %668 = arith.addf %14, %667 : vector<8x512xf32>
    %669 = vector.broadcast %663 : vector<8x1xf32> to vector<8x512xf32>
    %670 = arith.mulf %669, %11 : vector<8x512xf32>
    %671 = arith.addf %668, %670 : vector<8x512xf32>
    %672 = arith.addf %671, %618 : vector<8x512xf32>
    %673 = vector.extract_strided_slice %672 {offsets = [0, 0], sizes = [8, 128], strides = [1, 1]} : vector<8x512xf32> to vector<8x128xf32>
    %cst_167 = arith.constant 5.000000e-01 : f32
    %674 = vector.broadcast %cst_167 : f32 to vector<8x128xf32>
    %675 = arith.mulf %674, %673 : vector<8x128xf32>
    %676 = math.tanh %675 : vector<8x128xf32>
    %cst_168 = arith.constant 1.000000e+00 : f32
    %677 = vector.broadcast %cst_168 : f32 to vector<8x128xf32>
    %678 = arith.addf %677, %676 : vector<8x128xf32>
    %cst_169 = arith.constant 5.000000e-01 : f32
    %679 = vector.broadcast %cst_169 : f32 to vector<8x128xf32>
    %680 = arith.mulf %679, %678 : vector<8x128xf32>
    %681 = vector.extract_strided_slice %672 {offsets = [0, 128], sizes = [8, 128], strides = [1, 1]} : vector<8x512xf32> to vector<8x128xf32>
    %cst_170 = arith.constant 5.000000e-01 : f32
    %682 = vector.broadcast %cst_170 : f32 to vector<8x128xf32>
    %683 = arith.mulf %682, %681 : vector<8x128xf32>
    %684 = math.tanh %683 : vector<8x128xf32>
    %cst_171 = arith.constant 1.000000e+00 : f32
    %685 = vector.broadcast %cst_171 : f32 to vector<8x128xf32>
    %686 = arith.addf %685, %684 : vector<8x128xf32>
    %cst_172 = arith.constant 5.000000e-01 : f32
    %687 = vector.broadcast %cst_172 : f32 to vector<8x128xf32>
    %688 = arith.mulf %687, %686 : vector<8x128xf32>
    %689 = vector.extract_strided_slice %672 {offsets = [0, 256], sizes = [8, 128], strides = [1, 1]} : vector<8x512xf32> to vector<8x128xf32>
    %690 = math.tanh %689 : vector<8x128xf32>
    %691 = vector.extract_strided_slice %672 {offsets = [0, 384], sizes = [8, 128], strides = [1, 1]} : vector<8x512xf32> to vector<8x128xf32>
    %cst_173 = arith.constant 5.000000e-01 : f32
    %692 = vector.broadcast %cst_173 : f32 to vector<8x128xf32>
    %693 = arith.mulf %692, %691 : vector<8x128xf32>
    %694 = math.tanh %693 : vector<8x128xf32>
    %cst_174 = arith.constant 1.000000e+00 : f32
    %695 = vector.broadcast %cst_174 : f32 to vector<8x128xf32>
    %696 = arith.addf %695, %694 : vector<8x128xf32>
    %cst_175 = arith.constant 5.000000e-01 : f32
    %697 = vector.broadcast %cst_175 : f32 to vector<8x128xf32>
    %698 = arith.mulf %697, %696 : vector<8x128xf32>
    %699 = arith.mulf %688, %614 : vector<8x128xf32>
    %700 = arith.mulf %680, %690 : vector<8x128xf32>
    %701 = arith.addf %699, %700 : vector<8x128xf32>
    %702 = math.tanh %701 : vector<8x128xf32>
    %703 = arith.mulf %698, %702 : vector<8x128xf32>
    %cst_176 = arith.constant dense<0.000000e+00> : vector<8x128xf32>
    %704 = tpu.matmul %703, %5, %cst_176 {dimension_numbers = #tpu.dot_dimension_numbers<[1], [0], [0], [1], [0, 0, 1, 1], [], []>} : vector<8x128xf32>, vector<128x128xf32>, vector<8x128xf32> -> vector<8x128xf32>
    %705 = vector.shape_cast %704 : vector<8x128xf32> to vector<1x8x128xf32>
    %706 = vector.broadcast %705 : vector<1x8x128xf32> to vector<8x8x128xf32>
    %707 = arith.addf %31, %706 : vector<8x8x128xf32>
    %708 = math.tanh %707 : vector<8x8x128xf32>
    %709 = vector.broadcast %16 : vector<1x1x128xf32> to vector<8x8x128xf32>
    %710 = arith.mulf %708, %709 : vector<8x8x128xf32>
    %cst_177 = arith.constant dense<0.000000e+00> : vector<8x8xf32>
    %711 = vector.multi_reduction <add>, %710, %cst_177 [2] : vector<8x8x128xf32> to vector<8x8xf32>
    %712 = arith.addf %711, %665 : vector<8x8xf32>
    %cst_178 = arith.constant dense<0xFF800000> : vector<8xf32>
    %713 = vector.multi_reduction <maximumf>, %712, %cst_178 [0] : vector<8x8xf32> to vector<8xf32>
    %714 = vector.shape_cast %713 : vector<8xf32> to vector<1x8xf32>
    %715 = vector.broadcast %714 : vector<1x8xf32> to vector<8x8xf32>
    %716 = arith.cmpf oge, %712, %715 : vector<8x8xf32>
    %c8_i32_179 = arith.constant 8 : i32
    %717 = vector.broadcast %c8_i32_179 : i32 to vector<8x8xi32>
    %718 = arith.select %716, %32, %717 : vector<8x8xi1>, vector<8x8xi32>
    %cst_180 = arith.constant dense<2147483647> : vector<8xi32>
    %719 = vector.multi_reduction <minsi>, %718, %cst_180 [0] : vector<8x8xi32> to vector<8xi32>
    %720 = vector.shape_cast %719 : vector<8xi32> to vector<1x8xi32>
    %721 = vector.broadcast %720 : vector<1x8xi32> to vector<8x8xi32>
    %722 = arith.cmpi eq, %32, %721 : vector<8x8xi32>
    %723 = arith.extui %722 : vector<8x8xi1> to vector<8x8xi32>
    %724 = arith.sitofp %723 : vector<8x8xi32> to vector<8x8xf32>
    %725 = arith.mulf %724, %1 : vector<8x8xf32>
    %cst_181 = arith.constant dense<0.000000e+00> : vector<8xf32>
    %726 = vector.multi_reduction <add>, %725, %cst_181 [0] : vector<8x8xf32> to vector<8xf32>
    %727 = vector.shape_cast %726 : vector<8xf32> to vector<1x8xf32>
    %728 = arith.mulf %724, %3 : vector<8x8xf32>
    %cst_182 = arith.constant dense<0.000000e+00> : vector<8xf32>
    %729 = vector.multi_reduction <add>, %728, %cst_182 [0] : vector<8x8xf32> to vector<8xf32>
    %730 = vector.shape_cast %729 : vector<8xf32> to vector<1x8xf32>
    %cst_183 = arith.constant 0.000000e+00 : f32
    %731 = vector.broadcast %cst_183 : f32 to vector<1x8xf32>
    %732 = arith.subf %727, %642 : vector<1x8xf32>
    %733 = arith.mulf %732, %732 : vector<1x8xf32>
    %734 = arith.addf %731, %733 : vector<1x8xf32>
    %735 = arith.subf %730, %645 : vector<1x8xf32>
    %736 = arith.mulf %735, %735 : vector<1x8xf32>
    %737 = arith.addf %734, %736 : vector<1x8xf32>
    %738 = arith.maximumf %653, %737 : vector<1x8xf32>
    %739 = math.sqrt %738 : vector<1x8xf32>
    %740 = vector.shape_cast %739 : vector<1x8xf32> to vector<1x1x8xf32>
    %cst_184 = arith.constant dense<0.000000e+00> : vector<1xf32>
    %741 = vector.multi_reduction <add>, %740, %cst_184 [1, 2] : vector<1x1x8xf32> to vector<1xf32>
    %742 = vector.shape_cast %741 : vector<1xf32> to vector<1x1x1xf32>
    %743 = vector.extract %742[0, 0, 0] : f32 from vector<1x1x1xf32>
    %744 = vector.broadcast %743 : f32 to vector<1x1xf32>
    %cst_185 = arith.constant 8.000000e+00 : f32
    %745 = vector.broadcast %cst_185 : f32 to vector<1x1xf32>
    %746 = arith.divf %744, %745 : vector<1x1xf32>
    %c0_186 = arith.constant 0 : index
    %c0_187 = arith.constant 0 : index
    %747 = vector.load %arg3[%c0_186, %c0_187] : memref<1x1xf32, #tpu.memory_space<vmem>>, vector<1x1xf32>
    tpu.vector_store %arg3[%c0_186, %c0_187], %746 {strides = array<i32>} : memref<1x1xf32, #tpu.memory_space<vmem>>, vector<1x1xf32>,
    return
  }
}

</mosaic_0001>

<llo_original>
// kernel: rgnn_loss.1
$region0: #{rgnn_loss.1}
  #allocation0 [shape = 'u32[]', space=smem, size = 0x4, offset = 0x4, fixed_abs, tag = 'smem constant byte address 0x4 - core index']
  #allocation1 [shape = 'u32[144,128]{1,0:T(1,128)}', space=vmem, size = 0x12000, scoped, tag = 'internal scratch']
  %s0 = inlined_call_operand.vmem [shape: f32[2,8,8], index: 0, kind: input, shape index: {}]
  %s1 = inlined_call_operand.vmem [shape: f32[8,512], index: 1, kind: input, shape index: {}]
  %s2 = inlined_call_operand.vmem [shape: f32[128,640], index: 2, kind: input, shape index: {}]
  %s3 = inlined_call_operand.hbm [shape: f32[1,1], index: 3, kind: output, shape index: {}]
  %s4 = sld [smem:[#allocation0]]
  $region22: #{rgnn_loss.1} parent=0
    _
  %s6 = ssub.s32 1, %s4
  %s7 = scalar_select 0, %s6, %s4
  $region1: #{rgnn_loss.1} parent=0
    #allocation2 [shape = 'u8[512]{0}', space=vmem, size = 0x400, scoped, tag = 'output window, operand 0, single buffered']
    #allocation3 [shape = 's32[1]{0}', space=sflag, size = 0x4, scoped, tag = 'scoped memory for rgnn_loss.1']
    %8 = vsyncpa [#allocation3], 0
    // Predicated region
    $region2: #{rgnn_loss.1} parent=1 // pred_check
      _
    $region3: #{rgnn_loss.1} parent=1 // pred_check_branch
      %10 = sbr.rel (0) target = $region5
    $region4: #{rgnn_loss.1} parent=1 // pred_region
      _
    $region5: #{rgnn_loss.1} parent=1 // pred_fallthru
      _
    // Predicated region
    $region6: #{rgnn_loss.1} parent=1 // pred_check
      _
    $region7: #{rgnn_loss.1} parent=1 // pred_check_branch
      %12 = sbr.rel (0) target = $region9
    $region8: #{rgnn_loss.1} parent=1 // pred_region
      _
    $region9: #{rgnn_loss.1} parent=1 // pred_fallthru
      _
    // Predicated region
    $region10: #{rgnn_loss.1} parent=1 // pred_check
      _
    $region11: #{rgnn_loss.1} parent=1 // pred_check_branch
      %14 = sbr.rel (0) target = $region13
    $region12: #{rgnn_loss.1} parent=1 // pred_region
      _
    $region13: #{rgnn_loss.1} parent=1 // pred_fallthru
      _
    %v15 = vld [vmem:[%s0] sm:$0xff]
    %s16 = scalar_lea.vmem %s0, 8
    %v17 = vld [vmem:[%s16] sm:$0xff]
    %v18 = vld [vmem:[%s2] sm:$0xff]
    %v19 = vld [vmem:[%s2 + $0x8] sm:$0xff]
    %v20 = vld [vmem:[%s2 + $0x10] sm:$0xff]
    %v21 = vld [vmem:[%s2 + $0x18] sm:$0xff]
    %v22 = vld [vmem:[%s2 + $0x20] sm:$0xff]
    %v23 = vld [vmem:[%s2 + $0x28] sm:$0xff]
    %v24 = vld [vmem:[%s2 + $0x30] sm:$0xff]
    %v25 = vld [vmem:[%s2 + $0x38] sm:$0xff]
    %v26 = vld [vmem:[%s2 + $0x40] sm:$0xff]
    %v27 = vld [vmem:[%s2 + $0x48] sm:$0xff]
    %v28 = vld [vmem:[%s2 + $0x50] sm:$0xff]
    %v29 = vld [vmem:[%s2 + $0x58] sm:$0xff]
    %v30 = vld [vmem:[%s2 + $0x60] sm:$0xff]
    %v31 = vld [vmem:[%s2 + $0x68] sm:$0xff]
    %v32 = vld [vmem:[%s2 + $0x70] sm:$0xff]
    %v33 = vld [vmem:[%s2 + $0x78] sm:$0xff]
    %v34 = vld [vmem:[%s2 + $0x80] sm:$0xff]
    %v35 = vld [vmem:[%s2 + $0x88] sm:$0xff]
    %v36 = vld [vmem:[%s2 + $0x90] sm:$0xff]
    %v37 = vld [vmem:[%s2 + $0x98] sm:$0xff]
    %v38 = vld [vmem:[%s2 + $0xa0] sm:$0xff]
    %v39 = vld [vmem:[%s2 + $0xa8] sm:$0xff]
    %v40 = vld [vmem:[%s2 + $0xb0] sm:$0xff]
    %v41 = vld [vmem:[%s2 + $0xb8] sm:$0xff]
    %v42 = vld [vmem:[%s2 + $0xc0] sm:$0xff]
    %v43 = vld [vmem:[%s2 + $0xc8] sm:$0xff]
    %v44 = vld [vmem:[%s2 + $0xd0] sm:$0xff]
    %v45 = vld [vmem:[%s2 + $0xd8] sm:$0xff]
    %v46 = vld [vmem:[%s2 + $0xe0] sm:$0xff]
    %v47 = vld [vmem:[%s2 + $0xe8] sm:$0xff]
    %v48 = vld [vmem:[%s2 + $0xf0] sm:$0xff]
    %v49 = vld [vmem:[%s2 + $0xf8] sm:$0xff]
    %v50 = vld [vmem:[%s2 + $0x100] sm:$0xff]
    %v51 = vld [vmem:[%s2 + $0x108] sm:$0xff]
    %v52 = vld [vmem:[%s2 + $0x110] sm:$0xff]
    %v53 = vld [vmem:[%s2 + $0x118] sm:$0xff]
    %v54 = vld [vmem:[%s2 + $0x120] sm:$0xff]
    %v55 = vld [vmem:[%s2 + $0x128] sm:$0xff]
    %v56 = vld [vmem:[%s2 + $0x130] sm:$0xff]
    %v57 = vld [vmem:[%s2 + $0x138] sm:$0xff]
    %v58 = vld [vmem:[%s2 + $0x140] sm:$0xff]
    %v59 = vld [vmem:[%s2 + $0x148] sm:$0xff]
    %v60 = vld [vmem:[%s2 + $0x150] sm:$0xff]
    %v61 = vld [vmem:[%s2 + $0x158] sm:$0xff]
    %v62 = vld [vmem:[%s2 + $0x160] sm:$0xff]
    %v63 = vld [vmem:[%s2 + $0x168] sm:$0xff]
    %v64 = vld [vmem:[%s2 + $0x170] sm:$0xff]
    %v65 = vld [vmem:[%s2 + $0x178] sm:$0xff]
    %v66 = vld [vmem:[%s2 + $0x180] sm:$0xff]
    %v67 = vld [vmem:[%s2 + $0x188] sm:$0xff]
    %v68 = vld [vmem:[%s2 + $0x190] sm:$0xff]
    %v69 = vld [vmem:[%s2 + $0x198] sm:$0xff]
    %v70 = vld [vmem:[%s2 + $0x1a0] sm:$0xff]
    %v71 = vld [vmem:[%s2 + $0x1a8] sm:$0xff]
    %v72 = vld [vmem:[%s2 + $0x1b0] sm:$0xff]
    %v73 = vld [vmem:[%s2 + $0x1b8] sm:$0xff]
    %v74 = vld [vmem:[%s2 + $0x1c0] sm:$0xff]
    %v75 = vld [vmem:[%s2 + $0x1c8] sm:$0xff]
    %v76 = vld [vmem:[%s2 + $0x1d0] sm:$0xff]
    %v77 = vld [vmem:[%s2 + $0x1d8] sm:$0xff]
    %v78 = vld [vmem:[%s2 + $0x1e0] sm:$0xff]
    %v79 = vld [vmem:[%s2 + $0x1e8] sm:$0xff]
    %v80 = vld [vmem:[%s2 + $0x1f0] sm:$0xff]
    %v81 = vld [vmem:[%s2 + $0x1f8] sm:$0xff]
    %v82 = vld [vmem:[%s2 + $0x200] sm:$0xff]
    %v83 = vld [vmem:[%s2 + $0x208] sm:$0xff]
    %v84 = vld [vmem:[%s2 + $0x210] sm:$0xff]
    %v85 = vld [vmem:[%s2 + $0x218] sm:$0xff]
    %v86 = vld [vmem:[%s2 + $0x220] sm:$0xff]
    %v87 = vld [vmem:[%s2 + $0x228] sm:$0xff]
    %v88 = vld [vmem:[%s2 + $0x230] sm:$0xff]
    %v89 = vld [vmem:[%s2 + $0x238] sm:$0xff]
    %v90 = vld [vmem:[%s2 + $0x240] sm:$0xff]
    %v91 = vld [vmem:[%s2 + $0x248] sm:$0xff]
    %v92 = vld [vmem:[%s2 + $0x250] sm:$0xff]
    %v93 = vld [vmem:[%s2 + $0x258] sm:$0xff]
    %v94 = vld [vmem:[%s2 + $0x260] sm:$0xff]
    %v95 = vld [vmem:[%s2 + $0x268] sm:$0xff]
    %v96 = vld [vmem:[%s2 + $0x270] sm:$0xff]
    %v97 = vld [vmem:[%s2 + $0x278] sm:$0xff]
    %v98 = vld [vmem:[%s1] ss:$8 sm:$0xf]
    %v100 = vlaneseq
    %v101 = vshrl.u32 %v100, 7
    %v102 = vsub.s32 0, %v101
    %v103 = vrot.slane %v98, %v102
    %v104 = vlaneseq
    %v105 = vshrl.u32 %v104, 7
    %v106 = vsub.s32 1, %v105
    %v107 = vrot.slane %v98, %v106
    %v108 = vlaneseq
    %v109 = vshrl.u32 %v108, 7
    %v110 = vsub.s32 2, %v109
    %v111 = vrot.slane %v98, %v110
    %v112 = vlaneseq
    %v113 = vshrl.u32 %v112, 7
    %v114 = vsub.s32 3, %v113
    %v115 = vrot.slane %v98, %v114
    %s120 = scalar_lea.vmem %s1, 1
    %v121 = vld [vmem:[%s120] ss:$8 sm:$0xf]
    %v123 = vlaneseq
    %v124 = vshrl.u32 %v123, 7
    %v125 = vsub.s32 0, %v124
    %v126 = vrot.slane %v121, %v125
    %v127 = vlaneseq
    %v128 = vshrl.u32 %v127, 7
    %v129 = vsub.s32 1, %v128
    %v130 = vrot.slane %v121, %v129
    %v131 = vlaneseq
    %v132 = vshrl.u32 %v131, 7
    %v133 = vsub.s32 2, %v132
    %v134 = vrot.slane %v121, %v133
    %v135 = vlaneseq
    %v136 = vshrl.u32 %v135, 7
    %v137 = vsub.s32 3, %v136
    %v138 = vrot.slane %v121, %v137
    %s143 = scalar_lea.vmem %s1, 2
    %v144 = vld [vmem:[%s143] ss:$8 sm:$0xf]
    %v146 = vlaneseq
    %v147 = vshrl.u32 %v146, 7
    %v148 = vsub.s32 0, %v147
    %v149 = vrot.slane %v144, %v148
    %v150 = vlaneseq
    %v151 = vshrl.u32 %v150, 7
    %v152 = vsub.s32 1, %v151
    %v153 = vrot.slane %v144, %v152
    %v154 = vlaneseq
    %v155 = vshrl.u32 %v154, 7
    %v156 = vsub.s32 2, %v155
    %v157 = vrot.slane %v144, %v156
    %v158 = vlaneseq
    %v159 = vshrl.u32 %v158, 7
    %v160 = vsub.s32 3, %v159
    %v161 = vrot.slane %v144, %v160
    %v166 = vld [vmem:[%s1 + $0x5] ss:$0 sm:$0xff]
    %v167 = vld [vmem:[%s1 + $0x3] ss:$0 sm:$0xff]
    %v168 = vlaneseq
    %v169 = vshrl.u32 %v168, 7
    %v170 = vsub.s32 0, %v169
    %v171 = vrot.slane %v15, %v170
    %173 = vbcast.lane.b32.xlu0 %v171, 256
    %v174 = vpop.permute.xlu0 %173
    %v175 = vlaneseq
    %v176 = vshrl.u32 %v175, 7
    %v177 = vsub.s32 1, %v176
    %v178 = vrot.slane %v15, %v177
    %180 = vbcast.lane.b32.xlu0 %v178, 256
    %v181 = vpop.permute.xlu0 %180
    %v182 = vlaneseq
    %v183 = vshrl.u32 %v182, 7
    %v184 = vsub.s32 2, %v183
    %v185 = vrot.slane %v15, %v184
    %187 = vbcast.lane.b32.xlu0 %v185, 256
    %v188 = vpop.permute.xlu0 %187
    %v189 = vlaneseq
    %v190 = vshrl.u32 %v189, 7
    %v191 = vsub.s32 3, %v190
    %v192 = vrot.slane %v15, %v191
    %194 = vbcast.lane.b32.xlu0 %v192, 256
    %v195 = vpop.permute.xlu0 %194
    %v196 = vlaneseq
    %v197 = vshrl.u32 %v196, 7
    %v198 = vsub.s32 4, %v197
    %v199 = vrot.slane %v15, %v198
    %201 = vbcast.lane.b32.xlu0 %v199, 256
    %v202 = vpop.permute.xlu0 %201
    %v203 = vlaneseq
    %v204 = vshrl.u32 %v203, 7
    %v205 = vsub.s32 5, %v204
    %v206 = vrot.slane %v15, %v205
    %208 = vbcast.lane.b32.xlu0 %v206, 256
    %v209 = vpop.permute.xlu0 %208
    %v210 = vlaneseq
    %v211 = vshrl.u32 %v210, 7
    %v212 = vsub.s32 6, %v211
    %v213 = vrot.slane %v15, %v212
    %215 = vbcast.lane.b32.xlu0 %v213, 256
    %v216 = vpop.permute.xlu0 %215
    %v217 = vlaneseq
    %v218 = vshrl.u32 %v217, 7
    %v219 = vsub.s32 7, %v218
    %v220 = vrot.slane %v15, %v219
    %222 = vbcast.lane.b32.xlu0 %v220, 256
    %v223 = vpop.permute.xlu0 %222
    %v224 = vmul.f32 %v174, %v167
    %v225 = vmul.f32 %v181, %v167
    %v226 = vmul.f32 %v188, %v167
    %v227 = vmul.f32 %v195, %v167
    %v228 = vmul.f32 %v202, %v167
    %v229 = vmul.f32 %v209, %v167
    %v230 = vmul.f32 %v216, %v167
    %v231 = vmul.f32 %v223, %v167
    %v232 = vadd.f32 %v224, 0.0
    %v233 = vadd.f32 %v225, 0.0
    %v234 = vadd.f32 %v226, 0.0
    %v235 = vadd.f32 %v227, 0.0
    %v236 = vadd.f32 %v228, 0.0
    %v237 = vadd.f32 %v229, 0.0
    %v238 = vadd.f32 %v230, 0.0
    %v239 = vadd.f32 %v231, 0.0
    %v240 = vld [vmem:[%s1 + $0x4] ss:$0 sm:$0xff]
    %v241 = vlaneseq
    %v242 = vshrl.u32 %v241, 7
    %v243 = vsub.s32 0, %v242
    %v244 = vrot.slane %v17, %v243
    %246 = vbcast.lane.b32.xlu0 %v244, 256
    %v247 = vpop.permute.xlu0 %246
    %v248 = vlaneseq
    %v249 = vshrl.u32 %v248, 7
    %v250 = vsub.s32 1, %v249
    %v251 = vrot.slane %v17, %v250
    %253 = vbcast.lane.b32.xlu0 %v251, 256
    %v254 = vpop.permute.xlu0 %253
    %v255 = vlaneseq
    %v256 = vshrl.u32 %v255, 7
    %v257 = vsub.s32 2, %v256
    %v258 = vrot.slane %v17, %v257
    %260 = vbcast.lane.b32.xlu0 %v258, 256
    %v261 = vpop.permute.xlu0 %260
    %v262 = vlaneseq
    %v263 = vshrl.u32 %v262, 7
    %v264 = vsub.s32 3, %v263
    %v265 = vrot.slane %v17, %v264
    %267 = vbcast.lane.b32.xlu0 %v265, 256
    %v268 = vpop.permute.xlu0 %267
    %v269 = vlaneseq
    %v270 = vshrl.u32 %v269, 7
    %v271 = vsub.s32 4, %v270
    %v272 = vrot.slane %v17, %v271
    %274 = vbcast.lane.b32.xlu0 %v272, 256
    %v275 = vpop.permute.xlu0 %274
    %v276 = vlaneseq
    %v277 = vshrl.u32 %v276, 7
    %v278 = vsub.s32 5, %v277
    %v279 = vrot.slane %v17, %v278
    %281 = vbcast.lane.b32.xlu0 %v279, 256
    %v282 = vpop.permute.xlu0 %281
    %v283 = vlaneseq
    %v284 = vshrl.u32 %v283, 7
    %v285 = vsub.s32 6, %v284
    %v286 = vrot.slane %v17, %v285
    %288 = vbcast.lane.b32.xlu0 %v286, 256
    %v289 = vpop.permute.xlu0 %288
    %v290 = vlaneseq
    %v291 = vshrl.u32 %v290, 7
    %v292 = vsub.s32 7, %v291
    %v293 = vrot.slane %v17, %v292
    %295 = vbcast.lane.b32.xlu0 %v293, 256
    %v296 = vpop.permute.xlu0 %295
    %v297 = vmul.f32 %v247, %v240
    %v298 = vmul.f32 %v254, %v240
    %v299 = vmul.f32 %v261, %v240
    %v300 = vmul.f32 %v268, %v240
    %v301 = vmul.f32 %v275, %v240
    %v302 = vmul.f32 %v282, %v240
    %v303 = vmul.f32 %v289, %v240
    %v304 = vmul.f32 %v296, %v240
    %v305 = vadd.f32 %v232, %v297
    %v306 = vadd.f32 %v233, %v298
    %v307 = vadd.f32 %v234, %v299
    %v308 = vadd.f32 %v235, %v300
    %v309 = vadd.f32 %v236, %v301
    %v310 = vadd.f32 %v237, %v302
    %v311 = vadd.f32 %v238, %v303
    %v312 = vadd.f32 %v239, %v304
    %v313 = vlaneseq
    %v314 = vshrl.u32 %v313, 7
    %vm315 = vcmp.eq.s32.totalorder %v314, 7
    %v316 = vlaneseq
    %v317 = vand.u32 %v316, 127
    %vm318 = vcmp.eq.s32.totalorder %v314, %v317
    %v319 = vsel %vm318, 1, 0
    %v320 = vcvt.s32.f32 %v319
    %vm321 = vcmp.eq.s32.totalorder %v314, 0
    %vm322 = vmor %vm321, %vm315
    %v323 = vsel %vm322, -inf, 0.0
    %v324 = vmul.f32 %v320, %v171
    %vm325 = vcmask 64512
    %v326 = vsel %vm325, %v324, 0.0
    %327 = vadd.xlane.f32.xlu0 %v326
    %v328 = vpop.xlane.xlu0 %327
    %v329 = vmul.f32 %v320, %v244
    %v330 = vsel %vm325, %v329, 0.0
    %331 = vadd.xlane.f32.xlu0 %v330
    %v332 = vpop.xlane.xlu0 %331
    %v333 = vmul.f32 %v328, %v103
    %v334 = vmul.f32 %v328, %v107
    %v335 = vmul.f32 %v328, %v111
    %v336 = vmul.f32 %v328, %v115
    %v337 = vadd.f32 %v149, %v333
    %v338 = vadd.f32 %v153, %v334
    %v339 = vadd.f32 %v157, %v335
    %v340 = vadd.f32 %v161, %v336
    %v341 = vmul.f32 %v332, %v126
    %v342 = vmul.f32 %v332, %v130
    %v343 = vmul.f32 %v332, %v134
    %v344 = vmul.f32 %v332, %v138
    %v345 = vadd.f32 %v337, %v341
    %v346 = vadd.f32 %v338, %v342
    %v347 = vadd.f32 %v339, %v343
    %v348 = vadd.f32 %v340, %v344
    %v349 = vmul.f32 %v345, 0.5
    %v350 = vtanh.pop %v349
    %v351 = vadd.f32 %v350, 1.0
    %v352 = vmul.f32 %v351, 0.5
    %v353 = vmul.f32 %v346, 0.5
    %v354 = vtanh.pop %v353
    %v355 = vadd.f32 %v354, 1.0
    %v356 = vmul.f32 %v355, 0.5
    %v357 = vtanh.pop %v347
    %v358 = vmul.f32 %v348, 0.5
    %v359 = vtanh.pop %v358
    %v360 = vadd.f32 %v359, 1.0
    %v361 = vmul.f32 %v360, 0.5
    %v362 = vmul.f32 %v356, 0.0
    %v363 = vmul.f32 %v352, %v357
    %v364 = vadd.f32 %v362, %v363
    %v365 = vtanh.pop %v364
    %v366 = vmul.f32 %v361, %v365
    %367 = vmatprep.subr.mxu0 %v19
    %368 = vmatpush1.msra.mxu0 %v18
    %369 = vmatprep.subr.mxu0 %v24
    %370 = vmatpush1.msra.mxu0 %v23
    %371 = vmatprep.subr.mxu0 %v29
    %372 = vmatpush1.msra.mxu0 %v28
    %373 = vmatprep.subr.mxu0 %v34
    %374 = vmatpush1.msra.mxu0 %v33
    %375 = vmatprep.subr.mxu0 %v39
    %376 = vmatpush1.msra.mxu0 %v38
    %377 = vmatprep.subr.mxu0 %v44
    %378 = vmatpush1.msra.mxu0 %v43
    %379 = vmatprep.subr.mxu0 %v49
    %380 = vmatpush1.msra.mxu0 %v48
    %381 = vmatprep.subr.mxu0 %v54
    %382 = vmatpush1.msra.mxu0 %v53
    %383 = vmatprep.subr.mxu0 %v59
    %384 = vmatpush1.msra.mxu0 %v58
    %385 = vmatprep.subr.mxu0 %v64
    %386 = vmatpush1.msra.mxu0 %v63
    %387 = vmatprep.subr.mxu0 %v69
    %388 = vmatpush1.msra.mxu0 %v68
    %389 = vmatprep.subr.mxu0 %v74
    %390 = vmatpush1.msra.mxu0 %v73
    %391 = vmatprep.subr.mxu0 %v79
    %392 = vmatpush1.msra.mxu0 %v78
    %393 = vmatprep.subr.mxu0 %v84
    %394 = vmatpush1.msra.mxu0 %v83
    %395 = vmatprep.subr.mxu0 %v89
    %396 = vmatpush1.msra.mxu0 %v88
    %397 = vmatprep.subr.mxu0 %v94
    %398 = vmatpush1.msra.mxu0 %v93
    %399 = vmatprep.subr.mxu0 0.0
    %400 = vmatpush1.msra.mxu0 0.0
    %401 = vmatprep.subr.mxu0 0.0
    %402 = vmatpush1.msra.mxu0 0.0
    %403 = vmatprep.subr.mxu0 0.0
    %404 = vmatpush1.msra.mxu0 0.0
    %405 = vmatprep.subr.mxu0 0.0
    %406 = vmatpush1.msra.mxu0 0.0
    %407 = vmatprep.subr.mxu0 0.0
    %408 = vmatpush1.msra.mxu0 0.0
    %409 = vmatprep.subr.mxu0 0.0
    %410 = vmatpush1.msra.mxu0 0.0
    %411 = vmatprep.subr.mxu0 0.0
    %412 = vmatpush1.msra.mxu0 0.0
    %413 = vmatprep.subr.mxu0 0.0
    %414 = vmatpush1.msra.mxu0 0.0
    %415 = vmatprep.subr.mxu0 0.0
    %416 = vmatpush1.msra.mxu0 0.0
    %417 = vmatprep.subr.mxu0 0.0
    %418 = vmatpush1.msra.mxu0 0.0
    %419 = vmatprep.subr.mxu0 0.0
    %420 = vmatpush1.msra.mxu0 0.0
    %421 = vmatprep.subr.mxu0 0.0
    %422 = vmatpush1.msra.mxu0 0.0
    %423 = vmatprep.subr.mxu0 0.0
    %424 = vmatpush1.msra.mxu0 0.0
    %425 = vmatprep.subr.mxu0 0.0
    %426 = vmatpush1.msra.mxu0 0.0
    %427 = vmatprep.subr.mxu0 0.0
    %428 = vmatpush1.msra.mxu0 0.0
    %429 = vmatprep.subr.mxu0 0.0
    %430 = vmatpush1.msra.mxu0 0.0
    %431 = vmatprep.mubr.f32.mxu0 0.0
    %432 = vmatmul.mubr.f32.gmra.mrb[0].mxu0 %v366
    %v433 = vpop.f32.mrb[0].mxu0
    %v434 = vadd.f32 0.0, %v433
    %v435 = vpop.f32.mrb[0].mxu0
    %v436 = vadd.f32 0.0, %v435
    %437 = vdwg.mxu0
    %438 = vmatprep.subr.mxu0 %v21
    %439 = vmatpush1.msra.mxu0 %v20
    %440 = vmatprep.subr.mxu0 %v26
    %441 = vmatpush1.msra.mxu0 %v25
    %442 = vmatprep.subr.mxu0 %v31
    %443 = vmatpush1.msra.mxu0 %v30
    %444 = vmatprep.subr.mxu0 %v36
    %445 = vmatpush1.msra.mxu0 %v35
    %446 = vmatprep.subr.mxu0 %v41
    %447 = vmatpush1.msra.mxu0 %v40
    %448 = vmatprep.subr.mxu0 %v46
    %449 = vmatpush1.msra.mxu0 %v45
    %450 = vmatprep.subr.mxu0 %v51
    %451 = vmatpush1.msra.mxu0 %v50
    %452 = vmatprep.subr.mxu0 %v56
    %453 = vmatpush1.msra.mxu0 %v55
    %454 = vmatprep.subr.mxu0 %v61
    %455 = vmatpush1.msra.mxu0 %v60
    %456 = vmatprep.subr.mxu0 %v66
    %457 = vmatpush1.msra.mxu0 %v65
    %458 = vmatprep.subr.mxu0 %v71
    %459 = vmatpush1.msra.mxu0 %v70
    %460 = vmatprep.subr.mxu0 %v76
    %461 = vmatpush1.msra.mxu0 %v75
    %462 = vmatprep.subr.mxu0 %v81
    %463 = vmatpush1.msra.mxu0 %v80
    %464 = vmatprep.subr.mxu0 %v86
    %465 = vmatpush1.msra.mxu0 %v85
    %466 = vmatprep.subr.mxu0 %v91
    %467 = vmatpush1.msra.mxu0 %v90
    %468 = vmatprep.subr.mxu0 %v96
    %469 = vmatpush1.msra.mxu0 %v95
    %470 = vmatprep.subr.mxu0 0.0
    %471 = vmatpush1.msra.mxu0 0.0
    %472 = vmatprep.subr.mxu0 0.0
    %473 = vmatpush1.msra.mxu0 0.0
    %474 = vmatprep.subr.mxu0 0.0
    %475 = vmatpush1.msra.mxu0 0.0
    %476 = vmatprep.subr.mxu0 0.0
    %477 = vmatpush1.msra.mxu0 0.0
    %478 = vmatprep.subr.mxu0 0.0
    %479 = vmatpush1.msra.mxu0 0.0
    %480 = vmatprep.subr.mxu0 0.0
    %481 = vmatpush1.msra.mxu0 0.0
    %482 = vmatprep.subr.mxu0 0.0
    %483 = vmatpush1.msra.mxu0 0.0
    %484 = vmatprep.subr.mxu0 0.0
    %485 = vmatpush1.msra.mxu0 0.0
    %486 = vmatprep.subr.mxu0 0.0
    %487 = vmatpush1.msra.mxu0 0.0
    %488 = vmatprep.subr.mxu0 0.0
    %489 = vmatpush1.msra.mxu0 0.0
    %490 = vmatprep.subr.mxu0 0.0
    %491 = vmatpush1.msra.mxu0 0.0
    %492 = vmatprep.subr.mxu0 0.0
    %493 = vmatpush1.msra.mxu0 0.0
    %494 = vmatprep.subr.mxu0 0.0
    %495 = vmatpush1.msra.mxu0 0.0
    %496 = vmatprep.subr.mxu0 0.0
    %497 = vmatpush1.msra.mxu0 0.0
    %498 = vmatprep.subr.mxu0 0.0
    %499 = vmatpush1.msra.mxu0 0.0
    %500 = vmatprep.subr.mxu0 0.0
    %501 = vmatpush1.msra.mxu0 0.0
    %502 = vmatprep.mubr.f32.mxu0 0.0
    %503 = vmatmul.mubr.f32.gmra.mrb[0].mxu0 %v366
    %v504 = vpop.f32.mrb[0].mxu0
    %v505 = vadd.f32 0.0, %v504
    %v506 = vpop.f32.mrb[0].mxu0
    %v507 = vadd.f32 0.0, %v506
    %508 = vdwg.mxu0
    %509 = vmatprep.subr.mxu0 0.0
    %510 = vmatpush1.msra.mxu0 %v22
    %511 = vmatprep.subr.mxu0 0.0
    %512 = vmatpush1.msra.mxu0 %v27
    %513 = vmatprep.subr.mxu0 0.0
    %514 = vmatpush1.msra.mxu0 %v32
    %515 = vmatprep.subr.mxu0 0.0
    %516 = vmatpush1.msra.mxu0 %v37
    %517 = vmatprep.subr.mxu0 0.0
    %518 = vmatpush1.msra.mxu0 %v42
    %519 = vmatprep.subr.mxu0 0.0
    %520 = vmatpush1.msra.mxu0 %v47
    %521 = vmatprep.subr.mxu0 0.0
    %522 = vmatpush1.msra.mxu0 %v52
    %523 = vmatprep.subr.mxu0 0.0
    %524 = vmatpush1.msra.mxu0 %v57
    %525 = vmatprep.subr.mxu0 0.0
    %526 = vmatpush1.msra.mxu0 %v62
    %527 = vmatprep.subr.mxu0 0.0
    %528 = vmatpush1.msra.mxu0 %v67
    %529 = vmatprep.subr.mxu0 0.0
    %530 = vmatpush1.msra.mxu0 %v72
    %531 = vmatprep.subr.mxu0 0.0
    %532 = vmatpush1.msra.mxu0 %v77
    %533 = vmatprep.subr.mxu0 0.0
    %534 = vmatpush1.msra.mxu0 %v82
    %535 = vmatprep.subr.mxu0 0.0
    %536 = vmatpush1.msra.mxu0 %v87
    %537 = vmatprep.subr.mxu0 0.0
    %538 = vmatpush1.msra.mxu0 %v92
    %539 = vmatprep.subr.mxu0 0.0
    %540 = vmatpush1.msra.mxu0 %v97
    %541 = vmatprep.subr.mxu0 0.0
    %542 = vmatpush1.msra.mxu0 0.0
    %543 = vmatprep.subr.mxu0 0.0
    %544 = vmatpush1.msra.mxu0 0.0
    %545 = vmatprep.subr.mxu0 0.0
    %546 = vmatpush1.msra.mxu0 0.0
    %547 = vmatprep.subr.mxu0 0.0
    %548 = vmatpush1.msra.mxu0 0.0
    %549 = vmatprep.subr.mxu0 0.0
    %550 = vmatpush1.msra.mxu0 0.0
    %551 = vmatprep.subr.mxu0 0.0
    %552 = vmatpush1.msra.mxu0 0.0
    %553 = vmatprep.subr.mxu0 0.0
    %554 = vmatpush1.msra.mxu0 0.0
    %555 = vmatprep.subr.mxu0 0.0
    %556 = vmatpush1.msra.mxu0 0.0
    %557 = vmatprep.subr.mxu0 0.0
    %558 = vmatpush1.msra.mxu0 0.0
    %559 = vmatprep.subr.mxu0 0.0
    %560 = vmatpush1.msra.mxu0 0.0
    %561 = vmatprep.subr.mxu0 0.0
    %562 = vmatpush1.msra.mxu0 0.0
    %563 = vmatprep.subr.mxu0 0.0
    %564 = vmatpush1.msra.mxu0 0.0
    %565 = vmatprep.subr.mxu0 0.0
    %566 = vmatpush1.msra.mxu0 0.0
    %567 = vmatprep.subr.mxu0 0.0
    %568 = vmatpush1.msra.mxu0 0.0
    %569 = vmatprep.subr.mxu0 0.0
    %570 = vmatpush1.msra.mxu0 0.0
    %571 = vmatprep.subr.mxu0 0.0
    %572 = vmatpush1.msra.mxu0 0.0
    %573 = vmatprep.mubr.f32.mxu0 0.0
    %574 = vmatmul.mubr.f32.gmra.mrb[0].mxu0 %v366
    %v575 = vpop.f32.mrb[0].mxu0
    %v576 = vadd.f32 0.0, %v575
    %v577 = vpop.f32.mrb[0].mxu0
    %578 = vdwg.mxu0
    %v579 = vadd.f32 %v305, %v576
    %v580 = vadd.f32 %v306, %v576
    %v581 = vadd.f32 %v307, %v576
    %v582 = vadd.f32 %v308, %v576
    %v583 = vadd.f32 %v309, %v576
    %v584 = vadd.f32 %v310, %v576
    %v585 = vadd.f32 %v311, %v576
    %v586 = vadd.f32 %v312, %v576
    %v587 = vtanh.pop %v579
    %v588 = vtanh.pop %v580
    %v589 = vtanh.pop %v581
    %v590 = vtanh.pop %v582
    %v591 = vtanh.pop %v583
    %v592 = vtanh.pop %v584
    %v593 = vtanh.pop %v585
    %v594 = vtanh.pop %v586
    %v595 = vmul.f32 %v587, %v166
    %v596 = vmul.f32 %v588, %v166
    %v597 = vmul.f32 %v589, %v166
    %v598 = vmul.f32 %v590, %v166
    %v599 = vmul.f32 %v591, %v166
    %v600 = vmul.f32 %v592, %v166
    %v601 = vmul.f32 %v593, %v166
    %v602 = vmul.f32 %v594, %v166
    %603 = vadd.xlane.f32.xlu0 %v595
    %v604 = vpop.xlane.xlu0 %603
    %605 = vadd.xlane.f32.xlu0 %v596
    %v606 = vpop.xlane.xlu0 %605
    %607 = vadd.xlane.f32.xlu0 %v597
    %v608 = vpop.xlane.xlu0 %607
    %609 = vadd.xlane.f32.xlu0 %v598
    %v610 = vpop.xlane.xlu0 %609
    %611 = vadd.xlane.f32.xlu0 %v599
    %v612 = vpop.xlane.xlu0 %611
    %613 = vadd.xlane.f32.xlu0 %v600
    %v614 = vpop.xlane.xlu0 %613
    %615 = vadd.xlane.f32.xlu0 %v601
    %v616 = vpop.xlane.xlu0 %615
    %617 = vadd.xlane.f32.xlu0 %v602
    %v618 = vpop.xlane.xlu0 %617
    %v620 = vlaneseq
    %v621 = vshrl.u32 %v620, 7
    %v622 = vsub.s32 0, %v621
    %v623 = vrot.slane %v323, %v622
    %v624 = vlaneseq
    %v625 = vshrl.u32 %v624, 7
    %v626 = vsub.s32 1, %v625
    %v627 = vrot.slane %v323, %v626
    %v628 = vlaneseq
    %v629 = vshrl.u32 %v628, 7
    %v630 = vsub.s32 2, %v629
    %v631 = vrot.slane %v323, %v630
    %v632 = vlaneseq
    %v633 = vshrl.u32 %v632, 7
    %v634 = vsub.s32 3, %v633
    %v635 = vrot.slane %v323, %v634
    %v636 = vlaneseq
    %v637 = vshrl.u32 %v636, 7
    %v638 = vsub.s32 4, %v637
    %v639 = vrot.slane %v323, %v638
    %v640 = vlaneseq
    %v641 = vshrl.u32 %v640, 7
    %v642 = vsub.s32 5, %v641
    %v643 = vrot.slane %v323, %v642
    %v644 = vlaneseq
    %v645 = vshrl.u32 %v644, 7
    %v646 = vsub.s32 6, %v645
    %v647 = vrot.slane %v323, %v646
    %v648 = vlaneseq
    %v649 = vshrl.u32 %v648, 7
    %v650 = vsub.s32 7, %v649
    %v651 = vrot.slane %v323, %v650
    %v660 = vadd.f32 %v604, %v623
    %v661 = vadd.f32 %v606, %v627
    %v662 = vadd.f32 %v608, %v631
    %v663 = vadd.f32 %v610, %v635
    %v664 = vadd.f32 %v612, %v639
    %v665 = vadd.f32 %v614, %v643
    %v666 = vadd.f32 %v616, %v647
    %v667 = vadd.f32 %v618, %v651
    %vm668 = vcmask 7168
    %v669 = vsel %vm668, %v660, -inf
    %v670 = vsel %vm668, %v661, -inf
    %v671 = vsel %vm668, %v662, -inf
    %v672 = vsel %vm668, %v663, -inf
    %v673 = vsel %vm668, %v664, -inf
    %v674 = vmax.f32 %v669, %v673
    %v675 = vsel %vm668, %v665, -inf
    %v676 = vmax.f32 %v670, %v675
    %v677 = vsel %vm668, %v666, -inf
    %v678 = vmax.f32 %v671, %v677
    %v679 = vsel %vm668, %v667, -inf
    %v680 = vmax.f32 %v672, %v679
    %v681 = vmax.f32 %v674, %v676
    %v682 = vmax.f32 %v678, %v680
    %v683 = vmax.f32 %v681, %v682
    %vm684 = vcmp.ge.f32.partialorder %v660, %v683
    %vm685 = vcmp.ge.f32.partialorder %v661, %v683
    %vm686 = vcmp.ge.f32.partialorder %v662, %v683
    %vm687 = vcmp.ge.f32.partialorder %v663, %v683
    %vm688 = vcmp.ge.f32.partialorder %v664, %v683
    %vm689 = vcmp.ge.f32.partialorder %v665, %v683
    %vm690 = vcmp.ge.f32.partialorder %v666, %v683
    %vm691 = vcmp.ge.f32.partialorder %v667, %v683
    %v692 = vlaneseq
    %v693 = vshrl.u32 %v692, 7
    %v694 = vsub.s32 0, %v693
    %v695 = vrot.slane %v314, %v694
    %v696 = vlaneseq
    %v697 = vshrl.u32 %v696, 7
    %v698 = vsub.s32 1, %v697
    %v699 = vrot.slane %v314, %v698
    %v700 = vlaneseq
    %v701 = vshrl.u32 %v700, 7
    %v702 = vsub.s32 2, %v701
    %v703 = vrot.slane %v314, %v702
    %v704 = vlaneseq
    %v705 = vshrl.u32 %v704, 7
    %v706 = vsub.s32 3, %v705
    %v707 = vrot.slane %v314, %v706
    %v708 = vlaneseq
    %v709 = vshrl.u32 %v708, 7
    %v710 = vsub.s32 4, %v709
    %v711 = vrot.slane %v314, %v710
    %v712 = vlaneseq
    %v713 = vshrl.u32 %v712, 7
    %v714 = vsub.s32 5, %v713
    %v715 = vrot.slane %v314, %v714
    %v716 = vlaneseq
    %v717 = vshrl.u32 %v716, 7
    %v718 = vsub.s32 6, %v717
    %v719 = vrot.slane %v314, %v718
    %v720 = vlaneseq
    %v721 = vshrl.u32 %v720, 7
    %v722 = vsub.s32 7, %v721
    %v723 = vrot.slane %v314, %v722
    %v724 = vsel %vm684, %v695, 8
    %v725 = vsel %vm685, %v699, 8
    %v726 = vsel %vm686, %v703, 8
    %v727 = vsel %vm687, %v707, 8
    %v728 = vsel %vm688, %v711, 8
    %v729 = vsel %vm689, %v715, 8
    %v730 = vsel %vm690, %v719, 8
    %v731 = vsel %vm691, %v723, 8
    %v732 = vsel %vm668, %v724, 2147483647
    %v733 = vsel %vm668, %v725, 2147483647
    %v734 = vsel %vm668, %v726, 2147483647
    %v735 = vsel %vm668, %v727, 2147483647
    %v736 = vsel %vm668, %v728, 2147483647
    %vm737 = vcmp.lt.s32.totalorder %v732, %v736
    %v738 = vsel %vm737, %v732, %v736
    %v739 = vsel %vm668, %v729, 2147483647
    %vm740 = vcmp.lt.s32.totalorder %v733, %v739
    %v741 = vsel %vm740, %v733, %v739
    %v742 = vsel %vm668, %v730, 2147483647
    %vm743 = vcmp.lt.s32.totalorder %v734, %v742
    %v744 = vsel %vm743, %v734, %v742
    %v745 = vsel %vm668, %v731, 2147483647
    %vm746 = vcmp.lt.s32.totalorder %v735, %v745
    %v747 = vsel %vm746, %v735, %v745
    %vm748 = vcmp.lt.s32.totalorder %v738, %v741
    %v749 = vsel %vm748, %v738, %v741
    %vm750 = vcmp.lt.s32.totalorder %v744, %v747
    %v751 = vsel %vm750, %v744, %v747
    %vm752 = vcmp.lt.s32.totalorder %v749, %v751
    %v753 = vsel %vm752, %v749, %v751
    %754 = vset.pattern.permute.xlu0 0
    %755 = vperm.xlu0 %754, %v753
    %v756 = vpop.permute.xlu0 %755
    %v757 = vlaneseq
    %v758 = vshrl.u32 %v757, 7
    %v759 = vsub.s32 %v317, %v758
    %v760 = vrot.slane %v756, %v759
    %vm761 = vcmask 1042434
    %v762 = vsel %vm761, %v760, %v760
    %vm763 = vcmask 1043459
    %v764 = vsel %vm763, %v760, %v762
    %vm765 = vcmask 1044484
    %v766 = vsel %vm765, %v760, %v764
    %vm767 = vcmask 1045509
    %v768 = vsel %vm767, %v760, %v766
    %vm769 = vcmask 1046534
    %v770 = vsel %vm769, %v760, %v768
    %vm771 = vcmask 1047559
    %v772 = vsel %vm771, %v760, %v770
    %vm773 = vcmp.eq.s32.totalorder %v314, %v772
    %v774 = vsel %vm773, 1, 0
    %v775 = vcvt.s32.f32 %v774
    %v776 = vmul.f32 %v775, %v15
    %v777 = vsel %vm325, %v776, 0.0
    %v778 = vrot.slane %v777, 4
    %v779 = vadd.f32 %v777, %v778
    %v780 = vrot.slane %v779, 2
    %v781 = vadd.f32 %v779, %v780
    %v782 = vrot.slane %v781, 1
    %v783 = vadd.f32 %v781, %v782
    %v784 = vmul.f32 %v775, %v17
    %v785 = vsel %vm325, %v784, 0.0
    %v786 = vrot.slane %v785, 4
    %v787 = vadd.f32 %v785, %v786
    %v788 = vrot.slane %v787, 2
    %v789 = vadd.f32 %v787, %v788
    %v790 = vrot.slane %v789, 1
    %v791 = vadd.f32 %v789, %v790
    %v792 = vsub.f32 %v783, %v15
    %v793 = vmul.f32 %v792, %v792
    %v794 = vadd.f32 %v793, 0.0
    %v795 = vsub.f32 %v791, %v17
    %v796 = vmul.f32 %v795, %v795
    %v797 = vadd.f32 %v794, %v796
    %v798 = vmax.f32 %v797, 0.0
    %v799 = vsel %vm773, -inf, %v323
    %v800 = vmul.f32 %v320, %v783
    %v801 = vsel %vm325, %v800, 0.0
    %802 = vadd.xlane.f32.xlu0 %v801
    %v803 = vpop.xlane.xlu0 %802
    %v804 = vmul.f32 %v320, %v791
    %v805 = vsel %vm325, %v804, 0.0
    %806 = vadd.xlane.f32.xlu0 %v805
    %v807 = vpop.xlane.xlu0 %806
    %v808 = vsel %vm315, 0.0, %v799
    %v809 = vmul.f32 %v803, %v103
    %v810 = vmul.f32 %v803, %v107
    %v811 = vmul.f32 %v803, %v111
    %v812 = vmul.f32 %v803, %v115
    %v813 = vadd.f32 %v149, %v809
    %v814 = vadd.f32 %v153, %v810
    %v815 = vadd.f32 %v157, %v811
    %v816 = vadd.f32 %v161, %v812
    %v817 = vmul.f32 %v807, %v126
    %v818 = vmul.f32 %v807, %v130
    %v819 = vmul.f32 %v807, %v134
    %v820 = vmul.f32 %v807, %v138
    %v821 = vadd.f32 %v813, %v817
    %v822 = vadd.f32 %v814, %v818
    %v823 = vadd.f32 %v815, %v819
    %v824 = vadd.f32 %v816, %v820
    %v825 = vadd.f32 %v821, %v434
    %v826 = vadd.f32 %v822, %v436
    %v827 = vadd.f32 %v823, %v505
    %v828 = vadd.f32 %v824, %v507
    %v829 = vmul.f32 %v825, 0.5
    %v830 = vtanh.pop %v829
    %v831 = vadd.f32 %v830, 1.0
    %v832 = vmul.f32 %v831, 0.5
    %v833 = vmul.f32 %v826, 0.5
    %v834 = vtanh.pop %v833
    %v835 = vadd.f32 %v834, 1.0
    %v836 = vmul.f32 %v835, 0.5
    %v837 = vtanh.pop %v827
    %v838 = vmul.f32 %v828, 0.5
    %v839 = vtanh.pop %v838
    %v840 = vadd.f32 %v839, 1.0
    %v841 = vmul.f32 %v840, 0.5
    %v842 = vmul.f32 %v836, %v364
    %v843 = vmul.f32 %v832, %v837
    %v844 = vadd.f32 %v842, %v843
    %v845 = vtanh.pop %v844
    %v846 = vmul.f32 %v841, %v845
    %847 = vmatprep.subr.mxu0 %v19
    %848 = vmatpush1.msra.mxu0 %v18
    %849 = vmatprep.subr.mxu0 %v24
    %850 = vmatpush1.msra.mxu0 %v23
    %851 = vmatprep.subr.mxu0 %v29
    %852 = vmatpush1.msra.mxu0 %v28
    %853 = vmatprep.subr.mxu0 %v34
    %854 = vmatpush1.msra.mxu0 %v33
    %855 = vmatprep.subr.mxu0 %v39
    %856 = vmatpush1.msra.mxu0 %v38
    %857 = vmatprep.subr.mxu0 %v44
    %858 = vmatpush1.msra.mxu0 %v43
    %859 = vmatprep.subr.mxu0 %v49
    %860 = vmatpush1.msra.mxu0 %v48
    %861 = vmatprep.subr.mxu0 %v54
    %862 = vmatpush1.msra.mxu0 %v53
    %863 = vmatprep.subr.mxu0 %v59
    %864 = vmatpush1.msra.mxu0 %v58
    %865 = vmatprep.subr.mxu0 %v64
    %866 = vmatpush1.msra.mxu0 %v63
    %867 = vmatprep.subr.mxu0 %v69
    %868 = vmatpush1.msra.mxu0 %v68
    %869 = vmatprep.subr.mxu0 %v74
    %870 = vmatpush1.msra.mxu0 %v73
    %871 = vmatprep.subr.mxu0 %v79
    %872 = vmatpush1.msra.mxu0 %v78
    %873 = vmatprep.subr.mxu0 %v84
    %874 = vmatpush1.msra.mxu0 %v83
    %875 = vmatprep.subr.mxu0 %v89
    %876 = vmatpush1.msra.mxu0 %v88
    %877 = vmatprep.subr.mxu0 %v94
    %878 = vmatpush1.msra.mxu0 %v93
    %879 = vmatprep.subr.mxu0 0.0
    %880 = vmatpush1.msra.mxu0 0.0
    %881 = vmatprep.subr.mxu0 0.0
    %882 = vmatpush1.msra.mxu0 0.0
    %883 = vmatprep.subr.mxu0 0.0
    %884 = vmatpush1.msra.mxu0 0.0
    %885 = vmatprep.subr.mxu0 0.0
    %886 = vmatpush1.msra.mxu0 0.0
    %887 = vmatprep.subr.mxu0 0.0
    %888 = vmatpush1.msra.mxu0 0.0
    %889 = vmatprep.subr.mxu0 0.0
    %890 = vmatpush1.msra.mxu0 0.0
    %891 = vmatprep.subr.mxu0 0.0
    %892 = vmatpush1.msra.mxu0 0.0
    %893 = vmatprep.subr.mxu0 0.0
    %894 = vmatpush1.msra.mxu0 0.0
    %895 = vmatprep.subr.mxu0 0.0
    %896 = vmatpush1.msra.mxu0 0.0
    %897 = vmatprep.subr.mxu0 0.0
    %898 = vmatpush1.msra.mxu0 0.0
    %899 = vmatprep.subr.mxu0 0.0
    %900 = vmatpush1.msra.mxu0 0.0
    %901 = vmatprep.subr.mxu0 0.0
    %902 = vmatpush1.msra.mxu0 0.0
    %903 = vmatprep.subr.mxu0 0.0
    %904 = vmatpush1.msra.mxu0 0.0
    %905 = vmatprep.subr.mxu0 0.0
    %906 = vmatpush1.msra.mxu0 0.0
    %907 = vmatprep.subr.mxu0 0.0
    %908 = vmatpush1.msra.mxu0 0.0
    %909 = vmatprep.subr.mxu0 0.0
    %910 = vmatpush1.msra.mxu0 0.0
    %911 = vmatprep.mubr.f32.mxu0 0.0
    %912 = vmatmul.mubr.f32.gmra.mrb[0].mxu0 %v846
    %v913 = vpop.f32.mrb[0].mxu0
    %v914 = vadd.f32 0.0, %v913
    %v915 = vpop.f32.mrb[0].mxu0
    %v916 = vadd.f32 0.0, %v915
    %917 = vdwg.mxu0
    %918 = vmatprep.subr.mxu0 %v21
    %919 = vmatpush1.msra.mxu0 %v20
    %920 = vmatprep.subr.mxu0 %v26
    %921 = vmatpush1.msra.mxu0 %v25
    %922 = vmatprep.subr.mxu0 %v31
    %923 = vmatpush1.msra.mxu0 %v30
    %924 = vmatprep.subr.mxu0 %v36
    %925 = vmatpush1.msra.mxu0 %v35
    %926 = vmatprep.subr.mxu0 %v41
    %927 = vmatpush1.msra.mxu0 %v40
    %928 = vmatprep.subr.mxu0 %v46
    %929 = vmatpush1.msra.mxu0 %v45
    %930 = vmatprep.subr.mxu0 %v51
    %931 = vmatpush1.msra.mxu0 %v50
    %932 = vmatprep.subr.mxu0 %v56
    %933 = vmatpush1.msra.mxu0 %v55
    %934 = vmatprep.subr.mxu0 %v61
    %935 = vmatpush1.msra.mxu0 %v60
    %936 = vmatprep.subr.mxu0 %v66
    %937 = vmatpush1.msra.mxu0 %v65
    %938 = vmatprep.subr.mxu0 %v71
    %939 = vmatpush1.msra.mxu0 %v70
    %940 = vmatprep.subr.mxu0 %v76
    %941 = vmatpush1.msra.mxu0 %v75
    %942 = vmatprep.subr.mxu0 %v81
    %943 = vmatpush1.msra.mxu0 %v80
    %944 = vmatprep.subr.mxu0 %v86
    %945 = vmatpush1.msra.mxu0 %v85
    %946 = vmatprep.subr.mxu0 %v91
    %947 = vmatpush1.msra.mxu0 %v90
    %948 = vmatprep.subr.mxu0 %v96
    %949 = vmatpush1.msra.mxu0 %v95
    %950 = vmatprep.subr.mxu0 0.0
    %951 = vmatpush1.msra.mxu0 0.0
    %952 = vmatprep.subr.mxu0 0.0
    %953 = vmatpush1.msra.mxu0 0.0
    %954 = vmatprep.subr.mxu0 0.0
    %955 = vmatpush1.msra.mxu0 0.0
    %956 = vmatprep.subr.mxu0 0.0
    %957 = vmatpush1.msra.mxu0 0.0
    %958 = vmatprep.subr.mxu0 0.0
    %959 = vmatpush1.msra.mxu0 0.0
    %960 = vmatprep.subr.mxu0 0.0
    %961 = vmatpush1.msra.mxu0 0.0
    %962 = vmatprep.subr.mxu0 0.0
    %963 = vmatpush1.msra.mxu0 0.0
    %964 = vmatprep.subr.mxu0 0.0
    %965 = vmatpush1.msra.mxu0 0.0
    %966 = vmatprep.subr.mxu0 0.0
    %967 = vmatpush1.msra.mxu0 0.0
    %968 = vmatprep.subr.mxu0 0.0
    %969 = vmatpush1.msra.mxu0 0.0
    %970 = vmatprep.subr.mxu0 0.0
    %971 = vmatpush1.msra.mxu0 0.0
    %972 = vmatprep.subr.mxu0 0.0
    %973 = vmatpush1.msra.mxu0 0.0
    %974 = vmatprep.subr.mxu0 0.0
    %975 = vmatpush1.msra.mxu0 0.0
    %976 = vmatprep.subr.mxu0 0.0
    %977 = vmatpush1.msra.mxu0 0.0
    %978 = vmatprep.subr.mxu0 0.0
    %979 = vmatpush1.msra.mxu0 0.0
    %980 = vmatprep.subr.mxu0 0.0
    %981 = vmatpush1.msra.mxu0 0.0
    %982 = vmatprep.mubr.f32.mxu0 0.0
    %983 = vmatmul.mubr.f32.gmra.mrb[0].mxu0 %v846
    %v984 = vpop.f32.mrb[0].mxu0
    %v985 = vadd.f32 0.0, %v984
    %v986 = vpop.f32.mrb[0].mxu0
    %v987 = vadd.f32 0.0, %v986
    %988 = vdwg.mxu0
    %989 = vmatprep.subr.mxu0 0.0
    %990 = vmatpush1.msra.mxu0 %v22
    %991 = vmatprep.subr.mxu0 0.0
    %992 = vmatpush1.msra.mxu0 %v27
    %993 = vmatprep.subr.mxu0 0.0
    %994 = vmatpush1.msra.mxu0 %v32
    %995 = vmatprep.subr.mxu0 0.0
    %996 = vmatpush1.msra.mxu0 %v37
    %997 = vmatprep.subr.mxu0 0.0
    %998 = vmatpush1.msra.mxu0 %v42
    %999 = vmatprep.subr.mxu0 0.0
    %1000 = vmatpush1.msra.mxu0 %v47
    %1001 = vmatprep.subr.mxu0 0.0
    %1002 = vmatpush1.msra.mxu0 %v52
    %1003 = vmatprep.subr.mxu0 0.0
    %1004 = vmatpush1.msra.mxu0 %v57
    %1005 = vmatprep.subr.mxu0 0.0
    %1006 = vmatpush1.msra.mxu0 %v62
    %1007 = vmatprep.subr.mxu0 0.0
    %1008 = vmatpush1.msra.mxu0 %v67
    %1009 = vmatprep.subr.mxu0 0.0
    %1010 = vmatpush1.msra.mxu0 %v72
    %1011 = vmatprep.subr.mxu0 0.0
    %1012 = vmatpush1.msra.mxu0 %v77
    %1013 = vmatprep.subr.mxu0 0.0
    %1014 = vmatpush1.msra.mxu0 %v82
    %1015 = vmatprep.subr.mxu0 0.0
    %1016 = vmatpush1.msra.mxu0 %v87
    %1017 = vmatprep.subr.mxu0 0.0
    %1018 = vmatpush1.msra.mxu0 %v92
    %1019 = vmatprep.subr.mxu0 0.0
    %1020 = vmatpush1.msra.mxu0 %v97
    %1021 = vmatprep.subr.mxu0 0.0
    %1022 = vmatpush1.msra.mxu0 0.0
    %1023 = vmatprep.subr.mxu0 0.0
    %1024 = vmatpush1.msra.mxu0 0.0
    %1025 = vmatprep.subr.mxu0 0.0
    %1026 = vmatpush1.msra.mxu0 0.0
    %1027 = vmatprep.subr.mxu0 0.0
    %1028 = vmatpush1.msra.mxu0 0.0
    %1029 = vmatprep.subr.mxu0 0.0
    %1030 = vmatpush1.msra.mxu0 0.0
    %1031 = vmatprep.subr.mxu0 0.0
    %1032 = vmatpush1.msra.mxu0 0.0
    %1033 = vmatprep.subr.mxu0 0.0
    %1034 = vmatpush1.msra.mxu0 0.0
    %1035 = vmatprep.subr.mxu0 0.0
    %1036 = vmatpush1.msra.mxu0 0.0
    %1037 = vmatprep.subr.mxu0 0.0
    %1038 = vmatpush1.msra.mxu0 0.0
    %1039 = vmatprep.subr.mxu0 0.0
    %1040 = vmatpush1.msra.mxu0 0.0
    %1041 = vmatprep.subr.mxu0 0.0
    %1042 = vmatpush1.msra.mxu0 0.0
    %1043 = vmatprep.subr.mxu0 0.0
    %1044 = vmatpush1.msra.mxu0 0.0
    %1045 = vmatprep.subr.mxu0 0.0
    %1046 = vmatpush1.msra.mxu0 0.0
    %1047 = vmatprep.subr.mxu0 0.0
    %1048 = vmatpush1.msra.mxu0 0.0
    %1049 = vmatprep.subr.mxu0 0.0
    %1050 = vmatpush1.msra.mxu0 0.0
    %1051 = vmatprep.subr.mxu0 0.0
    %1052 = vmatpush1.msra.mxu0 0.0
    %1053 = vmatprep.mubr.f32.mxu0 0.0
    %1054 = vmatmul.mubr.f32.gmra.mrb[0].mxu0 %v846
    %v1055 = vpop.f32.mrb[0].mxu0
    %v1056 = vadd.f32 0.0, %v1055
    %v1057 = vpop.f32.mrb[0].mxu0
    %1058 = vdwg.mxu0
    %v1059 = vadd.f32 %v305, %v1056
    %v1060 = vadd.f32 %v306, %v1056
    %v1061 = vadd.f32 %v307, %v1056
    %v1062 = vadd.f32 %v308, %v1056
    %v1063 = vadd.f32 %v309, %v1056
    %v1064 = vadd.f32 %v310, %v1056
    %v1065 = vadd.f32 %v311, %v1056
    %v1066 = vadd.f32 %v312, %v1056
    %v1067 = vtanh.pop %v1059
    %v1068 = vtanh.pop %v1060
    %v1069 = vtanh.pop %v1061
    %v1070 = vtanh.pop %v1062
    %v1071 = vtanh.pop %v1063
    %v1072 = vtanh.pop %v1064
    %v1073 = vtanh.pop %v1065
    %v1074 = vtanh.pop %v1066
    %v1075 = vmul.f32 %v1067, %v166
    %v1076 = vmul.f32 %v1068, %v166
    %v1077 = vmul.f32 %v1069, %v166
    %v1078 = vmul.f32 %v1070, %v166
    %v1079 = vmul.f32 %v1071, %v166
    %v1080 = vmul.f32 %v1072, %v166
    %v1081 = vmul.f32 %v1073, %v166
    %v1082 = vmul.f32 %v1074, %v166
    %1083 = vadd.xlane.f32.xlu0 %v1075
    %v1084 = vpop.xlane.xlu0 %1083
    %1085 = vadd.xlane.f32.xlu0 %v1076
    %v1086 = vpop.xlane.xlu0 %1085
    %1087 = vadd.xlane.f32.xlu0 %v1077
    %v1088 = vpop.xlane.xlu0 %1087
    %1089 = vadd.xlane.f32.xlu0 %v1078
    %v1090 = vpop.xlane.xlu0 %1089
    %1091 = vadd.xlane.f32.xlu0 %v1079
    %v1092 = vpop.xlane.xlu0 %1091
    %1093 = vadd.xlane.f32.xlu0 %v1080
    %v1094 = vpop.xlane.xlu0 %1093
    %1095 = vadd.xlane.f32.xlu0 %v1081
    %v1096 = vpop.xlane.xlu0 %1095
    %1097 = vadd.xlane.f32.xlu0 %v1082
    %v1098 = vpop.xlane.xlu0 %1097
    %v1100 = vlaneseq
    %v1101 = vshrl.u32 %v1100, 7
    %v1102 = vsub.s32 0, %v1101
    %v1103 = vrot.slane %v808, %v1102
    %1105 = vbcast.lane.b32.xlu0 %v1103, 256
    %v1106 = vpop.permute.xlu0 %1105
    %v1107 = vlaneseq
    %v1108 = vshrl.u32 %v1107, 7
    %v1109 = vsub.s32 1, %v1108
    %v1110 = vrot.slane %v808, %v1109
    %1112 = vbcast.lane.b32.xlu0 %v1110, 256
    %v1113 = vpop.permute.xlu0 %1112
    %v1114 = vlaneseq
    %v1115 = vshrl.u32 %v1114, 7
    %v1116 = vsub.s32 2, %v1115
    %v1117 = vrot.slane %v808, %v1116
    %1119 = vbcast.lane.b32.xlu0 %v1117, 256
    %v1120 = vpop.permute.xlu0 %1119
    %v1121 = vlaneseq
    %v1122 = vshrl.u32 %v1121, 7
    %v1123 = vsub.s32 3, %v1122
    %v1124 = vrot.slane %v808, %v1123
    %1126 = vbcast.lane.b32.xlu0 %v1124, 256
    %v1127 = vpop.permute.xlu0 %1126
    %v1128 = vlaneseq
    %v1129 = vshrl.u32 %v1128, 7
    %v1130 = vsub.s32 4, %v1129
    %v1131 = vrot.slane %v808, %v1130
    %1133 = vbcast.lane.b32.xlu0 %v1131, 256
    %v1134 = vpop.permute.xlu0 %1133
    %v1135 = vlaneseq
    %v1136 = vshrl.u32 %v1135, 7
    %v1137 = vsub.s32 5, %v1136
    %v1138 = vrot.slane %v808, %v1137
    %1140 = vbcast.lane.b32.xlu0 %v1138, 256
    %v1141 = vpop.permute.xlu0 %1140
    %v1142 = vlaneseq
    %v1143 = vshrl.u32 %v1142, 7
    %v1144 = vsub.s32 6, %v1143
    %v1145 = vrot.slane %v808, %v1144
    %1147 = vbcast.lane.b32.xlu0 %v1145, 256
    %v1148 = vpop.permute.xlu0 %1147
    %v1149 = vlaneseq
    %v1150 = vshrl.u32 %v1149, 7
    %v1151 = vsub.s32 7, %v1150
    %v1152 = vrot.slane %v808, %v1151
    %1154 = vbcast.lane.b32.xlu0 %v1152, 256
    %v1155 = vpop.permute.xlu0 %1154
    %v1164 = vadd.f32 %v1084, %v1106
    %v1165 = vadd.f32 %v1086, %v1113
    %v1166 = vadd.f32 %v1088, %v1120
    %v1167 = vadd.f32 %v1090, %v1127
    %v1168 = vadd.f32 %v1092, %v1134
    %v1169 = vadd.f32 %v1094, %v1141
    %v1170 = vadd.f32 %v1096, %v1148
    %v1171 = vadd.f32 %v1098, %v1155
    %v1172 = vsel %vm668, %v1164, -inf
    %v1173 = vsel %vm668, %v1165, -inf
    %v1174 = vsel %vm668, %v1166, -inf
    %v1175 = vsel %vm668, %v1167, -inf
    %v1176 = vsel %vm668, %v1168, -inf
    %v1177 = vmax.f32 %v1172, %v1176
    %v1178 = vsel %vm668, %v1169, -inf
    %v1179 = vmax.f32 %v1173, %v1178
    %v1180 = vsel %vm668, %v1170, -inf
    %v1181 = vmax.f32 %v1174, %v1180
    %v1182 = vsel %vm668, %v1171, -inf
    %v1183 = vmax.f32 %v1175, %v1182
    %v1184 = vmax.f32 %v1177, %v1179
    %v1185 = vmax.f32 %v1181, %v1183
    %v1186 = vmax.f32 %v1184, %v1185
    %vm1187 = vcmp.ge.f32.partialorder %v1164, %v1186
    %vm1188 = vcmp.ge.f32.partialorder %v1165, %v1186
    %vm1189 = vcmp.ge.f32.partialorder %v1166, %v1186
    %vm1190 = vcmp.ge.f32.partialorder %v1167, %v1186
    %vm1191 = vcmp.ge.f32.partialorder %v1168, %v1186
    %vm1192 = vcmp.ge.f32.partialorder %v1169, %v1186
    %vm1193 = vcmp.ge.f32.partialorder %v1170, %v1186
    %vm1194 = vcmp.ge.f32.partialorder %v1171, %v1186
    %v1195 = vsel %vm1187, %v695, 8
    %v1196 = vsel %vm1188, %v699, 8
    %v1197 = vsel %vm1189, %v703, 8
    %v1198 = vsel %vm1190, %v707, 8
    %v1199 = vsel %vm1191, %v711, 8
    %v1200 = vsel %vm1192, %v715, 8
    %v1201 = vsel %vm1193, %v719, 8
    %v1202 = vsel %vm1194, %v723, 8
    %v1203 = vsel %vm668, %v1195, 2147483647
    %v1204 = vsel %vm668, %v1196, 2147483647
    %v1205 = vsel %vm668, %v1197, 2147483647
    %v1206 = vsel %vm668, %v1198, 2147483647
    %v1207 = vsel %vm668, %v1199, 2147483647
    %vm1208 = vcmp.lt.s32.totalorder %v1203, %v1207
    %v1209 = vsel %vm1208, %v1203, %v1207
    %v1210 = vsel %vm668, %v1200, 2147483647
    %vm1211 = vcmp.lt.s32.totalorder %v1204, %v1210
    %v1212 = vsel %vm1211, %v1204, %v1210
    %v1213 = vsel %vm668, %v1201, 2147483647
    %vm1214 = vcmp.lt.s32.totalorder %v1205, %v1213
    %v1215 = vsel %vm1214, %v1205, %v1213
    %v1216 = vsel %vm668, %v1202, 2147483647
    %vm1217 = vcmp.lt.s32.totalorder %v1206, %v1216
    %v1218 = vsel %vm1217, %v1206, %v1216
    %vm1219 = vcmp.lt.s32.totalorder %v1209, %v1212
    %v1220 = vsel %vm1219, %v1209, %v1212
    %vm1221 = vcmp.lt.s32.totalorder %v1215, %v1218
    %v1222 = vsel %vm1221, %v1215, %v1218
    %vm1223 = vcmp.lt.s32.totalorder %v1220, %v1222
    %v1224 = vsel %vm1223, %v1220, %v1222
    %1225 = vset.pattern.permute.xlu0 0
    %1226 = vperm.xlu0 %1225, %v1224
    %v1227 = vpop.permute.xlu0 %1226
    %v1228 = vlaneseq
    %v1229 = vshrl.u32 %v1228, 7
    %v1230 = vsub.s32 %v317, %v1229
    %v1231 = vrot.slane %v1227, %v1230
    %v1232 = vsel %vm761, %v1231, %v1231
    %v1233 = vsel %vm763, %v1231, %v1232
    %v1234 = vsel %vm765, %v1231, %v1233
    %v1235 = vsel %vm767, %v1231, %v1234
    %v1236 = vsel %vm769, %v1231, %v1235
    %v1237 = vsel %vm771, %v1231, %v1236
    %vm1238 = vcmp.eq.s32.totalorder %v314, %v1237
    %v1239 = vsel %vm1238, 1, 0
    %v1240 = vcvt.s32.f32 %v1239
    %v1241 = vmul.f32 %v1240, %v15
    %v1242 = vsel %vm325, %v1241, 0.0
    %v1243 = vrot.slane %v1242, 4
    %v1244 = vadd.f32 %v1242, %v1243
    %v1245 = vrot.slane %v1244, 2
    %v1246 = vadd.f32 %v1244, %v1245
    %v1247 = vrot.slane %v1246, 1
    %v1248 = vadd.f32 %v1246, %v1247
    %v1249 = vmul.f32 %v1240, %v17
    %v1250 = vsel %vm325, %v1249, 0.0
    %v1251 = vrot.slane %v1250, 4
    %v1252 = vadd.f32 %v1250, %v1251
    %v1253 = vrot.slane %v1252, 2
    %v1254 = vadd.f32 %v1252, %v1253
    %v1255 = vrot.slane %v1254, 1
    %v1256 = vadd.f32 %v1254, %v1255
    %v1257 = vsub.f32 %v1248, %v783
    %v1258 = vmul.f32 %v1257, %v1257
    %v1259 = vadd.f32 %v1258, 0.0
    %v1260 = vsub.f32 %v1256, %v791
    %v1261 = vmul.f32 %v1260, %v1260
    %v1262 = vadd.f32 %v1259, %v1261
    %v1263 = vmax.f32 %v798, %v1262
    %v1264 = vsel %vm1238, -inf, %v808
    %v1265 = vmul.f32 %v320, %v1248
    %v1266 = vsel %vm325, %v1265, 0.0
    %1267 = vadd.xlane.f32.xlu0 %v1266
    %v1268 = vpop.xlane.xlu0 %1267
    %v1269 = vmul.f32 %v320, %v1256
    %v1270 = vsel %vm325, %v1269, 0.0
    %1271 = vadd.xlane.f32.xlu0 %v1270
    %v1272 = vpop.xlane.xlu0 %1271
    %v1273 = vsel %vm315, 0.0, %v1264
    %v1274 = vmul.f32 %v1268, %v103
    %v1275 = vmul.f32 %v1268, %v107
    %v1276 = vmul.f32 %v1268, %v111
    %v1277 = vmul.f32 %v1268, %v115
    %v1278 = vadd.f32 %v149, %v1274
    %v1279 = vadd.f32 %v153, %v1275
    %v1280 = vadd.f32 %v157, %v1276
    %v1281 = vadd.f32 %v161, %v1277
    %v1282 = vmul.f32 %v1272, %v126
    %v1283 = vmul.f32 %v1272, %v130
    %v1284 = vmul.f32 %v1272, %v134
    %v1285 = vmul.f32 %v1272, %v138
    %v1286 = vadd.f32 %v1278, %v1282
    %v1287 = vadd.f32 %v1279, %v1283
    %v1288 = vadd.f32 %v1280, %v1284
    %v1289 = vadd.f32 %v1281, %v1285
    %v1290 = vadd.f32 %v1286, %v914
    %v1291 = vadd.f32 %v1287, %v916
    %v1292 = vadd.f32 %v1288, %v985
    %v1293 = vadd.f32 %v1289, %v987
    %v1294 = vmul.f32 %v1290, 0.5
    %v1295 = vtanh.pop %v1294
    %v1296 = vadd.f32 %v1295, 1.0
    %v1297 = vmul.f32 %v1296, 0.5
    %v1298 = vmul.f32 %v1291, 0.5
    %v1299 = vtanh.pop %v1298
    %v1300 = vadd.f32 %v1299, 1.0
    %v1301 = vmul.f32 %v1300, 0.5
    %v1302 = vtanh.pop %v1292
    %v1303 = vmul.f32 %v1293, 0.5
    %v1304 = vtanh.pop %v1303
    %v1305 = vadd.f32 %v1304, 1.0
    %v1306 = vmul.f32 %v1305, 0.5
    %v1307 = vmul.f32 %v1301, %v844
    %v1308 = vmul.f32 %v1297, %v1302
    %v1309 = vadd.f32 %v1307, %v1308
    %v1310 = vtanh.pop %v1309
    %v1311 = vmul.f32 %v1306, %v1310
    %1312 = vmatprep.subr.mxu0 %v19
    %1313 = vmatpush1.msra.mxu0 %v18
    %1314 = vmatprep.subr.mxu0 %v24
    %1315 = vmatpush1.msra.mxu0 %v23
    %1316 = vmatprep.subr.mxu0 %v29
    %1317 = vmatpush1.msra.mxu0 %v28
    %1318 = vmatprep.subr.mxu0 %v34
    %1319 = vmatpush1.msra.mxu0 %v33
    %1320 = vmatprep.subr.mxu0 %v39
    %1321 = vmatpush1.msra.mxu0 %v38
    %1322 = vmatprep.subr.mxu0 %v44
    %1323 = vmatpush1.msra.mxu0 %v43
    %1324 = vmatprep.subr.mxu0 %v49
    %1325 = vmatpush1.msra.mxu0 %v48
    %1326 = vmatprep.subr.mxu0 %v54
    %1327 = vmatpush1.msra.mxu0 %v53
    %1328 = vmatprep.subr.mxu0 %v59
    %1329 = vmatpush1.msra.mxu0 %v58
    %1330 = vmatprep.subr.mxu0 %v64
    %1331 = vmatpush1.msra.mxu0 %v63
    %1332 = vmatprep.subr.mxu0 %v69
    %1333 = vmatpush1.msra.mxu0 %v68
    %1334 = vmatprep.subr.mxu0 %v74
    %1335 = vmatpush1.msra.mxu0 %v73
    %1336 = vmatprep.subr.mxu0 %v79
    %1337 = vmatpush1.msra.mxu0 %v78
    %1338 = vmatprep.subr.mxu0 %v84
    %1339 = vmatpush1.msra.mxu0 %v83
    %1340 = vmatprep.subr.mxu0 %v89
    %1341 = vmatpush1.msra.mxu0 %v88
    %1342 = vmatprep.subr.mxu0 %v94
    %1343 = vmatpush1.msra.mxu0 %v93
    %1344 = vmatprep.subr.mxu0 0.0
    %1345 = vmatpush1.msra.mxu0 0.0
    %1346 = vmatprep.subr.mxu0 0.0
    %1347 = vmatpush1.msra.mxu0 0.0
    %1348 = vmatprep.subr.mxu0 0.0
    %1349 = vmatpush1.msra.mxu0 0.0
    %1350 = vmatprep.subr.mxu0 0.0
    %1351 = vmatpush1.msra.mxu0 0.0
    %1352 = vmatprep.subr.mxu0 0.0
    %1353 = vmatpush1.msra.mxu0 0.0
    %1354 = vmatprep.subr.mxu0 0.0
    %1355 = vmatpush1.msra.mxu0 0.0
    %1356 = vmatprep.subr.mxu0 0.0
    %1357 = vmatpush1.msra.mxu0 0.0
    %1358 = vmatprep.subr.mxu0 0.0
    %1359 = vmatpush1.msra.mxu0 0.0
    %1360 = vmatprep.subr.mxu0 0.0
    %1361 = vmatpush1.msra.mxu0 0.0
    %1362 = vmatprep.subr.mxu0 0.0
    %1363 = vmatpush1.msra.mxu0 0.0
    %1364 = vmatprep.subr.mxu0 0.0
    %1365 = vmatpush1.msra.mxu0 0.0
    %1366 = vmatprep.subr.mxu0 0.0
    %1367 = vmatpush1.msra.mxu0 0.0
    %1368 = vmatprep.subr.mxu0 0.0
    %1369 = vmatpush1.msra.mxu0 0.0
    %1370 = vmatprep.subr.mxu0 0.0
    %1371 = vmatpush1.msra.mxu0 0.0
    %1372 = vmatprep.subr.mxu0 0.0
    %1373 = vmatpush1.msra.mxu0 0.0
    %1374 = vmatprep.subr.mxu0 0.0
    %1375 = vmatpush1.msra.mxu0 0.0
    %1376 = vmatprep.mubr.f32.mxu0 0.0
    %1377 = vmatmul.mubr.f32.gmra.mrb[0].mxu0 %v1311
    %v1378 = vpop.f32.mrb[0].mxu0
    %v1379 = vadd.f32 0.0, %v1378
    %v1380 = vpop.f32.mrb[0].mxu0
    %v1381 = vadd.f32 0.0, %v1380
    %1382 = vdwg.mxu0
    %1383 = vmatprep.subr.mxu0 %v21
    %1384 = vmatpush1.msra.mxu0 %v20
    %1385 = vmatprep.subr.mxu0 %v26
    %1386 = vmatpush1.msra.mxu0 %v25
    %1387 = vmatprep.subr.mxu0 %v31
    %1388 = vmatpush1.msra.mxu0 %v30
    %1389 = vmatprep.subr.mxu0 %v36
    %1390 = vmatpush1.msra.mxu0 %v35
    %1391 = vmatprep.subr.mxu0 %v41
    %1392 = vmatpush1.msra.mxu0 %v40
    %1393 = vmatprep.subr.mxu0 %v46
    %1394 = vmatpush1.msra.mxu0 %v45
    %1395 = vmatprep.subr.mxu0 %v51
    %1396 = vmatpush1.msra.mxu0 %v50
    %1397 = vmatprep.subr.mxu0 %v56
    %1398 = vmatpush1.msra.mxu0 %v55
    %1399 = vmatprep.subr.mxu0 %v61
    %1400 = vmatpush1.msra.mxu0 %v60
    %1401 = vmatprep.subr.mxu0 %v66
    %1402 = vmatpush1.msra.mxu0 %v65
    %1403 = vmatprep.subr.mxu0 %v71
    %1404 = vmatpush1.msra.mxu0 %v70
    %1405 = vmatprep.subr.mxu0 %v76
    %1406 = vmatpush1.msra.mxu0 %v75
    %1407 = vmatprep.subr.mxu0 %v81
    %1408 = vmatpush1.msra.mxu0 %v80
    %1409 = vmatprep.subr.mxu0 %v86
    %1410 = vmatpush1.msra.mxu0 %v85
    %1411 = vmatprep.subr.mxu0 %v91
    %1412 = vmatpush1.msra.mxu0 %v90
    %1413 = vmatprep.subr.mxu0 %v96
    %1414 = vmatpush1.msra.mxu0 %v95
    %1415 = vmatprep.subr.mxu0 0.0
    %1416 = vmatpush1.msra.mxu0 0.0
    %1417 = vmatprep.subr.mxu0 0.0
    %1418 = vmatpush1.msra.mxu0 0.0
    %1419 = vmatprep.subr.mxu0 0.0
    %1420 = vmatpush1.msra.mxu0 0.0
    %1421 = vmatprep.subr.mxu0 0.0
    %1422 = vmatpush1.msra.mxu0 0.0
    %1423 = vmatprep.subr.mxu0 0.0
    %1424 = vmatpush1.msra.mxu0 0.0
    %1425 = vmatprep.subr.mxu0 0.0
    %1426 = vmatpush1.msra.mxu0 0.0
    %1427 = vmatprep.subr.mxu0 0.0
    %1428 = vmatpush1.msra.mxu0 0.0
    %1429 = vmatprep.subr.mxu0 0.0
    %1430 = vmatpush1.msra.mxu0 0.0
    %1431 = vmatprep.subr.mxu0 0.0
    %1432 = vmatpush1.msra.mxu0 0.0
    %1433 = vmatprep.subr.mxu0 0.0
    %1434 = vmatpush1.msra.mxu0 0.0
    %1435 = vmatprep.subr.mxu0 0.0
    %1436 = vmatpush1.msra.mxu0 0.0
    %1437 = vmatprep.subr.mxu0 0.0
    %1438 = vmatpush1.msra.mxu0 0.0
    %1439 = vmatprep.subr.mxu0 0.0
    %1440 = vmatpush1.msra.mxu0 0.0
    %1441 = vmatprep.subr.mxu0 0.0
    %1442 = vmatpush1.msra.mxu0 0.0
    %1443 = vmatprep.subr.mxu0 0.0
    %1444 = vmatpush1.msra.mxu0 0.0
    %1445 = vmatprep.subr.mxu0 0.0
    %1446 = vmatpush1.msra.mxu0 0.0
    %1447 = vmatprep.mubr.f32.mxu0 0.0
    %1448 = vmatmul.mubr.f32.gmra.mrb[0].mxu0 %v1311
    %v1449 = vpop.f32.mrb[0].mxu0
    %v1450 = vadd.f32 0.0, %v1449
    %v1451 = vpop.f32.mrb[0].mxu0
    %v1452 = vadd.f32 0.0, %v1451
    %1453 = vdwg.mxu0
    %1454 = vmatprep.subr.mxu0 0.0
    %1455 = vmatpush1.msra.mxu0 %v22
    %1456 = vmatprep.subr.mxu0 0.0
    %1457 = vmatpush1.msra.mxu0 %v27
    %1458 = vmatprep.subr.mxu0 0.0
    %1459 = vmatpush1.msra.mxu0 %v32
    %1460 = vmatprep.subr.mxu0 0.0
    %1461 = vmatpush1.msra.mxu0 %v37
    %1462 = vmatprep.subr.mxu0 0.0
    %1463 = vmatpush1.msra.mxu0 %v42
    %1464 = vmatprep.subr.mxu0 0.0
    %1465 = vmatpush1.msra.mxu0 %v47
    %1466 = vmatprep.subr.mxu0 0.0
    %1467 = vmatpush1.msra.mxu0 %v52
    %1468 = vmatprep.subr.mxu0 0.0
    %1469 = vmatpush1.msra.mxu0 %v57
    %1470 = vmatprep.subr.mxu0 0.0
    %1471 = vmatpush1.msra.mxu0 %v62
    %1472 = vmatprep.subr.mxu0 0.0
    %1473 = vmatpush1.msra.mxu0 %v67
    %1474 = vmatprep.subr.mxu0 0.0
    %1475 = vmatpush1.msra.mxu0 %v72
    %1476 = vmatprep.subr.mxu0 0.0
    %1477 = vmatpush1.msra.mxu0 %v77
    %1478 = vmatprep.subr.mxu0 0.0
    %1479 = vmatpush1.msra.mxu0 %v82
    %1480 = vmatprep.subr.mxu0 0.0
    %1481 = vmatpush1.msra.mxu0 %v87
    %1482 = vmatprep.subr.mxu0 0.0
    %1483 = vmatpush1.msra.mxu0 %v92
    %1484 = vmatprep.subr.mxu0 0.0
    %1485 = vmatpush1.msra.mxu0 %v97
    %1486 = vmatprep.subr.mxu0 0.0
    %1487 = vmatpush1.msra.mxu0 0.0
    %1488 = vmatprep.subr.mxu0 0.0
    %1489 = vmatpush1.msra.mxu0 0.0
    %1490 = vmatprep.subr.mxu0 0.0
    %1491 = vmatpush1.msra.mxu0 0.0
    %1492 = vmatprep.subr.mxu0 0.0
    %1493 = vmatpush1.msra.mxu0 0.0
    %1494 = vmatprep.subr.mxu0 0.0
    %1495 = vmatpush1.msra.mxu0 0.0
    %1496 = vmatprep.subr.mxu0 0.0
    %1497 = vmatpush1.msra.mxu0 0.0
    %1498 = vmatprep.subr.mxu0 0.0
    %1499 = vmatpush1.msra.mxu0 0.0
    %1500 = vmatprep.subr.mxu0 0.0
    %1501 = vmatpush1.msra.mxu0 0.0
    %1502 = vmatprep.subr.mxu0 0.0
    %1503 = vmatpush1.msra.mxu0 0.0
    %1504 = vmatprep.subr.mxu0 0.0
    %1505 = vmatpush1.msra.mxu0 0.0
    %1506 = vmatprep.subr.mxu0 0.0
    %1507 = vmatpush1.msra.mxu0 0.0
    %1508 = vmatprep.subr.mxu0 0.0
    %1509 = vmatpush1.msra.mxu0 0.0
    %1510 = vmatprep.subr.mxu0 0.0
    %1511 = vmatpush1.msra.mxu0 0.0
    %1512 = vmatprep.subr.mxu0 0.0
    %1513 = vmatpush1.msra.mxu0 0.0
    %1514 = vmatprep.subr.mxu0 0.0
    %1515 = vmatpush1.msra.mxu0 0.0
    %1516 = vmatprep.subr.mxu0 0.0
    %1517 = vmatpush1.msra.mxu0 0.0
    %1518 = vmatprep.mubr.f32.mxu0 0.0
    %1519 = vmatmul.mubr.f32.gmra.mrb[0].mxu0 %v1311
    %v1520 = vpop.f32.mrb[0].mxu0
    %v1521 = vadd.f32 0.0, %v1520
    %v1522 = vpop.f32.mrb[0].mxu0
    %1523 = vdwg.mxu0
    %v1524 = vadd.f32 %v305, %v1521
    %v1525 = vadd.f32 %v306, %v1521
    %v1526 = vadd.f32 %v307, %v1521
    %v1527 = vadd.f32 %v308, %v1521
    %v1528 = vadd.f32 %v309, %v1521
    %v1529 = vadd.f32 %v310, %v1521
    %v1530 = vadd.f32 %v311, %v1521
    %v1531 = vadd.f32 %v312, %v1521
    %v1532 = vtanh.pop %v1524
    %v1533 = vtanh.pop %v1525
    %v1534 = vtanh.pop %v1526
    %v1535 = vtanh.pop %v1527
    %v1536 = vtanh.pop %v1528
    %v1537 = vtanh.pop %v1529
    %v1538 = vtanh.pop %v1530
    %v1539 = vtanh.pop %v1531
    %v1540 = vmul.f32 %v1532, %v166
    %v1541 = vmul.f32 %v1533, %v166
    %v1542 = vmul.f32 %v1534, %v166
    %v1543 = vmul.f32 %v1535, %v166
    %v1544 = vmul.f32 %v1536, %v166
    %v1545 = vmul.f32 %v1537, %v166
    %v1546 = vmul.f32 %v1538, %v166
    %v1547 = vmul.f32 %v1539, %v166
    %1548 = vadd.xlane.f32.xlu0 %v1540
    %v1549 = vpop.xlane.xlu0 %1548
    %1550 = vadd.xlane.f32.xlu0 %v1541
    %v1551 = vpop.xlane.xlu0 %1550
    %1552 = vadd.xlane.f32.xlu0 %v1542
    %v1553 = vpop.xlane.xlu0 %1552
    %1554 = vadd.xlane.f32.xlu0 %v1543
    %v1555 = vpop.xlane.xlu0 %1554
    %1556 = vadd.xlane.f32.xlu0 %v1544
    %v1557 = vpop.xlane.xlu0 %1556
    %1558 = vadd.xlane.f32.xlu0 %v1545
    %v1559 = vpop.xlane.xlu0 %1558
    %1560 = vadd.xlane.f32.xlu0 %v1546
    %v1561 = vpop.xlane.xlu0 %1560
    %1562 = vadd.xlane.f32.xlu0 %v1547
    %v1563 = vpop.xlane.xlu0 %1562
    %v1565 = vlaneseq
    %v1566 = vshrl.u32 %v1565, 7
    %v1567 = vsub.s32 0, %v1566
    %v1568 = vrot.slane %v1273, %v1567
    %1570 = vbcast.lane.b32.xlu0 %v1568, 256
    %v1571 = vpop.permute.xlu0 %1570
    %v1572 = vlaneseq
    %v1573 = vshrl.u32 %v1572, 7
    %v1574 = vsub.s32 1, %v1573
    %v1575 = vrot.slane %v1273, %v1574
    %1577 = vbcast.lane.b32.xlu0 %v1575, 256
    %v1578 = vpop.permute.xlu0 %1577
    %v1579 = vlaneseq
    %v1580 = vshrl.u32 %v1579, 7
    %v1581 = vsub.s32 2, %v1580
    %v1582 = vrot.slane %v1273, %v1581
    %1584 = vbcast.lane.b32.xlu0 %v1582, 256
    %v1585 = vpop.permute.xlu0 %1584
    %v1586 = vlaneseq
    %v1587 = vshrl.u32 %v1586, 7
    %v1588 = vsub.s32 3, %v1587
    %v1589 = vrot.slane %v1273, %v1588
    %1591 = vbcast.lane.b32.xlu0 %v1589, 256
    %v1592 = vpop.permute.xlu0 %1591
    %v1593 = vlaneseq
    %v1594 = vshrl.u32 %v1593, 7
    %v1595 = vsub.s32 4, %v1594
    %v1596 = vrot.slane %v1273, %v1595
    %1598 = vbcast.lane.b32.xlu0 %v1596, 256
    %v1599 = vpop.permute.xlu0 %1598
    %v1600 = vlaneseq
    %v1601 = vshrl.u32 %v1600, 7
    %v1602 = vsub.s32 5, %v1601
    %v1603 = vrot.slane %v1273, %v1602
    %1605 = vbcast.lane.b32.xlu0 %v1603, 256
    %v1606 = vpop.permute.xlu0 %1605
    %v1607 = vlaneseq
    %v1608 = vshrl.u32 %v1607, 7
    %v1609 = vsub.s32 6, %v1608
    %v1610 = vrot.slane %v1273, %v1609
    %1612 = vbcast.lane.b32.xlu0 %v1610, 256
    %v1613 = vpop.permute.xlu0 %1612
    %v1614 = vlaneseq
    %v1615 = vshrl.u32 %v1614, 7
    %v1616 = vsub.s32 7, %v1615
    %v1617 = vrot.slane %v1273, %v1616
    %1619 = vbcast.lane.b32.xlu0 %v1617, 256
    %v1620 = vpop.permute.xlu0 %1619
    %v1629 = vadd.f32 %v1549, %v1571
    %v1630 = vadd.f32 %v1551, %v1578
    %v1631 = vadd.f32 %v1553, %v1585
    %v1632 = vadd.f32 %v1555, %v1592
    %v1633 = vadd.f32 %v1557, %v1599
    %v1634 = vadd.f32 %v1559, %v1606
    %v1635 = vadd.f32 %v1561, %v1613
    %v1636 = vadd.f32 %v1563, %v1620
    %v1637 = vsel %vm668, %v1629, -inf
    %v1638 = vsel %vm668, %v1630, -inf
    %v1639 = vsel %vm668, %v1631, -inf
    %v1640 = vsel %vm668, %v1632, -inf
    %v1641 = vsel %vm668, %v1633, -inf
    %v1642 = vmax.f32 %v1637, %v1641
    %v1643 = vsel %vm668, %v1634, -inf
    %v1644 = vmax.f32 %v1638, %v1643
    %v1645 = vsel %vm668, %v1635, -inf
    %v1646 = vmax.f32 %v1639, %v1645
    %v1647 = vsel %vm668, %v1636, -inf
    %v1648 = vmax.f32 %v1640, %v1647
    %v1649 = vmax.f32 %v1642, %v1644
    %v1650 = vmax.f32 %v1646, %v1648
    %v1651 = vmax.f32 %v1649, %v1650
    %vm1652 = vcmp.ge.f32.partialorder %v1629, %v1651
    %vm1653 = vcmp.ge.f32.partialorder %v1630, %v1651
    %vm1654 = vcmp.ge.f32.partialorder %v1631, %v1651
    %vm1655 = vcmp.ge.f32.partialorder %v1632, %v1651
    %vm1656 = vcmp.ge.f32.partialorder %v1633, %v1651
    %vm1657 = vcmp.ge.f32.partialorder %v1634, %v1651
    %vm1658 = vcmp.ge.f32.partialorder %v1635, %v1651
    %vm1659 = vcmp.ge.f32.partialorder %v1636, %v1651
    %v1660 = vsel %vm1652, %v695, 8
    %v1661 = vsel %vm1653, %v699, 8
    %v1662 = vsel %vm1654, %v703, 8
    %v1663 = vsel %vm1655, %v707, 8
    %v1664 = vsel %vm1656, %v711, 8
    %v1665 = vsel %vm1657, %v715, 8
    %v1666 = vsel %vm1658, %v719, 8
    %v1667 = vsel %vm1659, %v723, 8
    %v1668 = vsel %vm668, %v1660, 2147483647
    %v1669 = vsel %vm668, %v1661, 2147483647
    %v1670 = vsel %vm668, %v1662, 2147483647
    %v1671 = vsel %vm668, %v1663, 2147483647
    %v1672 = vsel %vm668, %v1664, 2147483647
    %vm1673 = vcmp.lt.s32.totalorder %v1668, %v1672
    %v1674 = vsel %vm1673, %v1668, %v1672
    %v1675 = vsel %vm668, %v1665, 2147483647
    %vm1676 = vcmp.lt.s32.totalorder %v1669, %v1675
    %v1677 = vsel %vm1676, %v1669, %v1675
    %v1678 = vsel %vm668, %v1666, 2147483647
    %vm1679 = vcmp.lt.s32.totalorder %v1670, %v1678
    %v1680 = vsel %vm1679, %v1670, %v1678
    %v1681 = vsel %vm668, %v1667, 2147483647
    %vm1682 = vcmp.lt.s32.totalorder %v1671, %v1681
    %v1683 = vsel %vm1682, %v1671, %v1681
    %vm1684 = vcmp.lt.s32.totalorder %v1674, %v1677
    %v1685 = vsel %vm1684, %v1674, %v1677
    %vm1686 = vcmp.lt.s32.totalorder %v1680, %v1683
    %v1687 = vsel %vm1686, %v1680, %v1683
    %vm1688 = vcmp.lt.s32.totalorder %v1685, %v1687
    %v1689 = vsel %vm1688, %v1685, %v1687
    %1690 = vset.pattern.permute.xlu0 0
    %1691 = vperm.xlu0 %1690, %v1689
    %v1692 = vpop.permute.xlu0 %1691
    %v1693 = vlaneseq
    %v1694 = vshrl.u32 %v1693, 7
    %v1695 = vsub.s32 %v317, %v1694
    %v1696 = vrot.slane %v1692, %v1695
    %v1697 = vsel %vm761, %v1696, %v1696
    %v1698 = vsel %vm763, %v1696, %v1697
    %v1699 = vsel %vm765, %v1696, %v1698
    %v1700 = vsel %vm767, %v1696, %v1699
    %v1701 = vsel %vm769, %v1696, %v1700
    %v1702 = vsel %vm771, %v1696, %v1701
    %vm1703 = vcmp.eq.s32.totalorder %v314, %v1702
    %v1704 = vsel %vm1703, 1, 0
    %v1705 = vcvt.s32.f32 %v1704
    %v1706 = vmul.f32 %v1705, %v15
    %v1707 = vsel %vm325, %v1706, 0.0
    %v1708 = vrot.slane %v1707, 4
    %v1709 = vadd.f32 %v1707, %v1708
    %v1710 = vrot.slane %v1709, 2
    %v1711 = vadd.f32 %v1709, %v1710
    %v1712 = vrot.slane %v1711, 1
    %v1713 = vadd.f32 %v1711, %v1712
    %v1714 = vmul.f32 %v1705, %v17
    %v1715 = vsel %vm325, %v1714, 0.0
    %v1716 = vrot.slane %v1715, 4
    %v1717 = vadd.f32 %v1715, %v1716
    %v1718 = vrot.slane %v1717, 2
    %v1719 = vadd.f32 %v1717, %v1718
    %v1720 = vrot.slane %v1719, 1
    %v1721 = vadd.f32 %v1719, %v1720
    %v1722 = vsub.f32 %v1713, %v1248
    %v1723 = vmul.f32 %v1722, %v1722
    %v1724 = vadd.f32 %v1723, 0.0
    %v1725 = vsub.f32 %v1721, %v1256
    %v1726 = vmul.f32 %v1725, %v1725
    %v1727 = vadd.f32 %v1724, %v1726
    %v1728 = vmax.f32 %v1263, %v1727
    %v1729 = vsel %vm1703, -inf, %v1273
    %v1730 = vmul.f32 %v320, %v1713
    %v1731 = vsel %vm325, %v1730, 0.0
    %1732 = vadd.xlane.f32.xlu0 %v1731
    %v1733 = vpop.xlane.xlu0 %1732
    %v1734 = vmul.f32 %v320, %v1721
    %v1735 = vsel %vm325, %v1734, 0.0
    %1736 = vadd.xlane.f32.xlu0 %v1735
    %v1737 = vpop.xlane.xlu0 %1736
    %v1738 = vsel %vm315, 0.0, %v1729
    %v1739 = vmul.f32 %v1733, %v103
    %v1740 = vmul.f32 %v1733, %v107
    %v1741 = vmul.f32 %v1733, %v111
    %v1742 = vmul.f32 %v1733, %v115
    %v1743 = vadd.f32 %v149, %v1739
    %v1744 = vadd.f32 %v153, %v1740
    %v1745 = vadd.f32 %v157, %v1741
    %v1746 = vadd.f32 %v161, %v1742
    %v1747 = vmul.f32 %v1737, %v126
    %v1748 = vmul.f32 %v1737, %v130
    %v1749 = vmul.f32 %v1737, %v134
    %v1750 = vmul.f32 %v1737, %v138
    %v1751 = vadd.f32 %v1743, %v1747
    %v1752 = vadd.f32 %v1744, %v1748
    %v1753 = vadd.f32 %v1745, %v1749
    %v1754 = vadd.f32 %v1746, %v1750
    %v1755 = vadd.f32 %v1751, %v1379
    %v1756 = vadd.f32 %v1752, %v1381
    %v1757 = vadd.f32 %v1753, %v1450
    %v1758 = vadd.f32 %v1754, %v1452
    %v1759 = vmul.f32 %v1755, 0.5
    %v1760 = vtanh.pop %v1759
    %v1761 = vadd.f32 %v1760, 1.0
    %v1762 = vmul.f32 %v1761, 0.5
    %v1763 = vmul.f32 %v1756, 0.5
    %v1764 = vtanh.pop %v1763
    %v1765 = vadd.f32 %v1764, 1.0
    %v1766 = vmul.f32 %v1765, 0.5
    %v1767 = vtanh.pop %v1757
    %v1768 = vmul.f32 %v1758, 0.5
    %v1769 = vtanh.pop %v1768
    %v1770 = vadd.f32 %v1769, 1.0
    %v1771 = vmul.f32 %v1770, 0.5
    %v1772 = vmul.f32 %v1766, %v1309
    %v1773 = vmul.f32 %v1762, %v1767
    %v1774 = vadd.f32 %v1772, %v1773
    %v1775 = vtanh.pop %v1774
    %v1776 = vmul.f32 %v1771, %v1775
    %1777 = vmatprep.subr.mxu0 %v19
    %1778 = vmatpush1.msra.mxu0 %v18
    %1779 = vmatprep.subr.mxu0 %v24
    %1780 = vmatpush1.msra.mxu0 %v23
    %1781 = vmatprep.subr.mxu0 %v29
    %1782 = vmatpush1.msra.mxu0 %v28
    %1783 = vmatprep.subr.mxu0 %v34
    %1784 = vmatpush1.msra.mxu0 %v33
    %1785 = vmatprep.subr.mxu0 %v39
    %1786 = vmatpush1.msra.mxu0 %v38
    %1787 = vmatprep.subr.mxu0 %v44
    %1788 = vmatpush1.msra.mxu0 %v43
    %1789 = vmatprep.subr.mxu0 %v49
    %1790 = vmatpush1.msra.mxu0 %v48
    %1791 = vmatprep.subr.mxu0 %v54
    %1792 = vmatpush1.msra.mxu0 %v53
    %1793 = vmatprep.subr.mxu0 %v59
    %1794 = vmatpush1.msra.mxu0 %v58
    %1795 = vmatprep.subr.mxu0 %v64
    %1796 = vmatpush1.msra.mxu0 %v63
    %1797 = vmatprep.subr.mxu0 %v69
    %1798 = vmatpush1.msra.mxu0 %v68
    %1799 = vmatprep.subr.mxu0 %v74
    %1800 = vmatpush1.msra.mxu0 %v73
    %1801 = vmatprep.subr.mxu0 %v79
    %1802 = vmatpush1.msra.mxu0 %v78
    %1803 = vmatprep.subr.mxu0 %v84
    %1804 = vmatpush1.msra.mxu0 %v83
    %1805 = vmatprep.subr.mxu0 %v89
    %1806 = vmatpush1.msra.mxu0 %v88
    %1807 = vmatprep.subr.mxu0 %v94
    %1808 = vmatpush1.msra.mxu0 %v93
    %1809 = vmatprep.subr.mxu0 0.0
    %1810 = vmatpush1.msra.mxu0 0.0
    %1811 = vmatprep.subr.mxu0 0.0
    %1812 = vmatpush1.msra.mxu0 0.0
    %1813 = vmatprep.subr.mxu0 0.0
    %1814 = vmatpush1.msra.mxu0 0.0
    %1815 = vmatprep.subr.mxu0 0.0
    %1816 = vmatpush1.msra.mxu0 0.0
    %1817 = vmatprep.subr.mxu0 0.0
    %1818 = vmatpush1.msra.mxu0 0.0
    %1819 = vmatprep.subr.mxu0 0.0
    %1820 = vmatpush1.msra.mxu0 0.0
    %1821 = vmatprep.subr.mxu0 0.0
    %1822 = vmatpush1.msra.mxu0 0.0
    %1823 = vmatprep.subr.mxu0 0.0
    %1824 = vmatpush1.msra.mxu0 0.0
    %1825 = vmatprep.subr.mxu0 0.0
    %1826 = vmatpush1.msra.mxu0 0.0
    %1827 = vmatprep.subr.mxu0 0.0
    %1828 = vmatpush1.msra.mxu0 0.0
    %1829 = vmatprep.subr.mxu0 0.0
    %1830 = vmatpush1.msra.mxu0 0.0
    %1831 = vmatprep.subr.mxu0 0.0
    %1832 = vmatpush1.msra.mxu0 0.0
    %1833 = vmatprep.subr.mxu0 0.0
    %1834 = vmatpush1.msra.mxu0 0.0
    %1835 = vmatprep.subr.mxu0 0.0
    %1836 = vmatpush1.msra.mxu0 0.0
    %1837 = vmatprep.subr.mxu0 0.0
    %1838 = vmatpush1.msra.mxu0 0.0
    %1839 = vmatprep.subr.mxu0 0.0
    %1840 = vmatpush1.msra.mxu0 0.0
    %1841 = vmatprep.mubr.f32.mxu0 0.0
    %1842 = vmatmul.mubr.f32.gmra.mrb[0].mxu0 %v1776
    %v1843 = vpop.f32.mrb[0].mxu0
    %v1844 = vadd.f32 0.0, %v1843
    %v1845 = vpop.f32.mrb[0].mxu0
    %v1846 = vadd.f32 0.0, %v1845
    %1847 = vdwg.mxu0
    %1848 = vmatprep.subr.mxu0 %v21
    %1849 = vmatpush1.msra.mxu0 %v20
    %1850 = vmatprep.subr.mxu0 %v26
    %1851 = vmatpush1.msra.mxu0 %v25
    %1852 = vmatprep.subr.mxu0 %v31
    %1853 = vmatpush1.msra.mxu0 %v30
    %1854 = vmatprep.subr.mxu0 %v36
    %1855 = vmatpush1.msra.mxu0 %v35
    %1856 = vmatprep.subr.mxu0 %v41
    %1857 = vmatpush1.msra.mxu0 %v40
    %1858 = vmatprep.subr.mxu0 %v46
    %1859 = vmatpush1.msra.mxu0 %v45
    %1860 = vmatprep.subr.mxu0 %v51
    %1861 = vmatpush1.msra.mxu0 %v50
    %1862 = vmatprep.subr.mxu0 %v56
    %1863 = vmatpush1.msra.mxu0 %v55
    %1864 = vmatprep.subr.mxu0 %v61
    %1865 = vmatpush1.msra.mxu0 %v60
    %1866 = vmatprep.subr.mxu0 %v66
    %1867 = vmatpush1.msra.mxu0 %v65
    %1868 = vmatprep.subr.mxu0 %v71
    %1869 = vmatpush1.msra.mxu0 %v70
    %1870 = vmatprep.subr.mxu0 %v76
    %1871 = vmatpush1.msra.mxu0 %v75
    %1872 = vmatprep.subr.mxu0 %v81
    %1873 = vmatpush1.msra.mxu0 %v80
    %1874 = vmatprep.subr.mxu0 %v86
    %1875 = vmatpush1.msra.mxu0 %v85
    %1876 = vmatprep.subr.mxu0 %v91
    %1877 = vmatpush1.msra.mxu0 %v90
    %1878 = vmatprep.subr.mxu0 %v96
    %1879 = vmatpush1.msra.mxu0 %v95
    %1880 = vmatprep.subr.mxu0 0.0
    %1881 = vmatpush1.msra.mxu0 0.0
    %1882 = vmatprep.subr.mxu0 0.0
    %1883 = vmatpush1.msra.mxu0 0.0
    %1884 = vmatprep.subr.mxu0 0.0
    %1885 = vmatpush1.msra.mxu0 0.0
    %1886 = vmatprep.subr.mxu0 0.0
    %1887 = vmatpush1.msra.mxu0 0.0
    %1888 = vmatprep.subr.mxu0 0.0
    %1889 = vmatpush1.msra.mxu0 0.0
    %1890 = vmatprep.subr.mxu0 0.0
    %1891 = vmatpush1.msra.mxu0 0.0
    %1892 = vmatprep.subr.mxu0 0.0
    %1893 = vmatpush1.msra.mxu0 0.0
    %1894 = vmatprep.subr.mxu0 0.0
    %1895 = vmatpush1.msra.mxu0 0.0
    %1896 = vmatprep.subr.mxu0 0.0
    %1897 = vmatpush1.msra.mxu0 0.0
    %1898 = vmatprep.subr.mxu0 0.0
    %1899 = vmatpush1.msra.mxu0 0.0
    %1900 = vmatprep.subr.mxu0 0.0
    %1901 = vmatpush1.msra.mxu0 0.0
    %1902 = vmatprep.subr.mxu0 0.0
    %1903 = vmatpush1.msra.mxu0 0.0
    %1904 = vmatprep.subr.mxu0 0.0
    %1905 = vmatpush1.msra.mxu0 0.0
    %1906 = vmatprep.subr.mxu0 0.0
    %1907 = vmatpush1.msra.mxu0 0.0
    %1908 = vmatprep.subr.mxu0 0.0
    %1909 = vmatpush1.msra.mxu0 0.0
    %1910 = vmatprep.subr.mxu0 0.0
    %1911 = vmatpush1.msra.mxu0 0.0
    %1912 = vmatprep.mubr.f32.mxu0 0.0
    %1913 = vmatmul.mubr.f32.gmra.mrb[0].mxu0 %v1776
    %v1914 = vpop.f32.mrb[0].mxu0
    %v1915 = vadd.f32 0.0, %v1914
    %v1916 = vpop.f32.mrb[0].mxu0
    %v1917 = vadd.f32 0.0, %v1916
    %1918 = vdwg.mxu0
    %1919 = vmatprep.subr.mxu0 0.0
    %1920 = vmatpush1.msra.mxu0 %v22
    %1921 = vmatprep.subr.mxu0 0.0
    %1922 = vmatpush1.msra.mxu0 %v27
    %1923 = vmatprep.subr.mxu0 0.0
    %1924 = vmatpush1.msra.mxu0 %v32
    %1925 = vmatprep.subr.mxu0 0.0
    %1926 = vmatpush1.msra.mxu0 %v37
    %1927 = vmatprep.subr.mxu0 0.0
    %1928 = vmatpush1.msra.mxu0 %v42
    %1929 = vmatprep.subr.mxu0 0.0
    %1930 = vmatpush1.msra.mxu0 %v47
    %1931 = vmatprep.subr.mxu0 0.0
    %1932 = vmatpush1.msra.mxu0 %v52
    %1933 = vmatprep.subr.mxu0 0.0
    %1934 = vmatpush1.msra.mxu0 %v57
    %1935 = vmatprep.subr.mxu0 0.0
    %1936 = vmatpush1.msra.mxu0 %v62
    %1937 = vmatprep.subr.mxu0 0.0
    %1938 = vmatpush1.msra.mxu0 %v67
    %1939 = vmatprep.subr.mxu0 0.0
    %1940 = vmatpush1.msra.mxu0 %v72
    %1941 = vmatprep.subr.mxu0 0.0
    %1942 = vmatpush1.msra.mxu0 %v77
    %1943 = vmatprep.subr.mxu0 0.0
    %1944 = vmatpush1.msra.mxu0 %v82
    %1945 = vmatprep.subr.mxu0 0.0
    %1946 = vmatpush1.msra.mxu0 %v87
    %1947 = vmatprep.subr.mxu0 0.0
    %1948 = vmatpush1.msra.mxu0 %v92
    %1949 = vmatprep.subr.mxu0 0.0
    %1950 = vmatpush1.msra.mxu0 %v97
    %1951 = vmatprep.subr.mxu0 0.0
    %1952 = vmatpush1.msra.mxu0 0.0
    %1953 = vmatprep.subr.mxu0 0.0
    %1954 = vmatpush1.msra.mxu0 0.0
    %1955 = vmatprep.subr.mxu0 0.0
    %1956 = vmatpush1.msra.mxu0 0.0
    %1957 = vmatprep.subr.mxu0 0.0
    %1958 = vmatpush1.msra.mxu0 0.0
    %1959 = vmatprep.subr.mxu0 0.0
    %1960 = vmatpush1.msra.mxu0 0.0
    %1961 = vmatprep.subr.mxu0 0.0
    %1962 = vmatpush1.msra.mxu0 0.0
    %1963 = vmatprep.subr.mxu0 0.0
    %1964 = vmatpush1.msra.mxu0 0.0
    %1965 = vmatprep.subr.mxu0 0.0
    %1966 = vmatpush1.msra.mxu0 0.0
    %1967 = vmatprep.subr.mxu0 0.0
    %1968 = vmatpush1.msra.mxu0 0.0
    %1969 = vmatprep.subr.mxu0 0.0
    %1970 = vmatpush1.msra.mxu0 0.0
    %1971 = vmatprep.subr.mxu0 0.0
    %1972 = vmatpush1.msra.mxu0 0.0
    %1973 = vmatprep.subr.mxu0 0.0
    %1974 = vmatpush1.msra.mxu0 0.0
    %1975 = vmatprep.subr.mxu0 0.0
    %1976 = vmatpush1.msra.mxu0 0.0
    %1977 = vmatprep.subr.mxu0 0.0
    %1978 = vmatpush1.msra.mxu0 0.0
    %1979 = vmatprep.subr.mxu0 0.0
    %1980 = vmatpush1.msra.mxu0 0.0
    %1981 = vmatprep.subr.mxu0 0.0
    %1982 = vmatpush1.msra.mxu0 0.0
    %1983 = vmatprep.mubr.f32.mxu0 0.0
    %1984 = vmatmul.mubr.f32.gmra.mrb[0].mxu0 %v1776
    %v1985 = vpop.f32.mrb[0].mxu0
    %v1986 = vadd.f32 0.0, %v1985
    %v1987 = vpop.f32.mrb[0].mxu0
    %1988 = vdwg.mxu0
    %v1989 = vadd.f32 %v305, %v1986
    %v1990 = vadd.f32 %v306, %v1986
    %v1991 = vadd.f32 %v307, %v1986
    %v1992 = vadd.f32 %v308, %v1986
    %v1993 = vadd.f32 %v309, %v1986
    %v1994 = vadd.f32 %v310, %v1986
    %v1995 = vadd.f32 %v311, %v1986
    %v1996 = vadd.f32 %v312, %v1986
    %v1997 = vtanh.pop %v1989
    %v1998 = vtanh.pop %v1990
    %v1999 = vtanh.pop %v1991
    %v2000 = vtanh.pop %v1992
    %v2001 = vtanh.pop %v1993
    %v2002 = vtanh.pop %v1994
    %v2003 = vtanh.pop %v1995
    %v2004 = vtanh.pop %v1996
    %v2005 = vmul.f32 %v1997, %v166
    %v2006 = vmul.f32 %v1998, %v166
    %v2007 = vmul.f32 %v1999, %v166
    %v2008 = vmul.f32 %v2000, %v166
    %v2009 = vmul.f32 %v2001, %v166
    %v2010 = vmul.f32 %v2002, %v166
    %v2011 = vmul.f32 %v2003, %v166
    %v2012 = vmul.f32 %v2004, %v166
    %2013 = vadd.xlane.f32.xlu0 %v2005
    %v2014 = vpop.xlane.xlu0 %2013
    %2015 = vadd.xlane.f32.xlu0 %v2006
    %v2016 = vpop.xlane.xlu0 %2015
    %2017 = vadd.xlane.f32.xlu0 %v2007
    %v2018 = vpop.xlane.xlu0 %2017
    %2019 = vadd.xlane.f32.xlu0 %v2008
    %v2020 = vpop.xlane.xlu0 %2019
    %2021 = vadd.xlane.f32.xlu0 %v2009
    %v2022 = vpop.xlane.xlu0 %2021
    %2023 = vadd.xlane.f32.xlu0 %v2010
    %v2024 = vpop.xlane.xlu0 %2023
    %2025 = vadd.xlane.f32.xlu0 %v2011
    %v2026 = vpop.xlane.xlu0 %2025
    %2027 = vadd.xlane.f32.xlu0 %v2012
    %v2028 = vpop.xlane.xlu0 %2027
    %v2030 = vlaneseq
    %v2031 = vshrl.u32 %v2030, 7
    %v2032 = vsub.s32 0, %v2031
    %v2033 = vrot.slane %v1738, %v2032
    %2035 = vbcast.lane.b32.xlu0 %v2033, 256
    %v2036 = vpop.permute.xlu0 %2035
    %v2037 = vlaneseq
    %v2038 = vshrl.u32 %v2037, 7
    %v2039 = vsub.s32 1, %v2038
    %v2040 = vrot.slane %v1738, %v2039
    %2042 = vbcast.lane.b32.xlu0 %v2040, 256
    %v2043 = vpop.permute.xlu0 %2042
    %v2044 = vlaneseq
    %v2045 = vshrl.u32 %v2044, 7
    %v2046 = vsub.s32 2, %v2045
    %v2047 = vrot.slane %v1738, %v2046
    %2049 = vbcast.lane.b32.xlu0 %v2047, 256
    %v2050 = vpop.permute.xlu0 %2049
    %v2051 = vlaneseq
    %v2052 = vshrl.u32 %v2051, 7
    %v2053 = vsub.s32 3, %v2052
    %v2054 = vrot.slane %v1738, %v2053
    %2056 = vbcast.lane.b32.xlu0 %v2054, 256
    %v2057 = vpop.permute.xlu0 %2056
    %v2058 = vlaneseq
    %v2059 = vshrl.u32 %v2058, 7
    %v2060 = vsub.s32 4, %v2059
    %v2061 = vrot.slane %v1738, %v2060
    %2063 = vbcast.lane.b32.xlu0 %v2061, 256
    %v2064 = vpop.permute.xlu0 %2063
    %v2065 = vlaneseq
    %v2066 = vshrl.u32 %v2065, 7
    %v2067 = vsub.s32 5, %v2066
    %v2068 = vrot.slane %v1738, %v2067
    %2070 = vbcast.lane.b32.xlu0 %v2068, 256
    %v2071 = vpop.permute.xlu0 %2070
    %v2072 = vlaneseq
    %v2073 = vshrl.u32 %v2072, 7
    %v2074 = vsub.s32 6, %v2073
    %v2075 = vrot.slane %v1738, %v2074
    %2077 = vbcast.lane.b32.xlu0 %v2075, 256
    %v2078 = vpop.permute.xlu0 %2077
    %v2079 = vlaneseq
    %v2080 = vshrl.u32 %v2079, 7
    %v2081 = vsub.s32 7, %v2080
    %v2082 = vrot.slane %v1738, %v2081
    %2084 = vbcast.lane.b32.xlu0 %v2082, 256
    %v2085 = vpop.permute.xlu0 %2084
    %v2094 = vadd.f32 %v2014, %v2036
    %v2095 = vadd.f32 %v2016, %v2043
    %v2096 = vadd.f32 %v2018, %v2050
    %v2097 = vadd.f32 %v2020, %v2057
    %v2098 = vadd.f32 %v2022, %v2064
    %v2099 = vadd.f32 %v2024, %v2071
    %v2100 = vadd.f32 %v2026, %v2078
    %v2101 = vadd.f32 %v2028, %v2085
    %v2102 = vsel %vm668, %v2094, -inf
    %v2103 = vsel %vm668, %v2095, -inf
    %v2104 = vsel %vm668, %v2096, -inf
    %v2105 = vsel %vm668, %v2097, -inf
    %v2106 = vsel %vm668, %v2098, -inf
    %v2107 = vmax.f32 %v2102, %v2106
    %v2108 = vsel %vm668, %v2099, -inf
    %v2109 = vmax.f32 %v2103, %v2108
    %v2110 = vsel %vm668, %v2100, -inf
    %v2111 = vmax.f32 %v2104, %v2110
    %v2112 = vsel %vm668, %v2101, -inf
    %v2113 = vmax.f32 %v2105, %v2112
    %v2114 = vmax.f32 %v2107, %v2109
    %v2115 = vmax.f32 %v2111, %v2113
    %v2116 = vmax.f32 %v2114, %v2115
    %vm2117 = vcmp.ge.f32.partialorder %v2094, %v2116
    %vm2118 = vcmp.ge.f32.partialorder %v2095, %v2116
    %vm2119 = vcmp.ge.f32.partialorder %v2096, %v2116
    %vm2120 = vcmp.ge.f32.partialorder %v2097, %v2116
    %vm2121 = vcmp.ge.f32.partialorder %v2098, %v2116
    %vm2122 = vcmp.ge.f32.partialorder %v2099, %v2116
    %vm2123 = vcmp.ge.f32.partialorder %v2100, %v2116
    %vm2124 = vcmp.ge.f32.partialorder %v2101, %v2116
    %v2125 = vsel %vm2117, %v695, 8
    %v2126 = vsel %vm2118, %v699, 8
    %v2127 = vsel %vm2119, %v703, 8
    %v2128 = vsel %vm2120, %v707, 8
    %v2129 = vsel %vm2121, %v711, 8
    %v2130 = vsel %vm2122, %v715, 8
    %v2131 = vsel %vm2123, %v719, 8
    %v2132 = vsel %vm2124, %v723, 8
    %v2133 = vsel %vm668, %v2125, 2147483647
    %v2134 = vsel %vm668, %v2126, 2147483647
    %v2135 = vsel %vm668, %v2127, 2147483647
    %v2136 = vsel %vm668, %v2128, 2147483647
    %v2137 = vsel %vm668, %v2129, 2147483647
    %vm2138 = vcmp.lt.s32.totalorder %v2133, %v2137
    %v2139 = vsel %vm2138, %v2133, %v2137
    %v2140 = vsel %vm668, %v2130, 2147483647
    %vm2141 = vcmp.lt.s32.totalorder %v2134, %v2140
    %v2142 = vsel %vm2141, %v2134, %v2140
    %v2143 = vsel %vm668, %v2131, 2147483647
    %vm2144 = vcmp.lt.s32.totalorder %v2135, %v2143
    %v2145 = vsel %vm2144, %v2135, %v2143
    %v2146 = vsel %vm668, %v2132, 2147483647
    %vm2147 = vcmp.lt.s32.totalorder %v2136, %v2146
    %v2148 = vsel %vm2147, %v2136, %v2146
    %vm2149 = vcmp.lt.s32.totalorder %v2139, %v2142
    %v2150 = vsel %vm2149, %v2139, %v2142
    %vm2151 = vcmp.lt.s32.totalorder %v2145, %v2148
    %v2152 = vsel %vm2151, %v2145, %v2148
    %vm2153 = vcmp.lt.s32.totalorder %v2150, %v2152
    %v2154 = vsel %vm2153, %v2150, %v2152
    %2155 = vset.pattern.permute.xlu0 0
    %2156 = vperm.xlu0 %2155, %v2154
    %v2157 = vpop.permute.xlu0 %2156
    %v2158 = vlaneseq
    %v2159 = vshrl.u32 %v2158, 7
    %v2160 = vsub.s32 %v317, %v2159
    %v2161 = vrot.slane %v2157, %v2160
    %v2162 = vsel %vm761, %v2161, %v2161
    %v2163 = vsel %vm763, %v2161, %v2162
    %v2164 = vsel %vm765, %v2161, %v2163
    %v2165 = vsel %vm767, %v2161, %v2164
    %v2166 = vsel %vm769, %v2161, %v2165
    %v2167 = vsel %vm771, %v2161, %v2166
    %vm2168 = vcmp.eq.s32.totalorder %v314, %v2167
    %v2169 = vsel %vm2168, 1, 0
    %v2170 = vcvt.s32.f32 %v2169
    %v2171 = vmul.f32 %v2170, %v15
    %v2172 = vsel %vm325, %v2171, 0.0
    %v2173 = vrot.slane %v2172, 4
    %v2174 = vadd.f32 %v2172, %v2173
    %v2175 = vrot.slane %v2174, 2
    %v2176 = vadd.f32 %v2174, %v2175
    %v2177 = vrot.slane %v2176, 1
    %v2178 = vadd.f32 %v2176, %v2177
    %v2179 = vmul.f32 %v2170, %v17
    %v2180 = vsel %vm325, %v2179, 0.0
    %v2181 = vrot.slane %v2180, 4
    %v2182 = vadd.f32 %v2180, %v2181
    %v2183 = vrot.slane %v2182, 2
    %v2184 = vadd.f32 %v2182, %v2183
    %v2185 = vrot.slane %v2184, 1
    %v2186 = vadd.f32 %v2184, %v2185
    %v2187 = vsub.f32 %v2178, %v1713
    %v2188 = vmul.f32 %v2187, %v2187
    %v2189 = vadd.f32 %v2188, 0.0
    %v2190 = vsub.f32 %v2186, %v1721
    %v2191 = vmul.f32 %v2190, %v2190
    %v2192 = vadd.f32 %v2189, %v2191
    %v2193 = vmax.f32 %v1728, %v2192
    %v2194 = vsel %vm2168, -inf, %v1738
    %v2195 = vmul.f32 %v320, %v2178
    %v2196 = vsel %vm325, %v2195, 0.0
    %2197 = vadd.xlane.f32.xlu0 %v2196
    %v2198 = vpop.xlane.xlu0 %2197
    %v2199 = vmul.f32 %v320, %v2186
    %v2200 = vsel %vm325, %v2199, 0.0
    %2201 = vadd.xlane.f32.xlu0 %v2200
    %v2202 = vpop.xlane.xlu0 %2201
    %v2203 = vsel %vm315, 0.0, %v2194
    %v2204 = vmul.f32 %v2198, %v103
    %v2205 = vmul.f32 %v2198, %v107
    %v2206 = vmul.f32 %v2198, %v111
    %v2207 = vmul.f32 %v2198, %v115
    %v2208 = vadd.f32 %v149, %v2204
    %v2209 = vadd.f32 %v153, %v2205
    %v2210 = vadd.f32 %v157, %v2206
    %v2211 = vadd.f32 %v161, %v2207
    %v2212 = vmul.f32 %v2202, %v126
    %v2213 = vmul.f32 %v2202, %v130
    %v2214 = vmul.f32 %v2202, %v134
    %v2215 = vmul.f32 %v2202, %v138
    %v2216 = vadd.f32 %v2208, %v2212
    %v2217 = vadd.f32 %v2209, %v2213
    %v2218 = vadd.f32 %v2210, %v2214
    %v2219 = vadd.f32 %v2211, %v2215
    %v2220 = vadd.f32 %v2216, %v1844
    %v2221 = vadd.f32 %v2217, %v1846
    %v2222 = vadd.f32 %v2218, %v1915
    %v2223 = vadd.f32 %v2219, %v1917
    %v2224 = vmul.f32 %v2220, 0.5
    %v2225 = vtanh.pop %v2224
    %v2226 = vadd.f32 %v2225, 1.0
    %v2227 = vmul.f32 %v2226, 0.5
    %v2228 = vmul.f32 %v2221, 0.5
    %v2229 = vtanh.pop %v2228
    %v2230 = vadd.f32 %v2229, 1.0
    %v2231 = vmul.f32 %v2230, 0.5
    %v2232 = vtanh.pop %v2222
    %v2233 = vmul.f32 %v2223, 0.5
    %v2234 = vtanh.pop %v2233
    %v2235 = vadd.f32 %v2234, 1.0
    %v2236 = vmul.f32 %v2235, 0.5
    %v2237 = vmul.f32 %v2231, %v1774
    %v2238 = vmul.f32 %v2227, %v2232
    %v2239 = vadd.f32 %v2237, %v2238
    %v2240 = vtanh.pop %v2239
    %v2241 = vmul.f32 %v2236, %v2240
    %2242 = vmatprep.subr.mxu0 %v19
    %2243 = vmatpush1.msra.mxu0 %v18
    %2244 = vmatprep.subr.mxu0 %v24
    %2245 = vmatpush1.msra.mxu0 %v23
    %2246 = vmatprep.subr.mxu0 %v29
    %2247 = vmatpush1.msra.mxu0 %v28
    %2248 = vmatprep.subr.mxu0 %v34
    %2249 = vmatpush1.msra.mxu0 %v33
    %2250 = vmatprep.subr.mxu0 %v39
    %2251 = vmatpush1.msra.mxu0 %v38
    %2252 = vmatprep.subr.mxu0 %v44
    %2253 = vmatpush1.msra.mxu0 %v43
    %2254 = vmatprep.subr.mxu0 %v49
    %2255 = vmatpush1.msra.mxu0 %v48
    %2256 = vmatprep.subr.mxu0 %v54
    %2257 = vmatpush1.msra.mxu0 %v53
    %2258 = vmatprep.subr.mxu0 %v59
    %2259 = vmatpush1.msra.mxu0 %v58
    %2260 = vmatprep.subr.mxu0 %v64
    %2261 = vmatpush1.msra.mxu0 %v63
    %2262 = vmatprep.subr.mxu0 %v69
    %2263 = vmatpush1.msra.mxu0 %v68
    %2264 = vmatprep.subr.mxu0 %v74
    %2265 = vmatpush1.msra.mxu0 %v73
    %2266 = vmatprep.subr.mxu0 %v79
    %2267 = vmatpush1.msra.mxu0 %v78
    %2268 = vmatprep.subr.mxu0 %v84
    %2269 = vmatpush1.msra.mxu0 %v83
    %2270 = vmatprep.subr.mxu0 %v89
    %2271 = vmatpush1.msra.mxu0 %v88
    %2272 = vmatprep.subr.mxu0 %v94
    %2273 = vmatpush1.msra.mxu0 %v93
    %2274 = vmatprep.subr.mxu0 0.0
    %2275 = vmatpush1.msra.mxu0 0.0
    %2276 = vmatprep.subr.mxu0 0.0
    %2277 = vmatpush1.msra.mxu0 0.0
    %2278 = vmatprep.subr.mxu0 0.0
    %2279 = vmatpush1.msra.mxu0 0.0
    %2280 = vmatprep.subr.mxu0 0.0
    %2281 = vmatpush1.msra.mxu0 0.0
    %2282 = vmatprep.subr.mxu0 0.0
    %2283 = vmatpush1.msra.mxu0 0.0
    %2284 = vmatprep.subr.mxu0 0.0
    %2285 = vmatpush1.msra.mxu0 0.0
    %2286 = vmatprep.subr.mxu0 0.0
    %2287 = vmatpush1.msra.mxu0 0.0
    %2288 = vmatprep.subr.mxu0 0.0
    %2289 = vmatpush1.msra.mxu0 0.0
    %2290 = vmatprep.subr.mxu0 0.0
    %2291 = vmatpush1.msra.mxu0 0.0
    %2292 = vmatprep.subr.mxu0 0.0
    %2293 = vmatpush1.msra.mxu0 0.0
    %2294 = vmatprep.subr.mxu0 0.0
    %2295 = vmatpush1.msra.mxu0 0.0
    %2296 = vmatprep.subr.mxu0 0.0
    %2297 = vmatpush1.msra.mxu0 0.0
    %2298 = vmatprep.subr.mxu0 0.0
    %2299 = vmatpush1.msra.mxu0 0.0
    %2300 = vmatprep.subr.mxu0 0.0
    %2301 = vmatpush1.msra.mxu0 0.0
    %2302 = vmatprep.subr.mxu0 0.0
    %2303 = vmatpush1.msra.mxu0 0.0
    %2304 = vmatprep.subr.mxu0 0.0
    %2305 = vmatpush1.msra.mxu0 0.0
    %2306 = vmatprep.mubr.f32.mxu0 0.0
    %2307 = vmatmul.mubr.f32.gmra.mrb[0].mxu0 %v2241
    %v2308 = vpop.f32.mrb[0].mxu0
    %v2309 = vadd.f32 0.0, %v2308
    %v2310 = vpop.f32.mrb[0].mxu0
    %v2311 = vadd.f32 0.0, %v2310
    %2312 = vdwg.mxu0
    %2313 = vmatprep.subr.mxu0 %v21
    %2314 = vmatpush1.msra.mxu0 %v20
    %2315 = vmatprep.subr.mxu0 %v26
    %2316 = vmatpush1.msra.mxu0 %v25
    %2317 = vmatprep.subr.mxu0 %v31
    %2318 = vmatpush1.msra.mxu0 %v30
    %2319 = vmatprep.subr.mxu0 %v36
    %2320 = vmatpush1.msra.mxu0 %v35
    %2321 = vmatprep.subr.mxu0 %v41
    %2322 = vmatpush1.msra.mxu0 %v40
    %2323 = vmatprep.subr.mxu0 %v46
    %2324 = vmatpush1.msra.mxu0 %v45
    %2325 = vmatprep.subr.mxu0 %v51
    %2326 = vmatpush1.msra.mxu0 %v50
    %2327 = vmatprep.subr.mxu0 %v56
    %2328 = vmatpush1.msra.mxu0 %v55
    %2329 = vmatprep.subr.mxu0 %v61
    %2330 = vmatpush1.msra.mxu0 %v60
    %2331 = vmatprep.subr.mxu0 %v66
    %2332 = vmatpush1.msra.mxu0 %v65
    %2333 = vmatprep.subr.mxu0 %v71
    %2334 = vmatpush1.msra.mxu0 %v70
    %2335 = vmatprep.subr.mxu0 %v76
    %2336 = vmatpush1.msra.mxu0 %v75
    %2337 = vmatprep.subr.mxu0 %v81
    %2338 = vmatpush1.msra.mxu0 %v80
    %2339 = vmatprep.subr.mxu0 %v86
    %2340 = vmatpush1.msra.mxu0 %v85
    %2341 = vmatprep.subr.mxu0 %v91
    %2342 = vmatpush1.msra.mxu0 %v90
    %2343 = vmatprep.subr.mxu0 %v96
    %2344 = vmatpush1.msra.mxu0 %v95
    %2345 = vmatprep.subr.mxu0 0.0
    %2346 = vmatpush1.msra.mxu0 0.0
    %2347 = vmatprep.subr.mxu0 0.0
    %2348 = vmatpush1.msra.mxu0 0.0
    %2349 = vmatprep.subr.mxu0 0.0
    %2350 = vmatpush1.msra.mxu0 0.0
    %2351 = vmatprep.subr.mxu0 0.0
    %2352 = vmatpush1.msra.mxu0 0.0
    %2353 = vmatprep.subr.mxu0 0.0
    %2354 = vmatpush1.msra.mxu0 0.0
    %2355 = vmatprep.subr.mxu0 0.0
    %2356 = vmatpush1.msra.mxu0 0.0
    %2357 = vmatprep.subr.mxu0 0.0
    %2358 = vmatpush1.msra.mxu0 0.0
    %2359 = vmatprep.subr.mxu0 0.0
    %2360 = vmatpush1.msra.mxu0 0.0
    %2361 = vmatprep.subr.mxu0 0.0
    %2362 = vmatpush1.msra.mxu0 0.0
    %2363 = vmatprep.subr.mxu0 0.0
    %2364 = vmatpush1.msra.mxu0 0.0
    %2365 = vmatprep.subr.mxu0 0.0
    %2366 = vmatpush1.msra.mxu0 0.0
    %2367 = vmatprep.subr.mxu0 0.0
    %2368 = vmatpush1.msra.mxu0 0.0
    %2369 = vmatprep.subr.mxu0 0.0
    %2370 = vmatpush1.msra.mxu0 0.0
    %2371 = vmatprep.subr.mxu0 0.0
    %2372 = vmatpush1.msra.mxu0 0.0
    %2373 = vmatprep.subr.mxu0 0.0
    %2374 = vmatpush1.msra.mxu0 0.0
    %2375 = vmatprep.subr.mxu0 0.0
    %2376 = vmatpush1.msra.mxu0 0.0
    %2377 = vmatprep.mubr.f32.mxu0 0.0
    %2378 = vmatmul.mubr.f32.gmra.mrb[0].mxu0 %v2241
    %v2379 = vpop.f32.mrb[0].mxu0
    %v2380 = vadd.f32 0.0, %v2379
    %v2381 = vpop.f32.mrb[0].mxu0
    %v2382 = vadd.f32 0.0, %v2381
    %2383 = vdwg.mxu0
    %2384 = vmatprep.subr.mxu0 0.0
    %2385 = vmatpush1.msra.mxu0 %v22
    %2386 = vmatprep.subr.mxu0 0.0
    %2387 = vmatpush1.msra.mxu0 %v27
    %2388 = vmatprep.subr.mxu0 0.0
    %2389 = vmatpush1.msra.mxu0 %v32
    %2390 = vmatprep.subr.mxu0 0.0
    %2391 = vmatpush1.msra.mxu0 %v37
    %2392 = vmatprep.subr.mxu0 0.0
    %2393 = vmatpush1.msra.mxu0 %v42
    %2394 = vmatprep.subr.mxu0 0.0
    %2395 = vmatpush1.msra.mxu0 %v47
    %2396 = vmatprep.subr.mxu0 0.0
    %2397 = vmatpush1.msra.mxu0 %v52
    %2398 = vmatprep.subr.mxu0 0.0
    %2399 = vmatpush1.msra.mxu0 %v57
    %2400 = vmatprep.subr.mxu0 0.0
    %2401 = vmatpush1.msra.mxu0 %v62
    %2402 = vmatprep.subr.mxu0 0.0
    %2403 = vmatpush1.msra.mxu0 %v67
    %2404 = vmatprep.subr.mxu0 0.0
    %2405 = vmatpush1.msra.mxu0 %v72
    %2406 = vmatprep.subr.mxu0 0.0
    %2407 = vmatpush1.msra.mxu0 %v77
    %2408 = vmatprep.subr.mxu0 0.0
    %2409 = vmatpush1.msra.mxu0 %v82
    %2410 = vmatprep.subr.mxu0 0.0
    %2411 = vmatpush1.msra.mxu0 %v87
    %2412 = vmatprep.subr.mxu0 0.0
    %2413 = vmatpush1.msra.mxu0 %v92
    %2414 = vmatprep.subr.mxu0 0.0
    %2415 = vmatpush1.msra.mxu0 %v97
    %2416 = vmatprep.subr.mxu0 0.0
    %2417 = vmatpush1.msra.mxu0 0.0
    %2418 = vmatprep.subr.mxu0 0.0
    %2419 = vmatpush1.msra.mxu0 0.0
    %2420 = vmatprep.subr.mxu0 0.0
    %2421 = vmatpush1.msra.mxu0 0.0
    %2422 = vmatprep.subr.mxu0 0.0
    %2423 = vmatpush1.msra.mxu0 0.0
    %2424 = vmatprep.subr.mxu0 0.0
    %2425 = vmatpush1.msra.mxu0 0.0
    %2426 = vmatprep.subr.mxu0 0.0
    %2427 = vmatpush1.msra.mxu0 0.0
    %2428 = vmatprep.subr.mxu0 0.0
    %2429 = vmatpush1.msra.mxu0 0.0
    %2430 = vmatprep.subr.mxu0 0.0
    %2431 = vmatpush1.msra.mxu0 0.0
    %2432 = vmatprep.subr.mxu0 0.0
    %2433 = vmatpush1.msra.mxu0 0.0
    %2434 = vmatprep.subr.mxu0 0.0
    %2435 = vmatpush1.msra.mxu0 0.0
    %2436 = vmatprep.subr.mxu0 0.0
    %2437 = vmatpush1.msra.mxu0 0.0
    %2438 = vmatprep.subr.mxu0 0.0
    %2439 = vmatpush1.msra.mxu0 0.0
    %2440 = vmatprep.subr.mxu0 0.0
    %2441 = vmatpush1.msra.mxu0 0.0
    %2442 = vmatprep.subr.mxu0 0.0
    %2443 = vmatpush1.msra.mxu0 0.0
    %2444 = vmatprep.subr.mxu0 0.0
    %2445 = vmatpush1.msra.mxu0 0.0
    %2446 = vmatprep.subr.mxu0 0.0
    %2447 = vmatpush1.msra.mxu0 0.0
    %2448 = vmatprep.mubr.f32.mxu0 0.0
    %2449 = vmatmul.mubr.f32.gmra.mrb[0].mxu0 %v2241
    %v2450 = vpop.f32.mrb[0].mxu0
    %v2451 = vadd.f32 0.0, %v2450
    %v2452 = vpop.f32.mrb[0].mxu0
    %2453 = vdwg.mxu0
    %v2454 = vadd.f32 %v305, %v2451
    %v2455 = vadd.f32 %v306, %v2451
    %v2456 = vadd.f32 %v307, %v2451
    %v2457 = vadd.f32 %v308, %v2451
    %v2458 = vadd.f32 %v309, %v2451
    %v2459 = vadd.f32 %v310, %v2451
    %v2460 = vadd.f32 %v311, %v2451
    %v2461 = vadd.f32 %v312, %v2451
    %v2462 = vtanh.pop %v2454
    %v2463 = vtanh.pop %v2455
    %v2464 = vtanh.pop %v2456
    %v2465 = vtanh.pop %v2457
    %v2466 = vtanh.pop %v2458
    %v2467 = vtanh.pop %v2459
    %v2468 = vtanh.pop %v2460
    %v2469 = vtanh.pop %v2461
    %v2470 = vmul.f32 %v2462, %v166
    %v2471 = vmul.f32 %v2463, %v166
    %v2472 = vmul.f32 %v2464, %v166
    %v2473 = vmul.f32 %v2465, %v166
    %v2474 = vmul.f32 %v2466, %v166
    %v2475 = vmul.f32 %v2467, %v166
    %v2476 = vmul.f32 %v2468, %v166
    %v2477 = vmul.f32 %v2469, %v166
    %2478 = vadd.xlane.f32.xlu0 %v2470
    %v2479 = vpop.xlane.xlu0 %2478
    %2480 = vadd.xlane.f32.xlu0 %v2471
    %v2481 = vpop.xlane.xlu0 %2480
    %2482 = vadd.xlane.f32.xlu0 %v2472
    %v2483 = vpop.xlane.xlu0 %2482
    %2484 = vadd.xlane.f32.xlu0 %v2473
    %v2485 = vpop.xlane.xlu0 %2484
    %2486 = vadd.xlane.f32.xlu0 %v2474
    %v2487 = vpop.xlane.xlu0 %2486
    %2488 = vadd.xlane.f32.xlu0 %v2475
    %v2489 = vpop.xlane.xlu0 %2488
    %2490 = vadd.xlane.f32.xlu0 %v2476
    %v2491 = vpop.xlane.xlu0 %2490
    %2492 = vadd.xlane.f32.xlu0 %v2477
    %v2493 = vpop.xlane.xlu0 %2492
    %v2495 = vlaneseq
    %v2496 = vshrl.u32 %v2495, 7
    %v2497 = vsub.s32 0, %v2496
    %v2498 = vrot.slane %v2203, %v2497
    %2500 = vbcast.lane.b32.xlu0 %v2498, 256
    %v2501 = vpop.permute.xlu0 %2500
    %v2502 = vlaneseq
    %v2503 = vshrl.u32 %v2502, 7
    %v2504 = vsub.s32 1, %v2503
    %v2505 = vrot.slane %v2203, %v2504
    %2507 = vbcast.lane.b32.xlu0 %v2505, 256
    %v2508 = vpop.permute.xlu0 %2507
    %v2509 = vlaneseq
    %v2510 = vshrl.u32 %v2509, 7
    %v2511 = vsub.s32 2, %v2510
    %v2512 = vrot.slane %v2203, %v2511
    %2514 = vbcast.lane.b32.xlu0 %v2512, 256
    %v2515 = vpop.permute.xlu0 %2514
    %v2516 = vlaneseq
    %v2517 = vshrl.u32 %v2516, 7
    %v2518 = vsub.s32 3, %v2517
    %v2519 = vrot.slane %v2203, %v2518
    %2521 = vbcast.lane.b32.xlu0 %v2519, 256
    %v2522 = vpop.permute.xlu0 %2521
    %v2523 = vlaneseq
    %v2524 = vshrl.u32 %v2523, 7
    %v2525 = vsub.s32 4, %v2524
    %v2526 = vrot.slane %v2203, %v2525
    %2528 = vbcast.lane.b32.xlu0 %v2526, 256
    %v2529 = vpop.permute.xlu0 %2528
    %v2530 = vlaneseq
    %v2531 = vshrl.u32 %v2530, 7
    %v2532 = vsub.s32 5, %v2531
    %v2533 = vrot.slane %v2203, %v2532
    %2535 = vbcast.lane.b32.xlu0 %v2533, 256
    %v2536 = vpop.permute.xlu0 %2535
    %v2537 = vlaneseq
    %v2538 = vshrl.u32 %v2537, 7
    %v2539 = vsub.s32 6, %v2538
    %v2540 = vrot.slane %v2203, %v2539
    %2542 = vbcast.lane.b32.xlu0 %v2540, 256
    %v2543 = vpop.permute.xlu0 %2542
    %v2544 = vlaneseq
    %v2545 = vshrl.u32 %v2544, 7
    %v2546 = vsub.s32 7, %v2545
    %v2547 = vrot.slane %v2203, %v2546
    %2549 = vbcast.lane.b32.xlu0 %v2547, 256
    %v2550 = vpop.permute.xlu0 %2549
    %v2559 = vadd.f32 %v2479, %v2501
    %v2560 = vadd.f32 %v2481, %v2508
    %v2561 = vadd.f32 %v2483, %v2515
    %v2562 = vadd.f32 %v2485, %v2522
    %v2563 = vadd.f32 %v2487, %v2529
    %v2564 = vadd.f32 %v2489, %v2536
    %v2565 = vadd.f32 %v2491, %v2543
    %v2566 = vadd.f32 %v2493, %v2550
    %v2567 = vsel %vm668, %v2559, -inf
    %v2568 = vsel %vm668, %v2560, -inf
    %v2569 = vsel %vm668, %v2561, -inf
    %v2570 = vsel %vm668, %v2562, -inf
    %v2571 = vsel %vm668, %v2563, -inf
    %v2572 = vmax.f32 %v2567, %v2571
    %v2573 = vsel %vm668, %v2564, -inf
    %v2574 = vmax.f32 %v2568, %v2573
    %v2575 = vsel %vm668, %v2565, -inf
    %v2576 = vmax.f32 %v2569, %v2575
    %v2577 = vsel %vm668, %v2566, -inf
    %v2578 = vmax.f32 %v2570, %v2577
    %v2579 = vmax.f32 %v2572, %v2574
    %v2580 = vmax.f32 %v2576, %v2578
    %v2581 = vmax.f32 %v2579, %v2580
    %vm2582 = vcmp.ge.f32.partialorder %v2559, %v2581
    %vm2583 = vcmp.ge.f32.partialorder %v2560, %v2581
    %vm2584 = vcmp.ge.f32.partialorder %v2561, %v2581
    %vm2585 = vcmp.ge.f32.partialorder %v2562, %v2581
    %vm2586 = vcmp.ge.f32.partialorder %v2563, %v2581
    %vm2587 = vcmp.ge.f32.partialorder %v2564, %v2581
    %vm2588 = vcmp.ge.f32.partialorder %v2565, %v2581
    %vm2589 = vcmp.ge.f32.partialorder %v2566, %v2581
    %v2590 = vsel %vm2582, %v695, 8
    %v2591 = vsel %vm2583, %v699, 8
    %v2592 = vsel %vm2584, %v703, 8
    %v2593 = vsel %vm2585, %v707, 8
    %v2594 = vsel %vm2586, %v711, 8
    %v2595 = vsel %vm2587, %v715, 8
    %v2596 = vsel %vm2588, %v719, 8
    %v2597 = vsel %vm2589, %v723, 8
    %v2598 = vsel %vm668, %v2590, 2147483647
    %v2599 = vsel %vm668, %v2591, 2147483647
    %v2600 = vsel %vm668, %v2592, 2147483647
    %v2601 = vsel %vm668, %v2593, 2147483647
    %v2602 = vsel %vm668, %v2594, 2147483647
    %vm2603 = vcmp.lt.s32.totalorder %v2598, %v2602
    %v2604 = vsel %vm2603, %v2598, %v2602
    %v2605 = vsel %vm668, %v2595, 2147483647
    %vm2606 = vcmp.lt.s32.totalorder %v2599, %v2605
    %v2607 = vsel %vm2606, %v2599, %v2605
    %v2608 = vsel %vm668, %v2596, 2147483647
    %vm2609 = vcmp.lt.s32.totalorder %v2600, %v2608
    %v2610 = vsel %vm2609, %v2600, %v2608
    %v2611 = vsel %vm668, %v2597, 2147483647
    %vm2612 = vcmp.lt.s32.totalorder %v2601, %v2611
    %v2613 = vsel %vm2612, %v2601, %v2611
    %vm2614 = vcmp.lt.s32.totalorder %v2604, %v2607
    %v2615 = vsel %vm2614, %v2604, %v2607
    %vm2616 = vcmp.lt.s32.totalorder %v2610, %v2613
    %v2617 = vsel %vm2616, %v2610, %v2613
    %vm2618 = vcmp.lt.s32.totalorder %v2615, %v2617
    %v2619 = vsel %vm2618, %v2615, %v2617
    %2620 = vset.pattern.permute.xlu0 0
    %2621 = vperm.xlu0 %2620, %v2619
    %v2622 = vpop.permute.xlu0 %2621
    %v2623 = vlaneseq
    %v2624 = vshrl.u32 %v2623, 7
    %v2625 = vsub.s32 %v317, %v2624
    %v2626 = vrot.slane %v2622, %v2625
    %v2627 = vsel %vm761, %v2626, %v2626
    %v2628 = vsel %vm763, %v2626, %v2627
    %v2629 = vsel %vm765, %v2626, %v2628
    %v2630 = vsel %vm767, %v2626, %v2629
    %v2631 = vsel %vm769, %v2626, %v2630
    %v2632 = vsel %vm771, %v2626, %v2631
    %vm2633 = vcmp.eq.s32.totalorder %v314, %v2632
    %v2634 = vsel %vm2633, 1, 0
    %v2635 = vcvt.s32.f32 %v2634
    %v2636 = vmul.f32 %v2635, %v15
    %v2637 = vsel %vm325, %v2636, 0.0
    %v2638 = vrot.slane %v2637, 4
    %v2639 = vadd.f32 %v2637, %v2638
    %v2640 = vrot.slane %v2639, 2
    %v2641 = vadd.f32 %v2639, %v2640
    %v2642 = vrot.slane %v2641, 1
    %v2643 = vadd.f32 %v2641, %v2642
    %v2644 = vmul.f32 %v2635, %v17
    %v2645 = vsel %vm325, %v2644, 0.0
    %v2646 = vrot.slane %v2645, 4
    %v2647 = vadd.f32 %v2645, %v2646
    %v2648 = vrot.slane %v2647, 2
    %v2649 = vadd.f32 %v2647, %v2648
    %v2650 = vrot.slane %v2649, 1
    %v2651 = vadd.f32 %v2649, %v2650
    %v2652 = vsub.f32 %v2643, %v2178
    %v2653 = vmul.f32 %v2652, %v2652
    %v2654 = vadd.f32 %v2653, 0.0
    %v2655 = vsub.f32 %v2651, %v2186
    %v2656 = vmul.f32 %v2655, %v2655
    %v2657 = vadd.f32 %v2654, %v2656
    %v2658 = vmax.f32 %v2193, %v2657
    %v2659 = vsel %vm2633, -inf, %v2203
    %v2660 = vmul.f32 %v320, %v2643
    %v2661 = vsel %vm325, %v2660, 0.0
    %2662 = vadd.xlane.f32.xlu0 %v2661
    %v2663 = vpop.xlane.xlu0 %2662
    %v2664 = vmul.f32 %v320, %v2651
    %v2665 = vsel %vm325, %v2664, 0.0
    %2666 = vadd.xlane.f32.xlu0 %v2665
    %v2667 = vpop.xlane.xlu0 %2666
    %v2668 = vsel %vm315, 0.0, %v2659
    %v2669 = vmul.f32 %v2663, %v103
    %v2670 = vmul.f32 %v2663, %v107
    %v2671 = vmul.f32 %v2663, %v111
    %v2672 = vmul.f32 %v2663, %v115
    %v2673 = vadd.f32 %v149, %v2669
    %v2674 = vadd.f32 %v153, %v2670
    %v2675 = vadd.f32 %v157, %v2671
    %v2676 = vadd.f32 %v161, %v2672
    %v2677 = vmul.f32 %v2667, %v126
    %v2678 = vmul.f32 %v2667, %v130
    %v2679 = vmul.f32 %v2667, %v134
    %v2680 = vmul.f32 %v2667, %v138
    %v2681 = vadd.f32 %v2673, %v2677
    %v2682 = vadd.f32 %v2674, %v2678
    %v2683 = vadd.f32 %v2675, %v2679
    %v2684 = vadd.f32 %v2676, %v2680
    %v2685 = vadd.f32 %v2681, %v2309
    %v2686 = vadd.f32 %v2682, %v2311
    %v2687 = vadd.f32 %v2683, %v2380
    %v2688 = vadd.f32 %v2684, %v2382
    %v2689 = vmul.f32 %v2685, 0.5
    %v2690 = vtanh.pop %v2689
    %v2691 = vadd.f32 %v2690, 1.0
    %v2692 = vmul.f32 %v2691, 0.5
    %v2693 = vmul.f32 %v2686, 0.5
    %v2694 = vtanh.pop %v2693
    %v2695 = vadd.f32 %v2694, 1.0
    %v2696 = vmul.f32 %v2695, 0.5
    %v2697 = vtanh.pop %v2687
    %v2698 = vmul.f32 %v2688, 0.5
    %v2699 = vtanh.pop %v2698
    %v2700 = vadd.f32 %v2699, 1.0
    %v2701 = vmul.f32 %v2700, 0.5
    %v2702 = vmul.f32 %v2696, %v2239
    %v2703 = vmul.f32 %v2692, %v2697
    %v2704 = vadd.f32 %v2702, %v2703
    %v2705 = vtanh.pop %v2704
    %v2706 = vmul.f32 %v2701, %v2705
    %2707 = vmatprep.subr.mxu0 %v19
    %2708 = vmatpush1.msra.mxu0 %v18
    %2709 = vmatprep.subr.mxu0 %v24
    %2710 = vmatpush1.msra.mxu0 %v23
    %2711 = vmatprep.subr.mxu0 %v29
    %2712 = vmatpush1.msra.mxu0 %v28
    %2713 = vmatprep.subr.mxu0 %v34
    %2714 = vmatpush1.msra.mxu0 %v33
    %2715 = vmatprep.subr.mxu0 %v39
    %2716 = vmatpush1.msra.mxu0 %v38
    %2717 = vmatprep.subr.mxu0 %v44
    %2718 = vmatpush1.msra.mxu0 %v43
    %2719 = vmatprep.subr.mxu0 %v49
    %2720 = vmatpush1.msra.mxu0 %v48
    %2721 = vmatprep.subr.mxu0 %v54
    %2722 = vmatpush1.msra.mxu0 %v53
    %2723 = vmatprep.subr.mxu0 %v59
    %2724 = vmatpush1.msra.mxu0 %v58
    %2725 = vmatprep.subr.mxu0 %v64
    %2726 = vmatpush1.msra.mxu0 %v63
    %2727 = vmatprep.subr.mxu0 %v69
    %2728 = vmatpush1.msra.mxu0 %v68
    %2729 = vmatprep.subr.mxu0 %v74
    %2730 = vmatpush1.msra.mxu0 %v73
    %2731 = vmatprep.subr.mxu0 %v79
    %2732 = vmatpush1.msra.mxu0 %v78
    %2733 = vmatprep.subr.mxu0 %v84
    %2734 = vmatpush1.msra.mxu0 %v83
    %2735 = vmatprep.subr.mxu0 %v89
    %2736 = vmatpush1.msra.mxu0 %v88
    %2737 = vmatprep.subr.mxu0 %v94
    %2738 = vmatpush1.msra.mxu0 %v93
    %2739 = vmatprep.subr.mxu0 0.0
    %2740 = vmatpush1.msra.mxu0 0.0
    %2741 = vmatprep.subr.mxu0 0.0
    %2742 = vmatpush1.msra.mxu0 0.0
    %2743 = vmatprep.subr.mxu0 0.0
    %2744 = vmatpush1.msra.mxu0 0.0
    %2745 = vmatprep.subr.mxu0 0.0
    %2746 = vmatpush1.msra.mxu0 0.0
    %2747 = vmatprep.subr.mxu0 0.0
    %2748 = vmatpush1.msra.mxu0 0.0
    %2749 = vmatprep.subr.mxu0 0.0
    %2750 = vmatpush1.msra.mxu0 0.0
    %2751 = vmatprep.subr.mxu0 0.0
    %2752 = vmatpush1.msra.mxu0 0.0
    %2753 = vmatprep.subr.mxu0 0.0
    %2754 = vmatpush1.msra.mxu0 0.0
    %2755 = vmatprep.subr.mxu0 0.0
    %2756 = vmatpush1.msra.mxu0 0.0
    %2757 = vmatprep.subr.mxu0 0.0
    %2758 = vmatpush1.msra.mxu0 0.0
    %2759 = vmatprep.subr.mxu0 0.0
    %2760 = vmatpush1.msra.mxu0 0.0
    %2761 = vmatprep.subr.mxu0 0.0
    %2762 = vmatpush1.msra.mxu0 0.0
    %2763 = vmatprep.subr.mxu0 0.0
    %2764 = vmatpush1.msra.mxu0 0.0
    %2765 = vmatprep.subr.mxu0 0.0
    %2766 = vmatpush1.msra.mxu0 0.0
    %2767 = vmatprep.subr.mxu0 0.0
    %2768 = vmatpush1.msra.mxu0 0.0
    %2769 = vmatprep.subr.mxu0 0.0
    %2770 = vmatpush1.msra.mxu0 0.0
    %2771 = vmatprep.mubr.f32.mxu0 0.0
    %2772 = vmatmul.mubr.f32.gmra.mrb[0].mxu0 %v2706
    %v2773 = vpop.f32.mrb[0].mxu0
    %v2774 = vadd.f32 0.0, %v2773
    %v2775 = vpop.f32.mrb[0].mxu0
    %v2776 = vadd.f32 0.0, %v2775
    %2777 = vdwg.mxu0
    %2778 = vmatprep.subr.mxu0 %v21
    %2779 = vmatpush1.msra.mxu0 %v20
    %2780 = vmatprep.subr.mxu0 %v26
    %2781 = vmatpush1.msra.mxu0 %v25
    %2782 = vmatprep.subr.mxu0 %v31
    %2783 = vmatpush1.msra.mxu0 %v30
    %2784 = vmatprep.subr.mxu0 %v36
    %2785 = vmatpush1.msra.mxu0 %v35
    %2786 = vmatprep.subr.mxu0 %v41
    %2787 = vmatpush1.msra.mxu0 %v40
    %2788 = vmatprep.subr.mxu0 %v46
    %2789 = vmatpush1.msra.mxu0 %v45
    %2790 = vmatprep.subr.mxu0 %v51
    %2791 = vmatpush1.msra.mxu0 %v50
    %2792 = vmatprep.subr.mxu0 %v56
    %2793 = vmatpush1.msra.mxu0 %v55
    %2794 = vmatprep.subr.mxu0 %v61
    %2795 = vmatpush1.msra.mxu0 %v60
    %2796 = vmatprep.subr.mxu0 %v66
    %2797 = vmatpush1.msra.mxu0 %v65
    %2798 = vmatprep.subr.mxu0 %v71
    %2799 = vmatpush1.msra.mxu0 %v70
    %2800 = vmatprep.subr.mxu0 %v76
    %2801 = vmatpush1.msra.mxu0 %v75
    %2802 = vmatprep.subr.mxu0 %v81
    %2803 = vmatpush1.msra.mxu0 %v80
    %2804 = vmatprep.subr.mxu0 %v86
    %2805 = vmatpush1.msra.mxu0 %v85
    %2806 = vmatprep.subr.mxu0 %v91
    %2807 = vmatpush1.msra.mxu0 %v90
    %2808 = vmatprep.subr.mxu0 %v96
    %2809 = vmatpush1.msra.mxu0 %v95
    %2810 = vmatprep.subr.mxu0 0.0
    %2811 = vmatpush1.msra.mxu0 0.0
    %2812 = vmatprep.subr.mxu0 0.0
    %2813 = vmatpush1.msra.mxu0 0.0
    %2814 = vmatprep.subr.mxu0 0.0
    %2815 = vmatpush1.msra.mxu0 0.0
    %2816 = vmatprep.subr.mxu0 0.0
    %2817 = vmatpush1.msra.mxu0 0.0
    %2818 = vmatprep.subr.mxu0 0.0
    %2819 = vmatpush1.msra.mxu0 0.0
    %2820 = vmatprep.subr.mxu0 0.0
    %2821 = vmatpush1.msra.mxu0 0.0
    %2822 = vmatprep.subr.mxu0 0.0
    %2823 = vmatpush1.msra.mxu0 0.0
    %2824 = vmatprep.subr.mxu0 0.0
    %2825 = vmatpush1.msra.mxu0 0.0
    %2826 = vmatprep.subr.mxu0 0.0
    %2827 = vmatpush1.msra.mxu0 0.0
    %2828 = vmatprep.subr.mxu0 0.0
    %2829 = vmatpush1.msra.mxu0 0.0
    %2830 = vmatprep.subr.mxu0 0.0
    %2831 = vmatpush1.msra.mxu0 0.0
    %2832 = vmatprep.subr.mxu0 0.0
    %2833 = vmatpush1.msra.mxu0 0.0
    %2834 = vmatprep.subr.mxu0 0.0
    %2835 = vmatpush1.msra.mxu0 0.0
    %2836 = vmatprep.subr.mxu0 0.0
    %2837 = vmatpush1.msra.mxu0 0.0
    %2838 = vmatprep.subr.mxu0 0.0
    %2839 = vmatpush1.msra.mxu0 0.0
    %2840 = vmatprep.subr.mxu0 0.0
    %2841 = vmatpush1.msra.mxu0 0.0
    %2842 = vmatprep.mubr.f32.mxu0 0.0
    %2843 = vmatmul.mubr.f32.gmra.mrb[0].mxu0 %v2706
    %v2844 = vpop.f32.mrb[0].mxu0
    %v2845 = vadd.f32 0.0, %v2844
    %v2846 = vpop.f32.mrb[0].mxu0
    %v2847 = vadd.f32 0.0, %v2846
    %2848 = vdwg.mxu0
    %2849 = vmatprep.subr.mxu0 0.0
    %2850 = vmatpush1.msra.mxu0 %v22
    %2851 = vmatprep.subr.mxu0 0.0
    %2852 = vmatpush1.msra.mxu0 %v27
    %2853 = vmatprep.subr.mxu0 0.0
    %2854 = vmatpush1.msra.mxu0 %v32
    %2855 = vmatprep.subr.mxu0 0.0
    %2856 = vmatpush1.msra.mxu0 %v37
    %2857 = vmatprep.subr.mxu0 0.0
    %2858 = vmatpush1.msra.mxu0 %v42
    %2859 = vmatprep.subr.mxu0 0.0
    %2860 = vmatpush1.msra.mxu0 %v47
    %2861 = vmatprep.subr.mxu0 0.0
    %2862 = vmatpush1.msra.mxu0 %v52
    %2863 = vmatprep.subr.mxu0 0.0
    %2864 = vmatpush1.msra.mxu0 %v57
    %2865 = vmatprep.subr.mxu0 0.0
    %2866 = vmatpush1.msra.mxu0 %v62
    %2867 = vmatprep.subr.mxu0 0.0
    %2868 = vmatpush1.msra.mxu0 %v67
    %2869 = vmatprep.subr.mxu0 0.0
    %2870 = vmatpush1.msra.mxu0 %v72
    %2871 = vmatprep.subr.mxu0 0.0
    %2872 = vmatpush1.msra.mxu0 %v77
    %2873 = vmatprep.subr.mxu0 0.0
    %2874 = vmatpush1.msra.mxu0 %v82
    %2875 = vmatprep.subr.mxu0 0.0
    %2876 = vmatpush1.msra.mxu0 %v87
    %2877 = vmatprep.subr.mxu0 0.0
    %2878 = vmatpush1.msra.mxu0 %v92
    %2879 = vmatprep.subr.mxu0 0.0
    %2880 = vmatpush1.msra.mxu0 %v97
    %2881 = vmatprep.subr.mxu0 0.0
    %2882 = vmatpush1.msra.mxu0 0.0
    %2883 = vmatprep.subr.mxu0 0.0
    %2884 = vmatpush1.msra.mxu0 0.0
    %2885 = vmatprep.subr.mxu0 0.0
    %2886 = vmatpush1.msra.mxu0 0.0
    %2887 = vmatprep.subr.mxu0 0.0
    %2888 = vmatpush1.msra.mxu0 0.0
    %2889 = vmatprep.subr.mxu0 0.0
    %2890 = vmatpush1.msra.mxu0 0.0
    %2891 = vmatprep.subr.mxu0 0.0
    %2892 = vmatpush1.msra.mxu0 0.0
    %2893 = vmatprep.subr.mxu0 0.0
    %2894 = vmatpush1.msra.mxu0 0.0
    %2895 = vmatprep.subr.mxu0 0.0
    %2896 = vmatpush1.msra.mxu0 0.0
    %2897 = vmatprep.subr.mxu0 0.0
    %2898 = vmatpush1.msra.mxu0 0.0
    %2899 = vmatprep.subr.mxu0 0.0
    %2900 = vmatpush1.msra.mxu0 0.0
    %2901 = vmatprep.subr.mxu0 0.0
    %2902 = vmatpush1.msra.mxu0 0.0
    %2903 = vmatprep.subr.mxu0 0.0
    %2904 = vmatpush1.msra.mxu0 0.0
    %2905 = vmatprep.subr.mxu0 0.0
    %2906 = vmatpush1.msra.mxu0 0.0
    %2907 = vmatprep.subr.mxu0 0.0
    %2908 = vmatpush1.msra.mxu0 0.0
    %2909 = vmatprep.subr.mxu0 0.0
    %2910 = vmatpush1.msra.mxu0 0.0
    %2911 = vmatprep.subr.mxu0 0.0
    %2912 = vmatpush1.msra.mxu0 0.0
    %2913 = vmatprep.mubr.f32.mxu0 0.0
    %2914 = vmatmul.mubr.f32.gmra.mrb[0].mxu0 %v2706
    %v2915 = vpop.f32.mrb[0].mxu0
    %v2916 = vadd.f32 0.0, %v2915
    %v2917 = vpop.f32.mrb[0].mxu0
    %2918 = vdwg.mxu0
    %v2919 = vadd.f32 %v305, %v2916
    %v2920 = vadd.f32 %v306, %v2916
    %v2921 = vadd.f32 %v307, %v2916
    %v2922 = vadd.f32 %v308, %v2916
    %v2923 = vadd.f32 %v309, %v2916
    %v2924 = vadd.f32 %v310, %v2916
    %v2925 = vadd.f32 %v311, %v2916
    %v2926 = vadd.f32 %v312, %v2916
    %v2927 = vtanh.pop %v2919
    %v2928 = vtanh.pop %v2920
    %v2929 = vtanh.pop %v2921
    %v2930 = vtanh.pop %v2922
    %v2931 = vtanh.pop %v2923
    %v2932 = vtanh.pop %v2924
    %v2933 = vtanh.pop %v2925
    %v2934 = vtanh.pop %v2926
    %v2935 = vmul.f32 %v2927, %v166
    %v2936 = vmul.f32 %v2928, %v166
    %v2937 = vmul.f32 %v2929, %v166
    %v2938 = vmul.f32 %v2930, %v166
    %v2939 = vmul.f32 %v2931, %v166
    %v2940 = vmul.f32 %v2932, %v166
    %v2941 = vmul.f32 %v2933, %v166
    %v2942 = vmul.f32 %v2934, %v166
    %2943 = vadd.xlane.f32.xlu0 %v2935
    %v2944 = vpop.xlane.xlu0 %2943
    %2945 = vadd.xlane.f32.xlu0 %v2936
    %v2946 = vpop.xlane.xlu0 %2945
    %2947 = vadd.xlane.f32.xlu0 %v2937
    %v2948 = vpop.xlane.xlu0 %2947
    %2949 = vadd.xlane.f32.xlu0 %v2938
    %v2950 = vpop.xlane.xlu0 %2949
    %2951 = vadd.xlane.f32.xlu0 %v2939
    %v2952 = vpop.xlane.xlu0 %2951
    %2953 = vadd.xlane.f32.xlu0 %v2940
    %v2954 = vpop.xlane.xlu0 %2953
    %2955 = vadd.xlane.f32.xlu0 %v2941
    %v2956 = vpop.xlane.xlu0 %2955
    %2957 = vadd.xlane.f32.xlu0 %v2942
    %v2958 = vpop.xlane.xlu0 %2957
    %v2960 = vlaneseq
    %v2961 = vshrl.u32 %v2960, 7
    %v2962 = vsub.s32 0, %v2961
    %v2963 = vrot.slane %v2668, %v2962
    %2965 = vbcast.lane.b32.xlu0 %v2963, 256
    %v2966 = vpop.permute.xlu0 %2965
    %v2967 = vlaneseq
    %v2968 = vshrl.u32 %v2967, 7
    %v2969 = vsub.s32 1, %v2968
    %v2970 = vrot.slane %v2668, %v2969
    %2972 = vbcast.lane.b32.xlu0 %v2970, 256
    %v2973 = vpop.permute.xlu0 %2972
    %v2974 = vlaneseq
    %v2975 = vshrl.u32 %v2974, 7
    %v2976 = vsub.s32 2, %v2975
    %v2977 = vrot.slane %v2668, %v2976
    %2979 = vbcast.lane.b32.xlu0 %v2977, 256
    %v2980 = vpop.permute.xlu0 %2979
    %v2981 = vlaneseq
    %v2982 = vshrl.u32 %v2981, 7
    %v2983 = vsub.s32 3, %v2982
    %v2984 = vrot.slane %v2668, %v2983
    %2986 = vbcast.lane.b32.xlu0 %v2984, 256
    %v2987 = vpop.permute.xlu0 %2986
    %v2988 = vlaneseq
    %v2989 = vshrl.u32 %v2988, 7
    %v2990 = vsub.s32 4, %v2989
    %v2991 = vrot.slane %v2668, %v2990
    %2993 = vbcast.lane.b32.xlu0 %v2991, 256
    %v2994 = vpop.permute.xlu0 %2993
    %v2995 = vlaneseq
    %v2996 = vshrl.u32 %v2995, 7
    %v2997 = vsub.s32 5, %v2996
    %v2998 = vrot.slane %v2668, %v2997
    %3000 = vbcast.lane.b32.xlu0 %v2998, 256
    %v3001 = vpop.permute.xlu0 %3000
    %v3002 = vlaneseq
    %v3003 = vshrl.u32 %v3002, 7
    %v3004 = vsub.s32 6, %v3003
    %v3005 = vrot.slane %v2668, %v3004
    %3007 = vbcast.lane.b32.xlu0 %v3005, 256
    %v3008 = vpop.permute.xlu0 %3007
    %v3009 = vlaneseq
    %v3010 = vshrl.u32 %v3009, 7
    %v3011 = vsub.s32 7, %v3010
    %v3012 = vrot.slane %v2668, %v3011
    %3014 = vbcast.lane.b32.xlu0 %v3012, 256
    %v3015 = vpop.permute.xlu0 %3014
    %v3024 = vadd.f32 %v2944, %v2966
    %v3025 = vadd.f32 %v2946, %v2973
    %v3026 = vadd.f32 %v2948, %v2980
    %v3027 = vadd.f32 %v2950, %v2987
    %v3028 = vadd.f32 %v2952, %v2994
    %v3029 = vadd.f32 %v2954, %v3001
    %v3030 = vadd.f32 %v2956, %v3008
    %v3031 = vadd.f32 %v2958, %v3015
    %v3032 = vsel %vm668, %v3024, -inf
    %v3033 = vsel %vm668, %v3025, -inf
    %v3034 = vsel %vm668, %v3026, -inf
    %v3035 = vsel %vm668, %v3027, -inf
    %v3036 = vsel %vm668, %v3028, -inf
    %v3037 = vmax.f32 %v3032, %v3036
    %v3038 = vsel %vm668, %v3029, -inf
    %v3039 = vmax.f32 %v3033, %v3038
    %v3040 = vsel %vm668, %v3030, -inf
    %v3041 = vmax.f32 %v3034, %v3040
    %v3042 = vsel %vm668, %v3031, -inf
    %v3043 = vmax.f32 %v3035, %v3042
    %v3044 = vmax.f32 %v3037, %v3039
    %v3045 = vmax.f32 %v3041, %v3043
    %v3046 = vmax.f32 %v3044, %v3045
    %vm3047 = vcmp.ge.f32.partialorder %v3024, %v3046
    %vm3048 = vcmp.ge.f32.partialorder %v3025, %v3046
    %vm3049 = vcmp.ge.f32.partialorder %v3026, %v3046
    %vm3050 = vcmp.ge.f32.partialorder %v3027, %v3046
    %vm3051 = vcmp.ge.f32.partialorder %v3028, %v3046
    %vm3052 = vcmp.ge.f32.partialorder %v3029, %v3046
    %vm3053 = vcmp.ge.f32.partialorder %v3030, %v3046
    %vm3054 = vcmp.ge.f32.partialorder %v3031, %v3046
    %v3055 = vsel %vm3047, %v695, 8
    %v3056 = vsel %vm3048, %v699, 8
    %v3057 = vsel %vm3049, %v703, 8
    %v3058 = vsel %vm3050, %v707, 8
    %v3059 = vsel %vm3051, %v711, 8
    %v3060 = vsel %vm3052, %v715, 8
    %v3061 = vsel %vm3053, %v719, 8
    %v3062 = vsel %vm3054, %v723, 8
    %v3063 = vsel %vm668, %v3055, 2147483647
    %v3064 = vsel %vm668, %v3056, 2147483647
    %v3065 = vsel %vm668, %v3057, 2147483647
    %v3066 = vsel %vm668, %v3058, 2147483647
    %v3067 = vsel %vm668, %v3059, 2147483647
    %vm3068 = vcmp.lt.s32.totalorder %v3063, %v3067
    %v3069 = vsel %vm3068, %v3063, %v3067
    %v3070 = vsel %vm668, %v3060, 2147483647
    %vm3071 = vcmp.lt.s32.totalorder %v3064, %v3070
    %v3072 = vsel %vm3071, %v3064, %v3070
    %v3073 = vsel %vm668, %v3061, 2147483647
    %vm3074 = vcmp.lt.s32.totalorder %v3065, %v3073
    %v3075 = vsel %vm3074, %v3065, %v3073
    %v3076 = vsel %vm668, %v3062, 2147483647
    %vm3077 = vcmp.lt.s32.totalorder %v3066, %v3076
    %v3078 = vsel %vm3077, %v3066, %v3076
    %vm3079 = vcmp.lt.s32.totalorder %v3069, %v3072
    %v3080 = vsel %vm3079, %v3069, %v3072
    %vm3081 = vcmp.lt.s32.totalorder %v3075, %v3078
    %v3082 = vsel %vm3081, %v3075, %v3078
    %vm3083 = vcmp.lt.s32.totalorder %v3080, %v3082
    %v3084 = vsel %vm3083, %v3080, %v3082
    %3085 = vset.pattern.permute.xlu0 0
    %3086 = vperm.xlu0 %3085, %v3084
    %v3087 = vpop.permute.xlu0 %3086
    %v3088 = vlaneseq
    %v3089 = vshrl.u32 %v3088, 7
    %v3090 = vsub.s32 %v317, %v3089
    %v3091 = vrot.slane %v3087, %v3090
    %v3092 = vsel %vm761, %v3091, %v3091
    %v3093 = vsel %vm763, %v3091, %v3092
    %v3094 = vsel %vm765, %v3091, %v3093
    %v3095 = vsel %vm767, %v3091, %v3094
    %v3096 = vsel %vm769, %v3091, %v3095
    %v3097 = vsel %vm771, %v3091, %v3096
    %vm3098 = vcmp.eq.s32.totalorder %v314, %v3097
    %v3099 = vsel %vm3098, 1, 0
    %v3100 = vcvt.s32.f32 %v3099
    %v3101 = vmul.f32 %v3100, %v15
    %v3102 = vsel %vm325, %v3101, 0.0
    %v3103 = vrot.slane %v3102, 4
    %v3104 = vadd.f32 %v3102, %v3103
    %v3105 = vrot.slane %v3104, 2
    %v3106 = vadd.f32 %v3104, %v3105
    %v3107 = vrot.slane %v3106, 1
    %v3108 = vadd.f32 %v3106, %v3107
    %v3109 = vmul.f32 %v3100, %v17
    %v3110 = vsel %vm325, %v3109, 0.0
    %v3111 = vrot.slane %v3110, 4
    %v3112 = vadd.f32 %v3110, %v3111
    %v3113 = vrot.slane %v3112, 2
    %v3114 = vadd.f32 %v3112, %v3113
    %v3115 = vrot.slane %v3114, 1
    %v3116 = vadd.f32 %v3114, %v3115
    %v3117 = vsub.f32 %v3108, %v2643
    %v3118 = vmul.f32 %v3117, %v3117
    %v3119 = vadd.f32 %v3118, 0.0
    %v3120 = vsub.f32 %v3116, %v2651
    %v3121 = vmul.f32 %v3120, %v3120
    %v3122 = vadd.f32 %v3119, %v3121
    %v3123 = vmax.f32 %v2658, %v3122
    %v3124 = vsel %vm3098, -inf, %v2668
    %v3125 = vmul.f32 %v320, %v3108
    %v3126 = vsel %vm325, %v3125, 0.0
    %3127 = vadd.xlane.f32.xlu0 %v3126
    %v3128 = vpop.xlane.xlu0 %3127
    %v3129 = vmul.f32 %v320, %v3116
    %v3130 = vsel %vm325, %v3129, 0.0
    %3131 = vadd.xlane.f32.xlu0 %v3130
    %v3132 = vpop.xlane.xlu0 %3131
    %v3133 = vsel %vm315, 0.0, %v3124
    %v3134 = vmul.f32 %v3128, %v103
    %v3135 = vmul.f32 %v3128, %v107
    %v3136 = vmul.f32 %v3128, %v111
    %v3137 = vmul.f32 %v3128, %v115
    %v3138 = vadd.f32 %v149, %v3134
    %v3139 = vadd.f32 %v153, %v3135
    %v3140 = vadd.f32 %v157, %v3136
    %v3141 = vadd.f32 %v161, %v3137
    %v3142 = vmul.f32 %v3132, %v126
    %v3143 = vmul.f32 %v3132, %v130
    %v3144 = vmul.f32 %v3132, %v134
    %v3145 = vmul.f32 %v3132, %v138
    %v3146 = vadd.f32 %v3138, %v3142
    %v3147 = vadd.f32 %v3139, %v3143
    %v3148 = vadd.f32 %v3140, %v3144
    %v3149 = vadd.f32 %v3141, %v3145
    %v3150 = vadd.f32 %v3146, %v2774
    %v3151 = vadd.f32 %v3147, %v2776
    %v3152 = vadd.f32 %v3148, %v2845
    %v3153 = vadd.f32 %v3149, %v2847
    %v3154 = vmul.f32 %v3150, 0.5
    %v3155 = vtanh.pop %v3154
    %v3156 = vadd.f32 %v3155, 1.0
    %v3157 = vmul.f32 %v3156, 0.5
    %v3158 = vmul.f32 %v3151, 0.5
    %v3159 = vtanh.pop %v3158
    %v3160 = vadd.f32 %v3159, 1.0
    %v3161 = vmul.f32 %v3160, 0.5
    %v3162 = vtanh.pop %v3152
    %v3163 = vmul.f32 %v3153, 0.5
    %v3164 = vtanh.pop %v3163
    %v3165 = vadd.f32 %v3164, 1.0
    %v3166 = vmul.f32 %v3165, 0.5
    %v3167 = vmul.f32 %v3161, %v2704
    %v3168 = vmul.f32 %v3157, %v3162
    %v3169 = vadd.f32 %v3167, %v3168
    %v3170 = vtanh.pop %v3169
    %v3171 = vmul.f32 %v3166, %v3170
    %3172 = vmatprep.subr.mxu0 %v19
    %3173 = vmatpush1.msra.mxu0 %v18
    %3174 = vmatprep.subr.mxu0 %v24
    %3175 = vmatpush1.msra.mxu0 %v23
    %3176 = vmatprep.subr.mxu0 %v29
    %3177 = vmatpush1.msra.mxu0 %v28
    %3178 = vmatprep.subr.mxu0 %v34
    %3179 = vmatpush1.msra.mxu0 %v33
    %3180 = vmatprep.subr.mxu0 %v39
    %3181 = vmatpush1.msra.mxu0 %v38
    %3182 = vmatprep.subr.mxu0 %v44
    %3183 = vmatpush1.msra.mxu0 %v43
    %3184 = vmatprep.subr.mxu0 %v49
    %3185 = vmatpush1.msra.mxu0 %v48
    %3186 = vmatprep.subr.mxu0 %v54
    %3187 = vmatpush1.msra.mxu0 %v53
    %3188 = vmatprep.subr.mxu0 %v59
    %3189 = vmatpush1.msra.mxu0 %v58
    %3190 = vmatprep.subr.mxu0 %v64
    %3191 = vmatpush1.msra.mxu0 %v63
    %3192 = vmatprep.subr.mxu0 %v69
    %3193 = vmatpush1.msra.mxu0 %v68
    %3194 = vmatprep.subr.mxu0 %v74
    %3195 = vmatpush1.msra.mxu0 %v73
    %3196 = vmatprep.subr.mxu0 %v79
    %3197 = vmatpush1.msra.mxu0 %v78
    %3198 = vmatprep.subr.mxu0 %v84
    %3199 = vmatpush1.msra.mxu0 %v83
    %3200 = vmatprep.subr.mxu0 %v89
    %3201 = vmatpush1.msra.mxu0 %v88
    %3202 = vmatprep.subr.mxu0 %v94
    %3203 = vmatpush1.msra.mxu0 %v93
    %3204 = vmatprep.subr.mxu0 0.0
    %3205 = vmatpush1.msra.mxu0 0.0
    %3206 = vmatprep.subr.mxu0 0.0
    %3207 = vmatpush1.msra.mxu0 0.0
    %3208 = vmatprep.subr.mxu0 0.0
    %3209 = vmatpush1.msra.mxu0 0.0
    %3210 = vmatprep.subr.mxu0 0.0
    %3211 = vmatpush1.msra.mxu0 0.0
    %3212 = vmatprep.subr.mxu0 0.0
    %3213 = vmatpush1.msra.mxu0 0.0
    %3214 = vmatprep.subr.mxu0 0.0
    %3215 = vmatpush1.msra.mxu0 0.0
    %3216 = vmatprep.subr.mxu0 0.0
    %3217 = vmatpush1.msra.mxu0 0.0
    %3218 = vmatprep.subr.mxu0 0.0
    %3219 = vmatpush1.msra.mxu0 0.0
    %3220 = vmatprep.subr.mxu0 0.0
    %3221 = vmatpush1.msra.mxu0 0.0
    %3222 = vmatprep.subr.mxu0 0.0
    %3223 = vmatpush1.msra.mxu0 0.0
    %3224 = vmatprep.subr.mxu0 0.0
    %3225 = vmatpush1.msra.mxu0 0.0
    %3226 = vmatprep.subr.mxu0 0.0
    %3227 = vmatpush1.msra.mxu0 0.0
    %3228 = vmatprep.subr.mxu0 0.0
    %3229 = vmatpush1.msra.mxu0 0.0
    %3230 = vmatprep.subr.mxu0 0.0
    %3231 = vmatpush1.msra.mxu0 0.0
    %3232 = vmatprep.subr.mxu0 0.0
    %3233 = vmatpush1.msra.mxu0 0.0
    %3234 = vmatprep.subr.mxu0 0.0
    %3235 = vmatpush1.msra.mxu0 0.0
    %3236 = vmatprep.mubr.f32.mxu0 0.0
    %3237 = vmatmul.mubr.f32.gmra.mrb[0].mxu0 %v3171
    %v3238 = vpop.f32.mrb[0].mxu0
    %v3239 = vadd.f32 0.0, %v3238
    %v3240 = vpop.f32.mrb[0].mxu0
    %v3241 = vadd.f32 0.0, %v3240
    %3242 = vdwg.mxu0
    %3243 = vmatprep.subr.mxu0 %v21
    %3244 = vmatpush1.msra.mxu0 %v20
    %3245 = vmatprep.subr.mxu0 %v26
    %3246 = vmatpush1.msra.mxu0 %v25
    %3247 = vmatprep.subr.mxu0 %v31
    %3248 = vmatpush1.msra.mxu0 %v30
    %3249 = vmatprep.subr.mxu0 %v36
    %3250 = vmatpush1.msra.mxu0 %v35
    %3251 = vmatprep.subr.mxu0 %v41
    %3252 = vmatpush1.msra.mxu0 %v40
    %3253 = vmatprep.subr.mxu0 %v46
    %3254 = vmatpush1.msra.mxu0 %v45
    %3255 = vmatprep.subr.mxu0 %v51
    %3256 = vmatpush1.msra.mxu0 %v50
    %3257 = vmatprep.subr.mxu0 %v56
    %3258 = vmatpush1.msra.mxu0 %v55
    %3259 = vmatprep.subr.mxu0 %v61
    %3260 = vmatpush1.msra.mxu0 %v60
    %3261 = vmatprep.subr.mxu0 %v66
    %3262 = vmatpush1.msra.mxu0 %v65
    %3263 = vmatprep.subr.mxu0 %v71
    %3264 = vmatpush1.msra.mxu0 %v70
    %3265 = vmatprep.subr.mxu0 %v76
    %3266 = vmatpush1.msra.mxu0 %v75
    %3267 = vmatprep.subr.mxu0 %v81
    %3268 = vmatpush1.msra.mxu0 %v80
    %3269 = vmatprep.subr.mxu0 %v86
    %3270 = vmatpush1.msra.mxu0 %v85
    %3271 = vmatprep.subr.mxu0 %v91
    %3272 = vmatpush1.msra.mxu0 %v90
    %3273 = vmatprep.subr.mxu0 %v96
    %3274 = vmatpush1.msra.mxu0 %v95
    %3275 = vmatprep.subr.mxu0 0.0
    %3276 = vmatpush1.msra.mxu0 0.0
    %3277 = vmatprep.subr.mxu0 0.0
    %3278 = vmatpush1.msra.mxu0 0.0
    %3279 = vmatprep.subr.mxu0 0.0
    %3280 = vmatpush1.msra.mxu0 0.0
    %3281 = vmatprep.subr.mxu0 0.0
    %3282 = vmatpush1.msra.mxu0 0.0
    %3283 = vmatprep.subr.mxu0 0.0
    %3284 = vmatpush1.msra.mxu0 0.0
    %3285 = vmatprep.subr.mxu0 0.0
    %3286 = vmatpush1.msra.mxu0 0.0
    %3287 = vmatprep.subr.mxu0 0.0
    %3288 = vmatpush1.msra.mxu0 0.0
    %3289 = vmatprep.subr.mxu0 0.0
    %3290 = vmatpush1.msra.mxu0 0.0
    %3291 = vmatprep.subr.mxu0 0.0
    %3292 = vmatpush1.msra.mxu0 0.0
    %3293 = vmatprep.subr.mxu0 0.0
    %3294 = vmatpush1.msra.mxu0 0.0
    %3295 = vmatprep.subr.mxu0 0.0
    %3296 = vmatpush1.msra.mxu0 0.0
    %3297 = vmatprep.subr.mxu0 0.0
    %3298 = vmatpush1.msra.mxu0 0.0
    %3299 = vmatprep.subr.mxu0 0.0
    %3300 = vmatpush1.msra.mxu0 0.0
    %3301 = vmatprep.subr.mxu0 0.0
    %3302 = vmatpush1.msra.mxu0 0.0
    %3303 = vmatprep.subr.mxu0 0.0
    %3304 = vmatpush1.msra.mxu0 0.0
    %3305 = vmatprep.subr.mxu0 0.0
    %3306 = vmatpush1.msra.mxu0 0.0
    %3307 = vmatprep.mubr.f32.mxu0 0.0
    %3308 = vmatmul.mubr.f32.gmra.mrb[0].mxu0 %v3171
    %v3309 = vpop.f32.mrb[0].mxu0
    %v3310 = vadd.f32 0.0, %v3309
    %v3311 = vpop.f32.mrb[0].mxu0
    %v3312 = vadd.f32 0.0, %v3311
    %3313 = vdwg.mxu0
    %3314 = vmatprep.subr.mxu0 0.0
    %3315 = vmatpush1.msra.mxu0 %v22
    %3316 = vmatprep.subr.mxu0 0.0
    %3317 = vmatpush1.msra.mxu0 %v27
    %3318 = vmatprep.subr.mxu0 0.0
    %3319 = vmatpush1.msra.mxu0 %v32
    %3320 = vmatprep.subr.mxu0 0.0
    %3321 = vmatpush1.msra.mxu0 %v37
    %3322 = vmatprep.subr.mxu0 0.0
    %3323 = vmatpush1.msra.mxu0 %v42
    %3324 = vmatprep.subr.mxu0 0.0
    %3325 = vmatpush1.msra.mxu0 %v47
    %3326 = vmatprep.subr.mxu0 0.0
    %3327 = vmatpush1.msra.mxu0 %v52
    %3328 = vmatprep.subr.mxu0 0.0
    %3329 = vmatpush1.msra.mxu0 %v57
    %3330 = vmatprep.subr.mxu0 0.0
    %3331 = vmatpush1.msra.mxu0 %v62
    %3332 = vmatprep.subr.mxu0 0.0
    %3333 = vmatpush1.msra.mxu0 %v67
    %3334 = vmatprep.subr.mxu0 0.0
    %3335 = vmatpush1.msra.mxu0 %v72
    %3336 = vmatprep.subr.mxu0 0.0
    %3337 = vmatpush1.msra.mxu0 %v77
    %3338 = vmatprep.subr.mxu0 0.0
    %3339 = vmatpush1.msra.mxu0 %v82
    %3340 = vmatprep.subr.mxu0 0.0
    %3341 = vmatpush1.msra.mxu0 %v87
    %3342 = vmatprep.subr.mxu0 0.0
    %3343 = vmatpush1.msra.mxu0 %v92
    %3344 = vmatprep.subr.mxu0 0.0
    %3345 = vmatpush1.msra.mxu0 %v97
    %3346 = vmatprep.subr.mxu0 0.0
    %3347 = vmatpush1.msra.mxu0 0.0
    %3348 = vmatprep.subr.mxu0 0.0
    %3349 = vmatpush1.msra.mxu0 0.0
    %3350 = vmatprep.subr.mxu0 0.0
    %3351 = vmatpush1.msra.mxu0 0.0
    %3352 = vmatprep.subr.mxu0 0.0
    %3353 = vmatpush1.msra.mxu0 0.0
    %3354 = vmatprep.subr.mxu0 0.0
    %3355 = vmatpush1.msra.mxu0 0.0
    %3356 = vmatprep.subr.mxu0 0.0
    %3357 = vmatpush1.msra.mxu0 0.0
    %3358 = vmatprep.subr.mxu0 0.0
    %3359 = vmatpush1.msra.mxu0 0.0
    %3360 = vmatprep.subr.mxu0 0.0
    %3361 = vmatpush1.msra.mxu0 0.0
    %3362 = vmatprep.subr.mxu0 0.0
    %3363 = vmatpush1.msra.mxu0 0.0
    %3364 = vmatprep.subr.mxu0 0.0
    %3365 = vmatpush1.msra.mxu0 0.0
    %3366 = vmatprep.subr.mxu0 0.0
    %3367 = vmatpush1.msra.mxu0 0.0
    %3368 = vmatprep.subr.mxu0 0.0
    %3369 = vmatpush1.msra.mxu0 0.0
    %3370 = vmatprep.subr.mxu0 0.0
    %3371 = vmatpush1.msra.mxu0 0.0
    %3372 = vmatprep.subr.mxu0 0.0
    %3373 = vmatpush1.msra.mxu0 0.0
    %3374 = vmatprep.subr.mxu0 0.0
    %3375 = vmatpush1.msra.mxu0 0.0
    %3376 = vmatprep.subr.mxu0 0.0
    %3377 = vmatpush1.msra.mxu0 0.0
    %3378 = vmatprep.mubr.f32.mxu0 0.0
    %3379 = vmatmul.mubr.f32.gmra.mrb[0].mxu0 %v3171
    %v3380 = vpop.f32.mrb[0].mxu0
    %v3381 = vadd.f32 0.0, %v3380
    %v3382 = vpop.f32.mrb[0].mxu0
    %3383 = vdwg.mxu0
    %v3384 = vadd.f32 %v305, %v3381
    %v3385 = vadd.f32 %v306, %v3381
    %v3386 = vadd.f32 %v307, %v3381
    %v3387 = vadd.f32 %v308, %v3381
    %v3388 = vadd.f32 %v309, %v3381
    %v3389 = vadd.f32 %v310, %v3381
    %v3390 = vadd.f32 %v311, %v3381
    %v3391 = vadd.f32 %v312, %v3381
    %v3392 = vtanh.pop %v3384
    %v3393 = vtanh.pop %v3385
    %v3394 = vtanh.pop %v3386
    %v3395 = vtanh.pop %v3387
    %v3396 = vtanh.pop %v3388
    %v3397 = vtanh.pop %v3389
    %v3398 = vtanh.pop %v3390
    %v3399 = vtanh.pop %v3391
    %v3400 = vmul.f32 %v3392, %v166
    %v3401 = vmul.f32 %v3393, %v166
    %v3402 = vmul.f32 %v3394, %v166
    %v3403 = vmul.f32 %v3395, %v166
    %v3404 = vmul.f32 %v3396, %v166
    %v3405 = vmul.f32 %v3397, %v166
    %v3406 = vmul.f32 %v3398, %v166
    %v3407 = vmul.f32 %v3399, %v166
    %3408 = vadd.xlane.f32.xlu0 %v3400
    %v3409 = vpop.xlane.xlu0 %3408
    %3410 = vadd.xlane.f32.xlu0 %v3401
    %v3411 = vpop.xlane.xlu0 %3410
    %3412 = vadd.xlane.f32.xlu0 %v3402
    %v3413 = vpop.xlane.xlu0 %3412
    %3414 = vadd.xlane.f32.xlu0 %v3403
    %v3415 = vpop.xlane.xlu0 %3414
    %3416 = vadd.xlane.f32.xlu0 %v3404
    %v3417 = vpop.xlane.xlu0 %3416
    %3418 = vadd.xlane.f32.xlu0 %v3405
    %v3419 = vpop.xlane.xlu0 %3418
    %3420 = vadd.xlane.f32.xlu0 %v3406
    %v3421 = vpop.xlane.xlu0 %3420
    %3422 = vadd.xlane.f32.xlu0 %v3407
    %v3423 = vpop.xlane.xlu0 %3422
    %v3425 = vlaneseq
    %v3426 = vshrl.u32 %v3425, 7
    %v3427 = vsub.s32 0, %v3426
    %v3428 = vrot.slane %v3133, %v3427
    %3430 = vbcast.lane.b32.xlu0 %v3428, 256
    %v3431 = vpop.permute.xlu0 %3430
    %v3432 = vlaneseq
    %v3433 = vshrl.u32 %v3432, 7
    %v3434 = vsub.s32 1, %v3433
    %v3435 = vrot.slane %v3133, %v3434
    %3437 = vbcast.lane.b32.xlu0 %v3435, 256
    %v3438 = vpop.permute.xlu0 %3437
    %v3439 = vlaneseq
    %v3440 = vshrl.u32 %v3439, 7
    %v3441 = vsub.s32 2, %v3440
    %v3442 = vrot.slane %v3133, %v3441
    %3444 = vbcast.lane.b32.xlu0 %v3442, 256
    %v3445 = vpop.permute.xlu0 %3444
    %v3446 = vlaneseq
    %v3447 = vshrl.u32 %v3446, 7
    %v3448 = vsub.s32 3, %v3447
    %v3449 = vrot.slane %v3133, %v3448
    %3451 = vbcast.lane.b32.xlu0 %v3449, 256
    %v3452 = vpop.permute.xlu0 %3451
    %v3453 = vlaneseq
    %v3454 = vshrl.u32 %v3453, 7
    %v3455 = vsub.s32 4, %v3454
    %v3456 = vrot.slane %v3133, %v3455
    %3458 = vbcast.lane.b32.xlu0 %v3456, 256
    %v3459 = vpop.permute.xlu0 %3458
    %v3460 = vlaneseq
    %v3461 = vshrl.u32 %v3460, 7
    %v3462 = vsub.s32 5, %v3461
    %v3463 = vrot.slane %v3133, %v3462
    %3465 = vbcast.lane.b32.xlu0 %v3463, 256
    %v3466 = vpop.permute.xlu0 %3465
    %v3467 = vlaneseq
    %v3468 = vshrl.u32 %v3467, 7
    %v3469 = vsub.s32 6, %v3468
    %v3470 = vrot.slane %v3133, %v3469
    %3472 = vbcast.lane.b32.xlu0 %v3470, 256
    %v3473 = vpop.permute.xlu0 %3472
    %v3474 = vlaneseq
    %v3475 = vshrl.u32 %v3474, 7
    %v3476 = vsub.s32 7, %v3475
    %v3477 = vrot.slane %v3133, %v3476
    %3479 = vbcast.lane.b32.xlu0 %v3477, 256
    %v3480 = vpop.permute.xlu0 %3479
    %v3489 = vadd.f32 %v3409, %v3431
    %v3490 = vadd.f32 %v3411, %v3438
    %v3491 = vadd.f32 %v3413, %v3445
    %v3492 = vadd.f32 %v3415, %v3452
    %v3493 = vadd.f32 %v3417, %v3459
    %v3494 = vadd.f32 %v3419, %v3466
    %v3495 = vadd.f32 %v3421, %v3473
    %v3496 = vadd.f32 %v3423, %v3480
    %v3497 = vsel %vm668, %v3489, -inf
    %v3498 = vsel %vm668, %v3490, -inf
    %v3499 = vsel %vm668, %v3491, -inf
    %v3500 = vsel %vm668, %v3492, -inf
    %v3501 = vsel %vm668, %v3493, -inf
    %v3502 = vmax.f32 %v3497, %v3501
    %v3503 = vsel %vm668, %v3494, -inf
    %v3504 = vmax.f32 %v3498, %v3503
    %v3505 = vsel %vm668, %v3495, -inf
    %v3506 = vmax.f32 %v3499, %v3505
    %v3507 = vsel %vm668, %v3496, -inf
    %v3508 = vmax.f32 %v3500, %v3507
    %v3509 = vmax.f32 %v3502, %v3504
    %v3510 = vmax.f32 %v3506, %v3508
    %v3511 = vmax.f32 %v3509, %v3510
    %vm3512 = vcmp.ge.f32.partialorder %v3489, %v3511
    %vm3513 = vcmp.ge.f32.partialorder %v3490, %v3511
    %vm3514 = vcmp.ge.f32.partialorder %v3491, %v3511
    %vm3515 = vcmp.ge.f32.partialorder %v3492, %v3511
    %vm3516 = vcmp.ge.f32.partialorder %v3493, %v3511
    %vm3517 = vcmp.ge.f32.partialorder %v3494, %v3511
    %vm3518 = vcmp.ge.f32.partialorder %v3495, %v3511
    %vm3519 = vcmp.ge.f32.partialorder %v3496, %v3511
    %v3520 = vsel %vm3512, %v695, 8
    %v3521 = vsel %vm3513, %v699, 8
    %v3522 = vsel %vm3514, %v703, 8
    %v3523 = vsel %vm3515, %v707, 8
    %v3524 = vsel %vm3516, %v711, 8
    %v3525 = vsel %vm3517, %v715, 8
    %v3526 = vsel %vm3518, %v719, 8
    %v3527 = vsel %vm3519, %v723, 8
    %v3528 = vsel %vm668, %v3520, 2147483647
    %v3529 = vsel %vm668, %v3521, 2147483647
    %v3530 = vsel %vm668, %v3522, 2147483647
    %v3531 = vsel %vm668, %v3523, 2147483647
    %v3532 = vsel %vm668, %v3524, 2147483647
    %vm3533 = vcmp.lt.s32.totalorder %v3528, %v3532
    %v3534 = vsel %vm3533, %v3528, %v3532
    %v3535 = vsel %vm668, %v3525, 2147483647
    %vm3536 = vcmp.lt.s32.totalorder %v3529, %v3535
    %v3537 = vsel %vm3536, %v3529, %v3535
    %v3538 = vsel %vm668, %v3526, 2147483647
    %vm3539 = vcmp.lt.s32.totalorder %v3530, %v3538
    %v3540 = vsel %vm3539, %v3530, %v3538
    %v3541 = vsel %vm668, %v3527, 2147483647
    %vm3542 = vcmp.lt.s32.totalorder %v3531, %v3541
    %v3543 = vsel %vm3542, %v3531, %v3541
    %vm3544 = vcmp.lt.s32.totalorder %v3534, %v3537
    %v3545 = vsel %vm3544, %v3534, %v3537
    %vm3546 = vcmp.lt.s32.totalorder %v3540, %v3543
    %v3547 = vsel %vm3546, %v3540, %v3543
    %vm3548 = vcmp.lt.s32.totalorder %v3545, %v3547
    %v3549 = vsel %vm3548, %v3545, %v3547
    %3550 = vset.pattern.permute.xlu0 0
    %3551 = vperm.xlu0 %3550, %v3549
    %v3552 = vpop.permute.xlu0 %3551
    %v3553 = vlaneseq
    %v3554 = vshrl.u32 %v3553, 7
    %v3555 = vsub.s32 %v317, %v3554
    %v3556 = vrot.slane %v3552, %v3555
    %v3557 = vsel %vm761, %v3556, %v3556
    %v3558 = vsel %vm763, %v3556, %v3557
    %v3559 = vsel %vm765, %v3556, %v3558
    %v3560 = vsel %vm767, %v3556, %v3559
    %v3561 = vsel %vm769, %v3556, %v3560
    %v3562 = vsel %vm771, %v3556, %v3561
    %vm3563 = vcmp.eq.s32.totalorder %v314, %v3562
    %v3564 = vsel %vm3563, 1, 0
    %v3565 = vcvt.s32.f32 %v3564
    %v3566 = vmul.f32 %v3565, %v15
    %v3567 = vsel %vm325, %v3566, 0.0
    %v3568 = vrot.slane %v3567, 4
    %v3569 = vadd.f32 %v3567, %v3568
    %v3570 = vrot.slane %v3569, 2
    %v3571 = vadd.f32 %v3569, %v3570
    %v3572 = vrot.slane %v3571, 1
    %v3573 = vadd.f32 %v3571, %v3572
    %v3574 = vmul.f32 %v3565, %v17
    %v3575 = vsel %vm325, %v3574, 0.0
    %v3576 = vrot.slane %v3575, 4
    %v3577 = vadd.f32 %v3575, %v3576
    %v3578 = vrot.slane %v3577, 2
    %v3579 = vadd.f32 %v3577, %v3578
    %v3580 = vrot.slane %v3579, 1
    %v3581 = vadd.f32 %v3579, %v3580
    %v3582 = vsub.f32 %v3573, %v3108
    %v3583 = vmul.f32 %v3582, %v3582
    %v3584 = vadd.f32 %v3583, 0.0
    %v3585 = vsub.f32 %v3581, %v3116
    %v3586 = vmul.f32 %v3585, %v3585
    %v3587 = vadd.f32 %v3584, %v3586
    %v3588 = vmax.f32 %v3123, %v3587
    %v3589 = vsel %vm3563, -inf, %v3133
    %v3590 = vmul.f32 %v320, %v3573
    %v3591 = vsel %vm325, %v3590, 0.0
    %3592 = vadd.xlane.f32.xlu0 %v3591
    %v3593 = vpop.xlane.xlu0 %3592
    %v3594 = vmul.f32 %v320, %v3581
    %v3595 = vsel %vm325, %v3594, 0.0
    %3596 = vadd.xlane.f32.xlu0 %v3595
    %v3597 = vpop.xlane.xlu0 %3596
    %v3598 = vsel %vm315, 0.0, %v3589
    %v3599 = vmul.f32 %v3593, %v103
    %v3600 = vmul.f32 %v3593, %v107
    %v3601 = vmul.f32 %v3593, %v111
    %v3602 = vmul.f32 %v3593, %v115
    %v3603 = vadd.f32 %v149, %v3599
    %v3604 = vadd.f32 %v153, %v3600
    %v3605 = vadd.f32 %v157, %v3601
    %v3606 = vadd.f32 %v161, %v3602
    %v3607 = vmul.f32 %v3597, %v126
    %v3608 = vmul.f32 %v3597, %v130
    %v3609 = vmul.f32 %v3597, %v134
    %v3610 = vmul.f32 %v3597, %v138
    %v3611 = vadd.f32 %v3603, %v3607
    %v3612 = vadd.f32 %v3604, %v3608
    %v3613 = vadd.f32 %v3605, %v3609
    %v3614 = vadd.f32 %v3606, %v3610
    %v3615 = vadd.f32 %v3611, %v3239
    %v3616 = vadd.f32 %v3612, %v3241
    %v3617 = vadd.f32 %v3613, %v3310
    %v3618 = vadd.f32 %v3614, %v3312
    %v3619 = vmul.f32 %v3615, 0.5
    %v3620 = vtanh.pop %v3619
    %v3621 = vadd.f32 %v3620, 1.0
    %v3622 = vmul.f32 %v3621, 0.5
    %v3623 = vmul.f32 %v3616, 0.5
    %v3624 = vtanh.pop %v3623
    %v3625 = vadd.f32 %v3624, 1.0
    %v3626 = vmul.f32 %v3625, 0.5
    %v3627 = vtanh.pop %v3617
    %v3628 = vmul.f32 %v3618, 0.5
    %v3629 = vtanh.pop %v3628
    %v3630 = vadd.f32 %v3629, 1.0
    %v3631 = vmul.f32 %v3630, 0.5
    %v3632 = vmul.f32 %v3626, %v3169
    %v3633 = vmul.f32 %v3622, %v3627
    %v3634 = vadd.f32 %v3632, %v3633
    %v3635 = vtanh.pop %v3634
    %v3636 = vmul.f32 %v3631, %v3635
    %3637 = vmatprep.subr.mxu0 0.0
    %3638 = vmatpush1.msra.mxu0 %v22
    %3639 = vmatprep.subr.mxu0 0.0
    %3640 = vmatpush1.msra.mxu0 %v27
    %3641 = vmatprep.subr.mxu0 0.0
    %3642 = vmatpush1.msra.mxu0 %v32
    %3643 = vmatprep.subr.mxu0 0.0
    %3644 = vmatpush1.msra.mxu0 %v37
    %3645 = vmatprep.subr.mxu0 0.0
    %3646 = vmatpush1.msra.mxu0 %v42
    %3647 = vmatprep.subr.mxu0 0.0
    %3648 = vmatpush1.msra.mxu0 %v47
    %3649 = vmatprep.subr.mxu0 0.0
    %3650 = vmatpush1.msra.mxu0 %v52
    %3651 = vmatprep.subr.mxu0 0.0
    %3652 = vmatpush1.msra.mxu0 %v57
    %3653 = vmatprep.subr.mxu0 0.0
    %3654 = vmatpush1.msra.mxu0 %v62
    %3655 = vmatprep.subr.mxu0 0.0
    %3656 = vmatpush1.msra.mxu0 %v67
    %3657 = vmatprep.subr.mxu0 0.0
    %3658 = vmatpush1.msra.mxu0 %v72
    %3659 = vmatprep.subr.mxu0 0.0
    %3660 = vmatpush1.msra.mxu0 %v77
    %3661 = vmatprep.subr.mxu0 0.0
    %3662 = vmatpush1.msra.mxu0 %v82
    %3663 = vmatprep.subr.mxu0 0.0
    %3664 = vmatpush1.msra.mxu0 %v87
    %3665 = vmatprep.subr.mxu0 0.0
    %3666 = vmatpush1.msra.mxu0 %v92
    %3667 = vmatprep.subr.mxu0 0.0
    %3668 = vmatpush1.msra.mxu0 %v97
    %3669 = vmatprep.subr.mxu0 0.0
    %3670 = vmatpush1.msra.mxu0 0.0
    %3671 = vmatprep.subr.mxu0 0.0
    %3672 = vmatpush1.msra.mxu0 0.0
    %3673 = vmatprep.subr.mxu0 0.0
    %3674 = vmatpush1.msra.mxu0 0.0
    %3675 = vmatprep.subr.mxu0 0.0
    %3676 = vmatpush1.msra.mxu0 0.0
    %3677 = vmatprep.subr.mxu0 0.0
    %3678 = vmatpush1.msra.mxu0 0.0
    %3679 = vmatprep.subr.mxu0 0.0
    %3680 = vmatpush1.msra.mxu0 0.0
    %3681 = vmatprep.subr.mxu0 0.0
    %3682 = vmatpush1.msra.mxu0 0.0
    %3683 = vmatprep.subr.mxu0 0.0
    %3684 = vmatpush1.msra.mxu0 0.0
    %3685 = vmatprep.subr.mxu0 0.0
    %3686 = vmatpush1.msra.mxu0 0.0
    %3687 = vmatprep.subr.mxu0 0.0
    %3688 = vmatpush1.msra.mxu0 0.0
    %3689 = vmatprep.subr.mxu0 0.0
    %3690 = vmatpush1.msra.mxu0 0.0
    %3691 = vmatprep.subr.mxu0 0.0
    %3692 = vmatpush1.msra.mxu0 0.0
    %3693 = vmatprep.subr.mxu0 0.0
    %3694 = vmatpush1.msra.mxu0 0.0
    %3695 = vmatprep.subr.mxu0 0.0
    %3696 = vmatpush1.msra.mxu0 0.0
    %3697 = vmatprep.subr.mxu0 0.0
    %3698 = vmatpush1.msra.mxu0 0.0
    %3699 = vmatprep.subr.mxu0 0.0
    %3700 = vmatpush1.msra.mxu0 0.0
    %3701 = vmatprep.mubr.f32.mxu0 0.0
    %3702 = vmatmul.mubr.f32.gmra.mrb[0].mxu0 %v3636
    %v3703 = vpop.f32.mrb[0].mxu0
    %v3704 = vadd.f32 0.0, %v3703
    %v3705 = vpop.f32.mrb[0].mxu0
    %3706 = vdwg.mxu0
    %v3707 = vadd.f32 %v305, %v3704
    %v3708 = vadd.f32 %v306, %v3704
    %v3709 = vadd.f32 %v307, %v3704
    %v3710 = vadd.f32 %v308, %v3704
    %v3711 = vadd.f32 %v309, %v3704
    %v3712 = vadd.f32 %v310, %v3704
    %v3713 = vadd.f32 %v311, %v3704
    %v3714 = vadd.f32 %v312, %v3704
    %v3715 = vtanh.pop %v3707
    %v3716 = vtanh.pop %v3708
    %v3717 = vtanh.pop %v3709
    %v3718 = vtanh.pop %v3710
    %v3719 = vtanh.pop %v3711
    %v3720 = vtanh.pop %v3712
    %v3721 = vtanh.pop %v3713
    %v3722 = vtanh.pop %v3714
    %v3723 = vmul.f32 %v3715, %v166
    %v3724 = vmul.f32 %v3716, %v166
    %v3725 = vmul.f32 %v3717, %v166
    %v3726 = vmul.f32 %v3718, %v166
    %v3727 = vmul.f32 %v3719, %v166
    %v3728 = vmul.f32 %v3720, %v166
    %v3729 = vmul.f32 %v3721, %v166
    %v3730 = vmul.f32 %v3722, %v166
    %3731 = vadd.xlane.f32.xlu0 %v3723
    %v3732 = vpop.xlane.xlu0 %3731
    %3733 = vadd.xlane.f32.xlu0 %v3724
    %v3734 = vpop.xlane.xlu0 %3733
    %3735 = vadd.xlane.f32.xlu0 %v3725
    %v3736 = vpop.xlane.xlu0 %3735
    %3737 = vadd.xlane.f32.xlu0 %v3726
    %v3738 = vpop.xlane.xlu0 %3737
    %3739 = vadd.xlane.f32.xlu0 %v3727
    %v3740 = vpop.xlane.xlu0 %3739
    %3741 = vadd.xlane.f32.xlu0 %v3728
    %v3742 = vpop.xlane.xlu0 %3741
    %3743 = vadd.xlane.f32.xlu0 %v3729
    %v3744 = vpop.xlane.xlu0 %3743
    %3745 = vadd.xlane.f32.xlu0 %v3730
    %v3746 = vpop.xlane.xlu0 %3745
    %v3748 = vlaneseq
    %v3749 = vshrl.u32 %v3748, 7
    %v3750 = vsub.s32 0, %v3749
    %v3751 = vrot.slane %v3598, %v3750
    %3753 = vbcast.lane.b32.xlu0 %v3751, 256
    %v3754 = vpop.permute.xlu0 %3753
    %v3755 = vlaneseq
    %v3756 = vshrl.u32 %v3755, 7
    %v3757 = vsub.s32 1, %v3756
    %v3758 = vrot.slane %v3598, %v3757
    %3760 = vbcast.lane.b32.xlu0 %v3758, 256
    %v3761 = vpop.permute.xlu0 %3760
    %v3762 = vlaneseq
    %v3763 = vshrl.u32 %v3762, 7
    %v3764 = vsub.s32 2, %v3763
    %v3765 = vrot.slane %v3598, %v3764
    %3767 = vbcast.lane.b32.xlu0 %v3765, 256
    %v3768 = vpop.permute.xlu0 %3767
    %v3769 = vlaneseq
    %v3770 = vshrl.u32 %v3769, 7
    %v3771 = vsub.s32 3, %v3770
    %v3772 = vrot.slane %v3598, %v3771
    %3774 = vbcast.lane.b32.xlu0 %v3772, 256
    %v3775 = vpop.permute.xlu0 %3774
    %v3776 = vlaneseq
    %v3777 = vshrl.u32 %v3776, 7
    %v3778 = vsub.s32 4, %v3777
    %v3779 = vrot.slane %v3598, %v3778
    %3781 = vbcast.lane.b32.xlu0 %v3779, 256
    %v3782 = vpop.permute.xlu0 %3781
    %v3783 = vlaneseq
    %v3784 = vshrl.u32 %v3783, 7
    %v3785 = vsub.s32 5, %v3784
    %v3786 = vrot.slane %v3598, %v3785
    %3788 = vbcast.lane.b32.xlu0 %v3786, 256
    %v3789 = vpop.permute.xlu0 %3788
    %v3790 = vlaneseq
    %v3791 = vshrl.u32 %v3790, 7
    %v3792 = vsub.s32 6, %v3791
    %v3793 = vrot.slane %v3598, %v3792
    %3795 = vbcast.lane.b32.xlu0 %v3793, 256
    %v3796 = vpop.permute.xlu0 %3795
    %v3797 = vlaneseq
    %v3798 = vshrl.u32 %v3797, 7
    %v3799 = vsub.s32 7, %v3798
    %v3800 = vrot.slane %v3598, %v3799
    %3802 = vbcast.lane.b32.xlu0 %v3800, 256
    %v3803 = vpop.permute.xlu0 %3802
    %v3812 = vadd.f32 %v3732, %v3754
    %v3813 = vadd.f32 %v3734, %v3761
    %v3814 = vadd.f32 %v3736, %v3768
    %v3815 = vadd.f32 %v3738, %v3775
    %v3816 = vadd.f32 %v3740, %v3782
    %v3817 = vadd.f32 %v3742, %v3789
    %v3818 = vadd.f32 %v3744, %v3796
    %v3819 = vadd.f32 %v3746, %v3803
    %v3820 = vsel %vm668, %v3812, -inf
    %v3821 = vsel %vm668, %v3813, -inf
    %v3822 = vsel %vm668, %v3814, -inf
    %v3823 = vsel %vm668, %v3815, -inf
    %v3824 = vsel %vm668, %v3816, -inf
    %v3825 = vmax.f32 %v3820, %v3824
    %v3826 = vsel %vm668, %v3817, -inf
    %v3827 = vmax.f32 %v3821, %v3826
    %v3828 = vsel %vm668, %v3818, -inf
    %v3829 = vmax.f32 %v3822, %v3828
    %v3830 = vsel %vm668, %v3819, -inf
    %v3831 = vmax.f32 %v3823, %v3830
    %v3832 = vmax.f32 %v3825, %v3827
    %v3833 = vmax.f32 %v3829, %v3831
    %v3834 = vmax.f32 %v3832, %v3833
    %vm3835 = vcmp.ge.f32.partialorder %v3812, %v3834
    %vm3836 = vcmp.ge.f32.partialorder %v3813, %v3834
    %vm3837 = vcmp.ge.f32.partialorder %v3814, %v3834
    %vm3838 = vcmp.ge.f32.partialorder %v3815, %v3834
    %vm3839 = vcmp.ge.f32.partialorder %v3816, %v3834
    %vm3840 = vcmp.ge.f32.partialorder %v3817, %v3834
    %vm3841 = vcmp.ge.f32.partialorder %v3818, %v3834
    %vm3842 = vcmp.ge.f32.partialorder %v3819, %v3834
    %v3843 = vsel %vm3835, %v695, 8
    %v3844 = vsel %vm3836, %v699, 8
    %v3845 = vsel %vm3837, %v703, 8
    %v3846 = vsel %vm3838, %v707, 8
    %v3847 = vsel %vm3839, %v711, 8
    %v3848 = vsel %vm3840, %v715, 8
    %v3849 = vsel %vm3841, %v719, 8
    %v3850 = vsel %vm3842, %v723, 8
    %v3851 = vsel %vm668, %v3843, 2147483647
    %v3852 = vsel %vm668, %v3844, 2147483647
    %v3853 = vsel %vm668, %v3845, 2147483647
    %v3854 = vsel %vm668, %v3846, 2147483647
    %v3855 = vsel %vm668, %v3847, 2147483647
    %vm3856 = vcmp.lt.s32.totalorder %v3851, %v3855
    %v3857 = vsel %vm3856, %v3851, %v3855
    %v3858 = vsel %vm668, %v3848, 2147483647
    %vm3859 = vcmp.lt.s32.totalorder %v3852, %v3858
    %v3860 = vsel %vm3859, %v3852, %v3858
    %v3861 = vsel %vm668, %v3849, 2147483647
    %vm3862 = vcmp.lt.s32.totalorder %v3853, %v3861
    %v3863 = vsel %vm3862, %v3853, %v3861
    %v3864 = vsel %vm668, %v3850, 2147483647
    %vm3865 = vcmp.lt.s32.totalorder %v3854, %v3864
    %v3866 = vsel %vm3865, %v3854, %v3864
    %vm3867 = vcmp.lt.s32.totalorder %v3857, %v3860
    %v3868 = vsel %vm3867, %v3857, %v3860
    %vm3869 = vcmp.lt.s32.totalorder %v3863, %v3866
    %v3870 = vsel %vm3869, %v3863, %v3866
    %vm3871 = vcmp.lt.s32.totalorder %v3868, %v3870
    %v3872 = vsel %vm3871, %v3868, %v3870
    %3873 = vset.pattern.permute.xlu0 0
    %3874 = vperm.xlu0 %3873, %v3872
    %v3875 = vpop.permute.xlu0 %3874
    %v3876 = vlaneseq
    %v3877 = vshrl.u32 %v3876, 7
    %v3878 = vsub.s32 %v317, %v3877
    %v3879 = vrot.slane %v3875, %v3878
    %v3880 = vsel %vm761, %v3879, %v3879
    %v3881 = vsel %vm763, %v3879, %v3880
    %v3882 = vsel %vm765, %v3879, %v3881
    %v3883 = vsel %vm767, %v3879, %v3882
    %v3884 = vsel %vm769, %v3879, %v3883
    %v3885 = vsel %vm771, %v3879, %v3884
    %vm3886 = vcmp.eq.s32.totalorder %v314, %v3885
    %v3887 = vsel %vm3886, 1, 0
    %v3888 = vcvt.s32.f32 %v3887
    %v3889 = vmul.f32 %v3888, %v15
    %v3890 = vsel %vm325, %v3889, 0.0
    %v3891 = vrot.slane %v3890, 4
    %v3892 = vadd.f32 %v3890, %v3891
    %v3893 = vrot.slane %v3892, 2
    %v3894 = vadd.f32 %v3892, %v3893
    %v3895 = vrot.slane %v3894, 1
    %v3896 = vadd.f32 %v3894, %v3895
    %v3897 = vmul.f32 %v3888, %v17
    %v3898 = vsel %vm325, %v3897, 0.0
    %v3899 = vrot.slane %v3898, 4
    %v3900 = vadd.f32 %v3898, %v3899
    %v3901 = vrot.slane %v3900, 2
    %v3902 = vadd.f32 %v3900, %v3901
    %v3903 = vrot.slane %v3902, 1
    %v3904 = vadd.f32 %v3902, %v3903
    %v3905 = vsub.f32 %v3896, %v3573
    %v3906 = vmul.f32 %v3905, %v3905
    %v3907 = vadd.f32 %v3906, 0.0
    %v3908 = vsub.f32 %v3904, %v3581
    %v3909 = vmul.f32 %v3908, %v3908
    %v3910 = vadd.f32 %v3907, %v3909
    %v3911 = vmax.f32 %v3588, %v3910
    %v3912 = vrsqrt.pop %v3911
    %v3913 = vmul.f32 %v3911, %v3912
    %vm3914 = vcmp.eq.f32.partialorder %v3911, inf
    %v3915 = vsel %vm3914, %v3911, %v3913
    %vm3916 = vcmp.eq.f32.partialorder %v3911, 0.0
    %v3917 = vand.u32 %v3911, 2147483648
    %v3918 = vsel %vm3916, %v3917, %v3915
    %vm3919 = vcmask 57344
    %v3920 = vsel %vm3919, %v3918, 0.0
    %3921 = vadd.xlane.f32.xlu0 %v3920
    %v3922 = vpop.xlane.xlu0 %3921
    %v3923 = vrot.slane %v3922, 4
    %v3924 = vadd.f32 %v3922, %v3923
    %v3925 = vrot.slane %v3924, 2
    %v3926 = vadd.f32 %v3924, %v3925
    %v3927 = vrot.slane %v3926, 1
    %v3928 = vadd.f32 %v3926, %v3927
    %s3929 = vtos %v3928
    %v3930 = vstv %s3929
    %v3931 = vrcp.pop 8.0
    %v3932 = vmul.f32 %v3930, %v3931
    %vm3933 = vcmask 0
    %3934 = vst.msk [vmem:[#allocation2] sm:$0x1] %vm3933, %v3932
    // Predicated region
    $region14: #{rgnn_loss.1} parent=1 // pred_check
      _
    $region15: #{rgnn_loss.1} parent=1 // pred_check_branch
      %3936 = sbr.rel (0) target = $region17
    $region16: #{rgnn_loss.1} parent=1 // pred_region
      %s3938 = ssub.s32 16, 16
      %3939 = vsyncadd [#allocation3], %s3938
      %s3941 = sshll.u32 [#allocation2], 4
      %s3942 = int_to_ptr.vmem [resolvable:$true] %s3941
      %3944 = dma.vmem_to_hbm [thread:$0]  %s3942, 16, %s3, [#allocation3]
    $region17: #{rgnn_loss.1} parent=1 // pred_fallthru
      _
    // Predicated region
    $region18: #{rgnn_loss.1} parent=1 // pred_check
      _
    $region19: #{rgnn_loss.1} parent=1 // pred_check_branch
      %3946 = sbr.rel (0) target = $region21
    $region20: #{rgnn_loss.1} parent=1 // pred_region
      %3947 = dma.done [#allocation3], 16
    $region21: #{rgnn_loss.1} parent=1 // pred_fallthru
      _
    %3948 = vsyncpa [#allocation3], 1

</llo_original>
